<compile_context>
chip_gen: v5e
topology: v5e:2x2
jax: 0.10.0
libtpu: 0.0.40
codegen_flags: <defaults>
</compile_context>

<pallas_src>
import functools

import jax
import jax.numpy as jnp
from jax.experimental import pallas as pl
from jax.experimental.pallas import tpu as pltpu

EPS = 1e-5  # PyTorch BatchNorm default eps


def _bn_train(x, gamma, beta, axes, count):
    """Training-mode batch norm (biased variance), matching nn.BatchNorm1d."""
    s = x
    for ax in axes:
        s = jnp.sum(s, axis=ax, keepdims=True)
    mean = s / count
    d = x - mean
    s2 = d * d
    for ax in axes:
        s2 = jnp.sum(s2, axis=ax, keepdims=True)
    var = s2 / count
    return d * jax.lax.rsqrt(var + EPS) * gamma + beta


# ----------------------------------------------------------------------------
# Fused kernel
#   grid = (num_cores, tiles_per_core)   ("parallel", "arbitrary")
#   inner step 0 : bn0 -> conv1d(2->C,k=3,pad=1) -> bn1 -> relu -> fc -> [bn2]
#                  -> relu  into the per-core (B, D) VMEM scratch y_ref
#   every step   : out_tile = y @ tanh(evolve_tile).T   (lane-dense store)
# ----------------------------------------------------------------------------
def _conv_evolve_kernel(head_ref, query_ref, rel_ref, sp_ref, wfc_ref, ev_ref,
                        out_ref, y_ref, *, apply_bn2):
    @pl.when(pl.program_id(1) == 0)   # once per core -> megacore split stays correct
    def _prologue():
        B, D = head_ref.shape
        C = wfc_ref.shape[0]
        n_bd = float(B * D)
        sp = sp_ref[...]                                        # (13, P) packed params

        hid = head_ref[...] + query_ref[...]                    # (B, D)
        rel = rel_ref[...]                                      # (B, D)

        # bn0 == BatchNorm1d(2): per input-channel stats over (batch, length).
        # row 9 of sp = [bn0_g0, bn0_g1, bn0_b0, bn0_b1]
        hid = _bn_train(hid, sp[9:10, 0:1], sp[9:10, 2:3], (0, 1), n_bd)
        rel = _bn_train(rel, sp[9:10, 1:2], sp[9:10, 3:4], (0, 1), n_bd)
        # inp_drop: p = 0 -> identity.

        # Conv taps x[l-1], x[l], x[l+1] (zero padded) on the lane axis.
        # Masks computed once at (1, D); assumes D >= 2.
        lane = jax.lax.broadcasted_iota(jnp.int32, (1, D), 1)
        is_first = lane == 0
        is_last = lane == D - 1

        def taps(x):
            prev = jnp.where(is_first, 0.0, pltpu.roll(x, shift=1, axis=1))
            # shift by -1 expressed as the non-negative rotation D - 1
            nxt = jnp.where(is_last, 0.0, pltpu.roll(x, shift=D - 1, axis=1))
            return (prev, x, nxt)                               # taps k = 0, 1, 2

        all_taps = taps(hid) + taps(rel)                        # 6 x (B, D); j = ic*3 + k

        # fc(x.view(B, C*D)) as a per-output-channel accumulation:
        #   y = fc_b + sum_c relu(bn1_c(conv_c(x))) @ wfc[c]
        # -> the (B, C, D) feature map is never materialized nor flattened.
        y = jnp.zeros((B, D), jnp.float32) + sp[10:11, :D]      # fc bias (row 10)
        for c in range(C):
            z = all_taps[0] * sp[0:1, c:c + 1]                  # rows 0..5: conv weights
            for j in range(1, 6):
                z = z + all_taps[j] * sp[j:j + 1, c:c + 1]
            z = z + sp[6:7, c:c + 1]                            # conv bias
            # bn1 (train mode, biased var) + relu; feature_map_drop p=0 -> id.
            z = _bn_train(z, sp[7:8, c:c + 1], sp[8:9, c:c + 1], (0, 1), n_bd)
            z = jnp.maximum(z, 0.0)
            y = y + jnp.dot(z.astype(y_ref.dtype), wfc_ref[c],
                            preferred_element_type=jnp.float32)
        # hidden_drop: p = 0 -> identity.
        if apply_bn2:   # torch applies bn2 only when batch_size > 1 (static)
            y = _bn_train(y, sp[11:12, :D], sp[12:13, :D], (0,), float(B))
        y_ref[...] = jnp.maximum(y, 0.0).astype(y_ref.dtype)

    # phase == 1 scoring: one lane-dense (B, tile_e) tile per grid step.
    # evolve is streamed in its natural (tile_e, D) layout; tanh runs in the
    # stored dtype (no f32 round trip for bf16 tables), then one MXU dot
    # contracting the shared D axis (y @ ev.T).
    ev = jnp.tanh(ev_ref[...]).astype(y_ref.dtype)
    out_ref[...] = jax.lax.dot_general(
        y_ref[...], ev, (((1,), (1,)), ((), ())),
        preferred_element_type=jnp.float32).astype(out_ref.dtype)


# ----------------------------------------------------------------------------
# Wrapper (glue: gather, tiny-parameter packing, entity-axis tiling)
# ----------------------------------------------------------------------------
def conv_evolve_forward(params, global_e, global_r, head_h, query_h,
                        evolve_embs, triplets, phase=1,
                        mxu_dtype=jnp.bfloat16, tile_e=2048, num_cores=1,
                        single_buffer_invariants=True):
    """tile_e (multiple of 128) is the main sweep knob; num_cores=2 splits the
    entity stream across both v7x TensorCores (1 on v5e/v6e)."""
    del global_e  # unused by the torch forward as well
    assert phase == 1  # TODO(synk): phase == 2 branch not implemented.

    B, D = head_h.shape
    C = params["conv_w"].shape[0]
    E = evolve_embs.shape[0]
    assert D >= 2 and num_cores >= 1

    # Entity-axis tiling: lane-dense 128-multiples, ragged last block handled
    # by Pallas (no wrapper-side re-materialization of the big table).
    tile_e = max(128, 128 * (int(tile_e) // 128))
    tile_e = min(tile_e, 128 * (-(-E // 128)))
    n_valid_tiles = -(-E // tile_e)
    tiles_per_core = -(-n_valid_tiles // num_cores)
    total_tiles = num_cores * tiles_per_core
    e_out = total_tiles * tile_e                      # output cols (>= E), sliced below

    # Degenerate small-table case only: make sure at least one full block exists.
    if E < tile_e:
        evolve_embs = jnp.pad(evolve_embs, ((0, tile_e - E), (0, 0)))

    # Glue (all tiny; the evolve table itself is untouched).
    rel = jnp.take(global_r, triplets[:, 1], axis=0).astype(jnp.float32)
    head2 = head_h.astype(jnp.float32)
    query2 = query_h.astype(jnp.float32)

    # One packed (13, P) f32 parameter array:
    #   rows 0-5 : conv weights, row j = in_channel*3 + tap
    #   rows 6-8 : conv_b, bn1_g, bn1_b              (lanes 0..C-1)
    #   row  9   : bn0_g0, bn0_g1, bn0_b0, bn0_b1    (lanes 0..3)
    #   rows 10-12: fc_b, bn2_g, bn2_b               (lanes 0..D-1)
    P = max(C, D, 4)

    def _row(v):
        v = v.astype(jnp.float32)
        return jnp.pad(v, (0, P - v.shape[0]))

    wconv = jnp.transpose(params["conv_w"], (1, 2, 0)).reshape(6, C)
    sp = jnp.stack(
        [_row(wconv[j]) for j in range(6)]
        + [_row(params["conv_b"]), _row(params["bn1_g"]), _row(params["bn1_b"]),
           _row(jnp.concatenate([params["bn0_g"], params["bn0_b"]])),
           _row(params["fc_b"]), _row(params["bn2_g"]), _row(params["bn2_b"])],
        axis=0)                                                   # (13, P)

    # fc weight (D, C*D) -> (C, D_in, D_out): per-channel blocks (no flatten).
    wfc = jnp.transpose(params["fc_w"].reshape(D, C, D), (1, 2, 0)).astype(mxu_dtype)

    # VMEM budget: actual requirement + headroom, capped well below the 64 MiB
    # physical VMEM of a v7x TensorCore.
    ev_isz = jnp.dtype(evolve_embs.dtype).itemsize
    mxu_isz = jnp.dtype(mxu_dtype).itemsize
    vmem_need = (2 * tile_e * D * ev_isz            # evolve stream (double buffered)
                 + 2 * B * tile_e * 4               # output tiles
                 + 2 * C * D * D * mxu_isz          # fc weight blocks
                 + 2 * (3 * B * D + 13 * P) * 4     # head/query/rel + packed params
                 + B * D * mxu_isz)                 # y scratch
    vmem_limit = int(min(48 * 2**20,
                         max(8 * 2**20, int(1.25 * vmem_need) + (2 << 20))))

    kernel = functools.partial(_conv_evolve_kernel, apply_bn2=(B > 1))

    def _ev_map(c, i):
        # Clamp fully out-of-range tiles (core-count padding) to the last valid
        # block; their output columns are sliced off below.
        return (jnp.minimum(c * tiles_per_core + i, n_valid_tiles - 1), 0)

    def _out_map(c, i):
        return (0, c * tiles_per_core + i)

    def _build(single_buf):
        # Grid-invariant operands are copied once; single-buffer them to halve
        # their resident VMEM (matters most inside v7x's 64 MiB budget).
        kw = {"pipeline_mode": pl.Buffered(1)} if single_buf else {}
        grid_spec = pltpu.PrefetchScalarGridSpec(
            num_scalar_prefetch=0,
            grid=(num_cores, tiles_per_core),
            in_specs=[
                pl.BlockSpec((B, D), lambda c, i: (0, 0), **kw),        # head
                pl.BlockSpec((B, D), lambda c, i: (0, 0), **kw),        # query
                pl.BlockSpec((B, D), lambda c, i: (0, 0), **kw),        # rel
                pl.BlockSpec((13, P), lambda c, i: (0, 0), **kw),       # packed params
                pl.BlockSpec((C, D, D), lambda c, i: (0, 0, 0), **kw),  # fc weights
                pl.BlockSpec((tile_e, D), _ev_map),                     # evolve stream
            ],
            out_specs=pl.BlockSpec((B, tile_e), _out_map),
            scratch_shapes=[pltpu.VMEM((B, D), mxu_dtype)],             # relu(fc(...))
        )
        return pl.pallas_call(
            kernel,
            out_shape=jax.ShapeDtypeStruct((B, e_out), jnp.float32),
            grid_spec=grid_spec,
            compiler_params=pltpu.CompilerParams(
                dimension_semantics=("parallel", "arbitrary"),
                vmem_limit_bytes=vmem_limit,
            ),
        )

    call_args = (head2, query2, rel, sp, wfc, evolve_embs)
    if single_buffer_invariants:
        try:
            scores = _build(True)(*call_args)
        except Exception:
            # pipeline_mode=pl.Buffered(1) not supported by this JAX build ->
            # fall back to the default double buffering (correctness identical).
            scores = _build(False)(*call_args)
    else:
        scores = _build(False)(*call_args)
    return scores[:, :E]


# ----------------------------------------------------------------------------
# Pure-JAX reference (same math) for the self-check
# ----------------------------------------------------------------------------
def conv_evolve_reference(params, global_e, global_r, head_h, query_h,
                          evolve_embs, triplets):
    del global_e
    B, D = head_h.shape
    C = params["conv_w"].shape[0]
    ev = jnp.tanh(evolve_embs)
    rel = global_r[triplets[:, 1]]
    x = jnp.stack([head_h + query_h, rel], axis=1)                  # (B, 2, D)
    m = x.mean(axis=(0, 2), keepdims=True)
    v = ((x - m) ** 2).mean(axis=(0, 2), keepdims=True)
    x = (x - m) / jnp.sqrt(v + EPS) * params["bn0_g"].reshape(1, 2, 1) \
        + params["bn0_b"].reshape(1, 2, 1)
    xpad = jnp.pad(x, ((0, 0), (0, 0), (1, 1)))
    w = params["conv_w"]                                            # (C, 2, 3)
    y = jnp.zeros((B, C, D), jnp.float32)
    for k in range(3):
        y = y + jnp.einsum("bcl,oc->bol", xpad[:, :, k:k + D], w[:, :, k])
    y = y + params["conv_b"].reshape(1, C, 1)
    m = y.mean(axis=(0, 2), keepdims=True)
    v = ((y - m) ** 2).mean(axis=(0, 2), keepdims=True)
    y = (y - m) / jnp.sqrt(v + EPS) * params["bn1_g"].reshape(1, C, 1) \
        + params["bn1_b"].reshape(1, C, 1)
    y = jnp.maximum(y, 0.0).reshape(B, C * D)
    y = y @ params["fc_w"].T + params["fc_b"]
    if B > 1:
        m = y.mean(axis=0, keepdims=True)
        v = ((y - m) ** 2).mean(axis=0, keepdims=True)
        y = (y - m) / jnp.sqrt(v + EPS) * params["bn2_g"] + params["bn2_b"]
    y = jnp.maximum(y, 0.0)
    return y @ ev.T


if __name__ == "__main__":
    key = jax.random.PRNGKey(0)
    num_entities, num_relations = 16, 10
    embedding_dim, channels, batch = 32, 8, 8
    ks = jax.random.split(key, 9)

    params = {
        "conv_w": 0.1 * jax.random.normal(ks[0], (channels, 2, 3), jnp.float32),
        "conv_b": 0.1 * jax.random.normal(ks[1], (channels,), jnp.float32),
        "fc_w": 0.05 * jax.random.normal(
            ks[2], (embedding_dim, channels * embedding_dim), jnp.float32),
        "fc_b": 0.05 * jax.random.normal(ks[3], (embedding_dim,), jnp.float32),
        "bn0_g": jnp.ones((2,), jnp.float32), "bn0_b": jnp.zeros((2,), jnp.float32),
        "bn1_g": jnp.ones((channels,), jnp.float32), "bn1_b": jnp.zeros((channels,), jnp.float32),
        "bn2_g": jnp.ones((embedding_dim,), jnp.float32), "bn2_b": jnp.zeros((embedding_dim,), jnp.float32),
        "b": jnp.zeros((num_entities,), jnp.float32),  # registered but unused in forward
    }

    global_e = jax.random.normal(ks[4], (num_entities, embedding_dim), jnp.float32)
    global_r = jax.random.normal(ks[5], (num_relations, embedding_dim), jnp.float32)
    head_h = jax.random.normal(ks[6], (batch, embedding_dim), jnp.float32)
    query_h = jax.random.normal(ks[7], (batch, embedding_dim), jnp.float32)
    evolve_embs = jax.random.normal(ks[8], (num_entities, embedding_dim), jnp.float32)
    triplets = jnp.stack([
        jnp.arange(batch) % num_entities,
        (jnp.arange(batch) * 3) % num_relations,
        (jnp.arange(batch) + 5) % num_entities,
    ], axis=1).astype(jnp.int32)

    args = (params, global_e, global_r, head_h, query_h, evolve_embs, triplets)

    # Reference at highest matmul precision (so it is not itself truncated by
    # XLA's default bf16-pass TPU matmul mode).
    with jax.default_matmul_precision("highest"):
        ref = conv_evolve_reference(*args)
    ref = jax.block_until_ready(ref)

    # 1) f32 MXU path.
    out_f32 = jax.block_until_ready(
        conv_evolve_forward(*args, phase=1, mxu_dtype=jnp.float32))
    assert out_f32.shape == (batch, num_entities)
    assert jnp.allclose(out_f32, ref, rtol=2e-2, atol=5e-2), (
        f"f32 max abs diff = {float(jnp.max(jnp.abs(out_f32 - ref)))}")

    # 2) Default bf16-MXU path (f32 accumulation) -- the perf configuration.
    out_bf16 = jax.block_until_ready(conv_evolve_forward(*args, phase=1))
    assert out_bf16.shape == (batch, num_entities)
    assert jnp.allclose(out_bf16, ref, rtol=1e-1, atol=2e-1), (
        f"bf16 max abs diff = {float(jnp.max(jnp.abs(out_bf16 - ref)))}")

    # 3) Megacore-split path (num_cores=2): exercises the per-core prologue and
    #    the clamped entity-tile index map (runs sequentially on 1-TC chips).
    out_mc = jax.block_until_ready(conv_evolve_forward(*args, phase=1, num_cores=2))
    assert out_mc.shape == (batch, num_entities)
    assert jnp.allclose(out_mc, ref, rtol=1e-1, atol=2e-1), (
        f"megacore max abs diff = {float(jnp.max(jnp.abs(out_mc - ref)))}")

    print("KERNEL_OK")
</pallas_src>

<mosaic_0001>
module attributes {stable_mosaic.version = 11 : i64} {
  func.func @_conv_evolve_kernel(%arg0: i32, %arg1: i32, %arg2: memref<8x32xf32, #tpu.memory_space<vmem>>, %arg3: memref<8x32xf32, #tpu.memory_space<vmem>>, %arg4: memref<8x32xf32, #tpu.memory_space<vmem>>, %arg5: memref<13x32xf32, #tpu.memory_space<vmem>>, %arg6: memref<8x32x32xf32, #tpu.memory_space<vmem>>, %arg7: memref<128x32xf32, #tpu.memory_space<vmem>>, %arg8: memref<8x128xf32, #tpu.memory_space<vmem>>, %arg9: memref<8x32xf32, #tpu.memory_space<vmem>>) attributes {dimension_semantics = [#tpu.dimension_semantics<parallel>, #tpu.dimension_semantics<arbitrary>], iteration_bounds = array<i64: 1, 1>, scalar_prefetch = 0 : i64, scratch_operands = 1 : i64, tpu.core_type = #tpu.core_type<tc>, window_params = [{pipeline_mode = #tpu.pipeline_mode<synchronous>, transform_indices = @transform_0, window_bounds = array<i64: 8, 32>}, {pipeline_mode = #tpu.pipeline_mode<synchronous>, transform_indices = @transform_1, window_bounds = array<i64: 8, 32>}, {pipeline_mode = #tpu.pipeline_mode<synchronous>, transform_indices = @transform_2, window_bounds = array<i64: 8, 32>}, {pipeline_mode = #tpu.pipeline_mode<synchronous>, transform_indices = @transform_3, window_bounds = array<i64: 13, 32>}, {pipeline_mode = #tpu.pipeline_mode<synchronous>, transform_indices = @transform_4, window_bounds = array<i64: 8, 32, 32>}, {transform_indices = @transform_5, window_bounds = array<i64: 128, 32>}, {transform_indices = @transform_6, window_bounds = array<i64: 8, 128>}]} {
    %c0_i32 = arith.constant 0 : i32
    %0 = arith.cmpi eq, %arg1, %c0_i32 : i32
    %1 = arith.extui %0 : i1 to i32
    %c0_i32_0 = arith.constant 0 : i32
    %2 = arith.cmpi ne, %1, %c0_i32_0 : i32
    scf.if %2 {
      %c0_6 = arith.constant 0 : index
      %c0_7 = arith.constant 0 : index
      %8 = vector.load %arg5[%c0_6, %c0_7] : memref<13x32xf32, #tpu.memory_space<vmem>>, vector<13x32xf32>
      %c0_8 = arith.constant 0 : index
      %c0_9 = arith.constant 0 : index
      %9 = vector.load %arg2[%c0_8, %c0_9] : memref<8x32xf32, #tpu.memory_space<vmem>>, vector<8x32xf32>
      %c0_10 = arith.constant 0 : index
      %c0_11 = arith.constant 0 : index
      %10 = vector.load %arg3[%c0_10, %c0_11] : memref<8x32xf32, #tpu.memory_space<vmem>>, vector<8x32xf32>
      %11 = arith.addf %9, %10 : vector<8x32xf32>
      %c0_12 = arith.constant 0 : index
      %c0_13 = arith.constant 0 : index
      %12 = vector.load %arg4[%c0_12, %c0_13] : memref<8x32xf32, #tpu.memory_space<vmem>>, vector<8x32xf32>
      %13 = vector.extract_strided_slice %8 {offsets = [9, 0], sizes = [1, 1], strides = [1, 1]} : vector<13x32xf32> to vector<1x1xf32>
      %14 = vector.extract_strided_slice %8 {offsets = [9, 2], sizes = [1, 1], strides = [1, 1]} : vector<13x32xf32> to vector<1x1xf32>
      %cst_14 = arith.constant dense<0.000000e+00> : vector<32xf32>
      %15 = vector.multi_reduction <add>, %11, %cst_14 [0] : vector<8x32xf32> to vector<32xf32>
      %16 = vector.shape_cast %15 : vector<32xf32> to vector<1x32xf32>
      %cst_15 = arith.constant dense<0.000000e+00> : vector<1xf32>
      %17 = vector.multi_reduction <add>, %16, %cst_15 [1] : vector<1x32xf32> to vector<1xf32>
      %18 = vector.shape_cast %17 : vector<1xf32> to vector<1x1xf32>
      %cst_16 = arith.constant 2.560000e+02 : f32
      %19 = vector.broadcast %cst_16 : f32 to vector<1x1xf32>
      %20 = arith.divf %18, %19 : vector<1x1xf32>
      %21 = vector.broadcast %20 : vector<1x1xf32> to vector<8x32xf32>
      %22 = arith.subf %11, %21 : vector<8x32xf32>
      %23 = arith.mulf %22, %22 : vector<8x32xf32>
      %cst_17 = arith.constant dense<0.000000e+00> : vector<32xf32>
      %24 = vector.multi_reduction <add>, %23, %cst_17 [0] : vector<8x32xf32> to vector<32xf32>
      %25 = vector.shape_cast %24 : vector<32xf32> to vector<1x32xf32>
      %cst_18 = arith.constant dense<0.000000e+00> : vector<1xf32>
      %26 = vector.multi_reduction <add>, %25, %cst_18 [1] : vector<1x32xf32> to vector<1xf32>
      %27 = vector.shape_cast %26 : vector<1xf32> to vector<1x1xf32>
      %cst_19 = arith.constant 2.560000e+02 : f32
      %28 = vector.broadcast %cst_19 : f32 to vector<1x1xf32>
      %29 = arith.divf %27, %28 : vector<1x1xf32>
      %cst_20 = arith.constant 9.99999974E-6 : f32
      %30 = vector.broadcast %cst_20 : f32 to vector<1x1xf32>
      %31 = arith.addf %29, %30 : vector<1x1xf32>
      %32 = math.rsqrt %31 : vector<1x1xf32>
      %33 = vector.broadcast %32 : vector<1x1xf32> to vector<8x32xf32>
      %34 = arith.mulf %22, %33 : vector<8x32xf32>
      %35 = vector.broadcast %13 : vector<1x1xf32> to vector<8x32xf32>
      %36 = arith.mulf %34, %35 : vector<8x32xf32>
      %37 = vector.broadcast %14 : vector<1x1xf32> to vector<8x32xf32>
      %38 = arith.addf %36, %37 : vector<8x32xf32>
      %39 = vector.extract_strided_slice %8 {offsets = [9, 1], sizes = [1, 1], strides = [1, 1]} : vector<13x32xf32> to vector<1x1xf32>
      %40 = vector.extract_strided_slice %8 {offsets = [9, 3], sizes = [1, 1], strides = [1, 1]} : vector<13x32xf32> to vector<1x1xf32>
      %cst_21 = arith.constant dense<0.000000e+00> : vector<32xf32>
      %41 = vector.multi_reduction <add>, %12, %cst_21 [0] : vector<8x32xf32> to vector<32xf32>
      %42 = vector.shape_cast %41 : vector<32xf32> to vector<1x32xf32>
      %cst_22 = arith.constant dense<0.000000e+00> : vector<1xf32>
      %43 = vector.multi_reduction <add>, %42, %cst_22 [1] : vector<1x32xf32> to vector<1xf32>
      %44 = vector.shape_cast %43 : vector<1xf32> to vector<1x1xf32>
      %cst_23 = arith.constant 2.560000e+02 : f32
      %45 = vector.broadcast %cst_23 : f32 to vector<1x1xf32>
      %46 = arith.divf %44, %45 : vector<1x1xf32>
      %47 = vector.broadcast %46 : vector<1x1xf32> to vector<8x32xf32>
      %48 = arith.subf %12, %47 : vector<8x32xf32>
      %49 = arith.mulf %48, %48 : vector<8x32xf32>
      %cst_24 = arith.constant dense<0.000000e+00> : vector<32xf32>
      %50 = vector.multi_reduction <add>, %49, %cst_24 [0] : vector<8x32xf32> to vector<32xf32>
      %51 = vector.shape_cast %50 : vector<32xf32> to vector<1x32xf32>
      %cst_25 = arith.constant dense<0.000000e+00> : vector<1xf32>
      %52 = vector.multi_reduction <add>, %51, %cst_25 [1] : vector<1x32xf32> to vector<1xf32>
      %53 = vector.shape_cast %52 : vector<1xf32> to vector<1x1xf32>
      %cst_26 = arith.constant 2.560000e+02 : f32
      %54 = vector.broadcast %cst_26 : f32 to vector<1x1xf32>
      %55 = arith.divf %53, %54 : vector<1x1xf32>
      %cst_27 = arith.constant 9.99999974E-6 : f32
      %56 = vector.broadcast %cst_27 : f32 to vector<1x1xf32>
      %57 = arith.addf %55, %56 : vector<1x1xf32>
      %58 = math.rsqrt %57 : vector<1x1xf32>
      %59 = vector.broadcast %58 : vector<1x1xf32> to vector<8x32xf32>
      %60 = arith.mulf %48, %59 : vector<8x32xf32>
      %61 = vector.broadcast %39 : vector<1x1xf32> to vector<8x32xf32>
      %62 = arith.mulf %60, %61 : vector<8x32xf32>
      %63 = vector.broadcast %40 : vector<1x1xf32> to vector<8x32xf32>
      %64 = arith.addf %62, %63 : vector<8x32xf32>
      %65 = tpu.iota {dimensions = array<i32: 1>} : vector<1x32xi32>
      %c0_i32_28 = arith.constant 0 : i32
      %66 = vector.broadcast %c0_i32_28 : i32 to vector<1x32xi32>
      %67 = arith.cmpi eq, %65, %66 : vector<1x32xi32>
      %c31_i32 = arith.constant 31 : i32
      %68 = vector.broadcast %c31_i32 : i32 to vector<1x32xi32>
      %69 = arith.cmpi eq, %65, %68 : vector<1x32xi32>
      %c1_i32 = arith.constant 1 : i32
      %70 = tpu.dynamic_rotate %38 by %c1_i32 dim 1 : vector<8x32xf32>, i32 -> vector<8x32xf32>
      %cst_29 = arith.constant 0.000000e+00 : f32
      %71 = vector.shape_cast %67 : vector<1x32xi1> to vector<1x32xi1>
      %72 = vector.broadcast %71 : vector<1x32xi1> to vector<8x32xi1>
      %73 = vector.broadcast %cst_29 : f32 to vector<8x32xf32>
      %74 = arith.select %72, %73, %70 : vector<8x32xi1>, vector<8x32xf32>
      %c31_i32_30 = arith.constant 31 : i32
      %75 = tpu.dynamic_rotate %38 by %c31_i32_30 dim 1 : vector<8x32xf32>, i32 -> vector<8x32xf32>
      %cst_31 = arith.constant 0.000000e+00 : f32
      %76 = vector.shape_cast %69 : vector<1x32xi1> to vector<1x32xi1>
      %77 = vector.broadcast %76 : vector<1x32xi1> to vector<8x32xi1>
      %78 = vector.broadcast %cst_31 : f32 to vector<8x32xf32>
      %79 = arith.select %77, %78, %75 : vector<8x32xi1>, vector<8x32xf32>
      %c1_i32_32 = arith.constant 1 : i32
      %80 = tpu.dynamic_rotate %64 by %c1_i32_32 dim 1 : vector<8x32xf32>, i32 -> vector<8x32xf32>
      %cst_33 = arith.constant 0.000000e+00 : f32
      %81 = vector.shape_cast %67 : vector<1x32xi1> to vector<1x32xi1>
      %82 = vector.broadcast %81 : vector<1x32xi1> to vector<8x32xi1>
      %83 = vector.broadcast %cst_33 : f32 to vector<8x32xf32>
      %84 = arith.select %82, %83, %80 : vector<8x32xi1>, vector<8x32xf32>
      %c31_i32_34 = arith.constant 31 : i32
      %85 = tpu.dynamic_rotate %64 by %c31_i32_34 dim 1 : vector<8x32xf32>, i32 -> vector<8x32xf32>
      %cst_35 = arith.constant 0.000000e+00 : f32
      %86 = vector.shape_cast %69 : vector<1x32xi1> to vector<1x32xi1>
      %87 = vector.broadcast %86 : vector<1x32xi1> to vector<8x32xi1>
      %88 = vector.broadcast %cst_35 : f32 to vector<8x32xf32>
      %89 = arith.select %87, %88, %85 : vector<8x32xi1>, vector<8x32xf32>
      %cst_36 = arith.constant 0.000000e+00 : f32
      %90 = vector.broadcast %cst_36 : f32 to vector<8x32xf32>
      %91 = vector.extract_strided_slice %8 {offsets = [10, 0], sizes = [1, 32], strides = [1, 1]} : vector<13x32xf32> to vector<1x32xf32>
      %92 = vector.broadcast %91 : vector<1x32xf32> to vector<8x32xf32>
      %93 = arith.addf %90, %92 : vector<8x32xf32>
      %94 = vector.extract_strided_slice %8 {offsets = [0, 0], sizes = [1, 1], strides = [1, 1]} : vector<13x32xf32> to vector<1x1xf32>
      %95 = vector.broadcast %94 : vector<1x1xf32> to vector<8x32xf32>
      %96 = arith.mulf %74, %95 : vector<8x32xf32>
      %97 = vector.extract_strided_slice %8 {offsets = [1, 0], sizes = [1, 1], strides = [1, 1]} : vector<13x32xf32> to vector<1x1xf32>
      %98 = vector.broadcast %97 : vector<1x1xf32> to vector<8x32xf32>
      %99 = arith.mulf %38, %98 : vector<8x32xf32>
      %100 = arith.addf %96, %99 : vector<8x32xf32>
      %101 = vector.extract_strided_slice %8 {offsets = [2, 0], sizes = [1, 1], strides = [1, 1]} : vector<13x32xf32> to vector<1x1xf32>
      %102 = vector.broadcast %101 : vector<1x1xf32> to vector<8x32xf32>
      %103 = arith.mulf %79, %102 : vector<8x32xf32>
      %104 = arith.addf %100, %103 : vector<8x32xf32>
      %105 = vector.extract_strided_slice %8 {offsets = [3, 0], sizes = [1, 1], strides = [1, 1]} : vector<13x32xf32> to vector<1x1xf32>
      %106 = vector.broadcast %105 : vector<1x1xf32> to vector<8x32xf32>
      %107 = arith.mulf %84, %106 : vector<8x32xf32>
      %108 = arith.addf %104, %107 : vector<8x32xf32>
      %109 = vector.extract_strided_slice %8 {offsets = [4, 0], sizes = [1, 1], strides = [1, 1]} : vector<13x32xf32> to vector<1x1xf32>
      %110 = vector.broadcast %109 : vector<1x1xf32> to vector<8x32xf32>
      %111 = arith.mulf %64, %110 : vector<8x32xf32>
      %112 = arith.addf %108, %111 : vector<8x32xf32>
      %113 = vector.extract_strided_slice %8 {offsets = [5, 0], sizes = [1, 1], strides = [1, 1]} : vector<13x32xf32> to vector<1x1xf32>
      %114 = vector.broadcast %113 : vector<1x1xf32> to vector<8x32xf32>
      %115 = arith.mulf %89, %114 : vector<8x32xf32>
      %116 = arith.addf %112, %115 : vector<8x32xf32>
      %117 = vector.extract_strided_slice %8 {offsets = [6, 0], sizes = [1, 1], strides = [1, 1]} : vector<13x32xf32> to vector<1x1xf32>
      %118 = vector.broadcast %117 : vector<1x1xf32> to vector<8x32xf32>
      %119 = arith.addf %116, %118 : vector<8x32xf32>
      %120 = vector.extract_strided_slice %8 {offsets = [7, 0], sizes = [1, 1], strides = [1, 1]} : vector<13x32xf32> to vector<1x1xf32>
      %121 = vector.extract_strided_slice %8 {offsets = [8, 0], sizes = [1, 1], strides = [1, 1]} : vector<13x32xf32> to vector<1x1xf32>
      %cst_37 = arith.constant dense<0.000000e+00> : vector<32xf32>
      %122 = vector.multi_reduction <add>, %119, %cst_37 [0] : vector<8x32xf32> to vector<32xf32>
      %123 = vector.shape_cast %122 : vector<32xf32> to vector<1x32xf32>
      %cst_38 = arith.constant dense<0.000000e+00> : vector<1xf32>
      %124 = vector.multi_reduction <add>, %123, %cst_38 [1] : vector<1x32xf32> to vector<1xf32>
      %125 = vector.shape_cast %124 : vector<1xf32> to vector<1x1xf32>
      %cst_39 = arith.constant 2.560000e+02 : f32
      %126 = vector.broadcast %cst_39 : f32 to vector<1x1xf32>
      %127 = arith.divf %125, %126 : vector<1x1xf32>
      %128 = vector.broadcast %127 : vector<1x1xf32> to vector<8x32xf32>
      %129 = arith.subf %119, %128 : vector<8x32xf32>
      %130 = arith.mulf %129, %129 : vector<8x32xf32>
      %cst_40 = arith.constant dense<0.000000e+00> : vector<32xf32>
      %131 = vector.multi_reduction <add>, %130, %cst_40 [0] : vector<8x32xf32> to vector<32xf32>
      %132 = vector.shape_cast %131 : vector<32xf32> to vector<1x32xf32>
      %cst_41 = arith.constant dense<0.000000e+00> : vector<1xf32>
      %133 = vector.multi_reduction <add>, %132, %cst_41 [1] : vector<1x32xf32> to vector<1xf32>
      %134 = vector.shape_cast %133 : vector<1xf32> to vector<1x1xf32>
      %cst_42 = arith.constant 2.560000e+02 : f32
      %135 = vector.broadcast %cst_42 : f32 to vector<1x1xf32>
      %136 = arith.divf %134, %135 : vector<1x1xf32>
      %cst_43 = arith.constant 9.99999974E-6 : f32
      %137 = vector.broadcast %cst_43 : f32 to vector<1x1xf32>
      %138 = arith.addf %136, %137 : vector<1x1xf32>
      %139 = math.rsqrt %138 : vector<1x1xf32>
      %140 = vector.broadcast %139 : vector<1x1xf32> to vector<8x32xf32>
      %141 = arith.mulf %129, %140 : vector<8x32xf32>
      %142 = vector.broadcast %120 : vector<1x1xf32> to vector<8x32xf32>
      %143 = arith.mulf %141, %142 : vector<8x32xf32>
      %144 = vector.broadcast %121 : vector<1x1xf32> to vector<8x32xf32>
      %145 = arith.addf %143, %144 : vector<8x32xf32>
      %cst_44 = arith.constant 0.000000e+00 : f32
      %146 = vector.broadcast %cst_44 : f32 to vector<8x32xf32>
      %147 = arith.maximumf %145, %146 : vector<8x32xf32>
      %c0_45 = arith.constant 0 : index
      %c0_46 = arith.constant 0 : index
      %c0_47 = arith.constant 0 : index
      %148 = vector.load %arg6[%c0_45, %c0_46, %c0_47] : memref<8x32x32xf32, #tpu.memory_space<vmem>>, vector<1x32x32xf32>
      %149 = vector.shape_cast %148 : vector<1x32x32xf32> to vector<32x32xf32>
      %cst_48 = arith.constant dense<0.000000e+00> : vector<8x32xf32>
      %150 = tpu.matmul %147, %149, %cst_48 {dimension_numbers = #tpu.dot_dimension_numbers<[1], [0], [0], [1], [0, 0, 1, 1], [], []>} : vector<8x32xf32>, vector<32x32xf32>, vector<8x32xf32> -> vector<8x32xf32>
      %151 = arith.addf %93, %150 : vector<8x32xf32>
      %152 = vector.extract_strided_slice %8 {offsets = [0, 1], sizes = [1, 1], strides = [1, 1]} : vector<13x32xf32> to vector<1x1xf32>
      %153 = vector.broadcast %152 : vector<1x1xf32> to vector<8x32xf32>
      %154 = arith.mulf %74, %153 : vector<8x32xf32>
      %155 = vector.extract_strided_slice %8 {offsets = [1, 1], sizes = [1, 1], strides = [1, 1]} : vector<13x32xf32> to vector<1x1xf32>
      %156 = vector.broadcast %155 : vector<1x1xf32> to vector<8x32xf32>
      %157 = arith.mulf %38, %156 : vector<8x32xf32>
      %158 = arith.addf %154, %157 : vector<8x32xf32>
      %159 = vector.extract_strided_slice %8 {offsets = [2, 1], sizes = [1, 1], strides = [1, 1]} : vector<13x32xf32> to vector<1x1xf32>
      %160 = vector.broadcast %159 : vector<1x1xf32> to vector<8x32xf32>
      %161 = arith.mulf %79, %160 : vector<8x32xf32>
      %162 = arith.addf %158, %161 : vector<8x32xf32>
      %163 = vector.extract_strided_slice %8 {offsets = [3, 1], sizes = [1, 1], strides = [1, 1]} : vector<13x32xf32> to vector<1x1xf32>
      %164 = vector.broadcast %163 : vector<1x1xf32> to vector<8x32xf32>
      %165 = arith.mulf %84, %164 : vector<8x32xf32>
      %166 = arith.addf %162, %165 : vector<8x32xf32>
      %167 = vector.extract_strided_slice %8 {offsets = [4, 1], sizes = [1, 1], strides = [1, 1]} : vector<13x32xf32> to vector<1x1xf32>
      %168 = vector.broadcast %167 : vector<1x1xf32> to vector<8x32xf32>
      %169 = arith.mulf %64, %168 : vector<8x32xf32>
      %170 = arith.addf %166, %169 : vector<8x32xf32>
      %171 = vector.extract_strided_slice %8 {offsets = [5, 1], sizes = [1, 1], strides = [1, 1]} : vector<13x32xf32> to vector<1x1xf32>
      %172 = vector.broadcast %171 : vector<1x1xf32> to vector<8x32xf32>
      %173 = arith.mulf %89, %172 : vector<8x32xf32>
      %174 = arith.addf %170, %173 : vector<8x32xf32>
      %175 = vector.extract_strided_slice %8 {offsets = [6, 1], sizes = [1, 1], strides = [1, 1]} : vector<13x32xf32> to vector<1x1xf32>
      %176 = vector.broadcast %175 : vector<1x1xf32> to vector<8x32xf32>
      %177 = arith.addf %174, %176 : vector<8x32xf32>
      %178 = vector.extract_strided_slice %8 {offsets = [7, 1], sizes = [1, 1], strides = [1, 1]} : vector<13x32xf32> to vector<1x1xf32>
      %179 = vector.extract_strided_slice %8 {offsets = [8, 1], sizes = [1, 1], strides = [1, 1]} : vector<13x32xf32> to vector<1x1xf32>
      %cst_49 = arith.constant dense<0.000000e+00> : vector<32xf32>
      %180 = vector.multi_reduction <add>, %177, %cst_49 [0] : vector<8x32xf32> to vector<32xf32>
      %181 = vector.shape_cast %180 : vector<32xf32> to vector<1x32xf32>
      %cst_50 = arith.constant dense<0.000000e+00> : vector<1xf32>
      %182 = vector.multi_reduction <add>, %181, %cst_50 [1] : vector<1x32xf32> to vector<1xf32>
      %183 = vector.shape_cast %182 : vector<1xf32> to vector<1x1xf32>
      %cst_51 = arith.constant 2.560000e+02 : f32
      %184 = vector.broadcast %cst_51 : f32 to vector<1x1xf32>
      %185 = arith.divf %183, %184 : vector<1x1xf32>
      %186 = vector.broadcast %185 : vector<1x1xf32> to vector<8x32xf32>
      %187 = arith.subf %177, %186 : vector<8x32xf32>
      %188 = arith.mulf %187, %187 : vector<8x32xf32>
      %cst_52 = arith.constant dense<0.000000e+00> : vector<32xf32>
      %189 = vector.multi_reduction <add>, %188, %cst_52 [0] : vector<8x32xf32> to vector<32xf32>
      %190 = vector.shape_cast %189 : vector<32xf32> to vector<1x32xf32>
      %cst_53 = arith.constant dense<0.000000e+00> : vector<1xf32>
      %191 = vector.multi_reduction <add>, %190, %cst_53 [1] : vector<1x32xf32> to vector<1xf32>
      %192 = vector.shape_cast %191 : vector<1xf32> to vector<1x1xf32>
      %cst_54 = arith.constant 2.560000e+02 : f32
      %193 = vector.broadcast %cst_54 : f32 to vector<1x1xf32>
      %194 = arith.divf %192, %193 : vector<1x1xf32>
      %cst_55 = arith.constant 9.99999974E-6 : f32
      %195 = vector.broadcast %cst_55 : f32 to vector<1x1xf32>
      %196 = arith.addf %194, %195 : vector<1x1xf32>
      %197 = math.rsqrt %196 : vector<1x1xf32>
      %198 = vector.broadcast %197 : vector<1x1xf32> to vector<8x32xf32>
      %199 = arith.mulf %187, %198 : vector<8x32xf32>
      %200 = vector.broadcast %178 : vector<1x1xf32> to vector<8x32xf32>
      %201 = arith.mulf %199, %200 : vector<8x32xf32>
      %202 = vector.broadcast %179 : vector<1x1xf32> to vector<8x32xf32>
      %203 = arith.addf %201, %202 : vector<8x32xf32>
      %cst_56 = arith.constant 0.000000e+00 : f32
      %204 = vector.broadcast %cst_56 : f32 to vector<8x32xf32>
      %205 = arith.maximumf %203, %204 : vector<8x32xf32>
      %c1 = arith.constant 1 : index
      %c0_57 = arith.constant 0 : index
      %c0_58 = arith.constant 0 : index
      %206 = vector.load %arg6[%c1, %c0_57, %c0_58] : memref<8x32x32xf32, #tpu.memory_space<vmem>>, vector<1x32x32xf32>
      %207 = vector.shape_cast %206 : vector<1x32x32xf32> to vector<32x32xf32>
      %cst_59 = arith.constant dense<0.000000e+00> : vector<8x32xf32>
      %208 = tpu.matmul %205, %207, %cst_59 {dimension_numbers = #tpu.dot_dimension_numbers<[1], [0], [0], [1], [0, 0, 1, 1], [], []>} : vector<8x32xf32>, vector<32x32xf32>, vector<8x32xf32> -> vector<8x32xf32>
      %209 = arith.addf %151, %208 : vector<8x32xf32>
      %210 = vector.extract_strided_slice %8 {offsets = [0, 2], sizes = [1, 1], strides = [1, 1]} : vector<13x32xf32> to vector<1x1xf32>
      %211 = vector.broadcast %210 : vector<1x1xf32> to vector<8x32xf32>
      %212 = arith.mulf %74, %211 : vector<8x32xf32>
      %213 = vector.extract_strided_slice %8 {offsets = [1, 2], sizes = [1, 1], strides = [1, 1]} : vector<13x32xf32> to vector<1x1xf32>
      %214 = vector.broadcast %213 : vector<1x1xf32> to vector<8x32xf32>
      %215 = arith.mulf %38, %214 : vector<8x32xf32>
      %216 = arith.addf %212, %215 : vector<8x32xf32>
      %217 = vector.extract_strided_slice %8 {offsets = [2, 2], sizes = [1, 1], strides = [1, 1]} : vector<13x32xf32> to vector<1x1xf32>
      %218 = vector.broadcast %217 : vector<1x1xf32> to vector<8x32xf32>
      %219 = arith.mulf %79, %218 : vector<8x32xf32>
      %220 = arith.addf %216, %219 : vector<8x32xf32>
      %221 = vector.extract_strided_slice %8 {offsets = [3, 2], sizes = [1, 1], strides = [1, 1]} : vector<13x32xf32> to vector<1x1xf32>
      %222 = vector.broadcast %221 : vector<1x1xf32> to vector<8x32xf32>
      %223 = arith.mulf %84, %222 : vector<8x32xf32>
      %224 = arith.addf %220, %223 : vector<8x32xf32>
      %225 = vector.extract_strided_slice %8 {offsets = [4, 2], sizes = [1, 1], strides = [1, 1]} : vector<13x32xf32> to vector<1x1xf32>
      %226 = vector.broadcast %225 : vector<1x1xf32> to vector<8x32xf32>
      %227 = arith.mulf %64, %226 : vector<8x32xf32>
      %228 = arith.addf %224, %227 : vector<8x32xf32>
      %229 = vector.extract_strided_slice %8 {offsets = [5, 2], sizes = [1, 1], strides = [1, 1]} : vector<13x32xf32> to vector<1x1xf32>
      %230 = vector.broadcast %229 : vector<1x1xf32> to vector<8x32xf32>
      %231 = arith.mulf %89, %230 : vector<8x32xf32>
      %232 = arith.addf %228, %231 : vector<8x32xf32>
      %233 = vector.extract_strided_slice %8 {offsets = [6, 2], sizes = [1, 1], strides = [1, 1]} : vector<13x32xf32> to vector<1x1xf32>
      %234 = vector.broadcast %233 : vector<1x1xf32> to vector<8x32xf32>
      %235 = arith.addf %232, %234 : vector<8x32xf32>
      %236 = vector.extract_strided_slice %8 {offsets = [7, 2], sizes = [1, 1], strides = [1, 1]} : vector<13x32xf32> to vector<1x1xf32>
      %237 = vector.extract_strided_slice %8 {offsets = [8, 2], sizes = [1, 1], strides = [1, 1]} : vector<13x32xf32> to vector<1x1xf32>
      %cst_60 = arith.constant dense<0.000000e+00> : vector<32xf32>
      %238 = vector.multi_reduction <add>, %235, %cst_60 [0] : vector<8x32xf32> to vector<32xf32>
      %239 = vector.shape_cast %238 : vector<32xf32> to vector<1x32xf32>
      %cst_61 = arith.constant dense<0.000000e+00> : vector<1xf32>
      %240 = vector.multi_reduction <add>, %239, %cst_61 [1] : vector<1x32xf32> to vector<1xf32>
      %241 = vector.shape_cast %240 : vector<1xf32> to vector<1x1xf32>
      %cst_62 = arith.constant 2.560000e+02 : f32
      %242 = vector.broadcast %cst_62 : f32 to vector<1x1xf32>
      %243 = arith.divf %241, %242 : vector<1x1xf32>
      %244 = vector.broadcast %243 : vector<1x1xf32> to vector<8x32xf32>
      %245 = arith.subf %235, %244 : vector<8x32xf32>
      %246 = arith.mulf %245, %245 : vector<8x32xf32>
      %cst_63 = arith.constant dense<0.000000e+00> : vector<32xf32>
      %247 = vector.multi_reduction <add>, %246, %cst_63 [0] : vector<8x32xf32> to vector<32xf32>
      %248 = vector.shape_cast %247 : vector<32xf32> to vector<1x32xf32>
      %cst_64 = arith.constant dense<0.000000e+00> : vector<1xf32>
      %249 = vector.multi_reduction <add>, %248, %cst_64 [1] : vector<1x32xf32> to vector<1xf32>
      %250 = vector.shape_cast %249 : vector<1xf32> to vector<1x1xf32>
      %cst_65 = arith.constant 2.560000e+02 : f32
      %251 = vector.broadcast %cst_65 : f32 to vector<1x1xf32>
      %252 = arith.divf %250, %251 : vector<1x1xf32>
      %cst_66 = arith.constant 9.99999974E-6 : f32
      %253 = vector.broadcast %cst_66 : f32 to vector<1x1xf32>
      %254 = arith.addf %252, %253 : vector<1x1xf32>
      %255 = math.rsqrt %254 : vector<1x1xf32>
      %256 = vector.broadcast %255 : vector<1x1xf32> to vector<8x32xf32>
      %257 = arith.mulf %245, %256 : vector<8x32xf32>
      %258 = vector.broadcast %236 : vector<1x1xf32> to vector<8x32xf32>
      %259 = arith.mulf %257, %258 : vector<8x32xf32>
      %260 = vector.broadcast %237 : vector<1x1xf32> to vector<8x32xf32>
      %261 = arith.addf %259, %260 : vector<8x32xf32>
      %cst_67 = arith.constant 0.000000e+00 : f32
      %262 = vector.broadcast %cst_67 : f32 to vector<8x32xf32>
      %263 = arith.maximumf %261, %262 : vector<8x32xf32>
      %c2 = arith.constant 2 : index
      %c0_68 = arith.constant 0 : index
      %c0_69 = arith.constant 0 : index
      %264 = vector.load %arg6[%c2, %c0_68, %c0_69] : memref<8x32x32xf32, #tpu.memory_space<vmem>>, vector<1x32x32xf32>
      %265 = vector.shape_cast %264 : vector<1x32x32xf32> to vector<32x32xf32>
      %cst_70 = arith.constant dense<0.000000e+00> : vector<8x32xf32>
      %266 = tpu.matmul %263, %265, %cst_70 {dimension_numbers = #tpu.dot_dimension_numbers<[1], [0], [0], [1], [0, 0, 1, 1], [], []>} : vector<8x32xf32>, vector<32x32xf32>, vector<8x32xf32> -> vector<8x32xf32>
      %267 = arith.addf %209, %266 : vector<8x32xf32>
      %268 = vector.extract_strided_slice %8 {offsets = [0, 3], sizes = [1, 1], strides = [1, 1]} : vector<13x32xf32> to vector<1x1xf32>
      %269 = vector.broadcast %268 : vector<1x1xf32> to vector<8x32xf32>
      %270 = arith.mulf %74, %269 : vector<8x32xf32>
      %271 = vector.extract_strided_slice %8 {offsets = [1, 3], sizes = [1, 1], strides = [1, 1]} : vector<13x32xf32> to vector<1x1xf32>
      %272 = vector.broadcast %271 : vector<1x1xf32> to vector<8x32xf32>
      %273 = arith.mulf %38, %272 : vector<8x32xf32>
      %274 = arith.addf %270, %273 : vector<8x32xf32>
      %275 = vector.extract_strided_slice %8 {offsets = [2, 3], sizes = [1, 1], strides = [1, 1]} : vector<13x32xf32> to vector<1x1xf32>
      %276 = vector.broadcast %275 : vector<1x1xf32> to vector<8x32xf32>
      %277 = arith.mulf %79, %276 : vector<8x32xf32>
      %278 = arith.addf %274, %277 : vector<8x32xf32>
      %279 = vector.extract_strided_slice %8 {offsets = [3, 3], sizes = [1, 1], strides = [1, 1]} : vector<13x32xf32> to vector<1x1xf32>
      %280 = vector.broadcast %279 : vector<1x1xf32> to vector<8x32xf32>
      %281 = arith.mulf %84, %280 : vector<8x32xf32>
      %282 = arith.addf %278, %281 : vector<8x32xf32>
      %283 = vector.extract_strided_slice %8 {offsets = [4, 3], sizes = [1, 1], strides = [1, 1]} : vector<13x32xf32> to vector<1x1xf32>
      %284 = vector.broadcast %283 : vector<1x1xf32> to vector<8x32xf32>
      %285 = arith.mulf %64, %284 : vector<8x32xf32>
      %286 = arith.addf %282, %285 : vector<8x32xf32>
      %287 = vector.extract_strided_slice %8 {offsets = [5, 3], sizes = [1, 1], strides = [1, 1]} : vector<13x32xf32> to vector<1x1xf32>
      %288 = vector.broadcast %287 : vector<1x1xf32> to vector<8x32xf32>
      %289 = arith.mulf %89, %288 : vector<8x32xf32>
      %290 = arith.addf %286, %289 : vector<8x32xf32>
      %291 = vector.extract_strided_slice %8 {offsets = [6, 3], sizes = [1, 1], strides = [1, 1]} : vector<13x32xf32> to vector<1x1xf32>
      %292 = vector.broadcast %291 : vector<1x1xf32> to vector<8x32xf32>
      %293 = arith.addf %290, %292 : vector<8x32xf32>
      %294 = vector.extract_strided_slice %8 {offsets = [7, 3], sizes = [1, 1], strides = [1, 1]} : vector<13x32xf32> to vector<1x1xf32>
      %295 = vector.extract_strided_slice %8 {offsets = [8, 3], sizes = [1, 1], strides = [1, 1]} : vector<13x32xf32> to vector<1x1xf32>
      %cst_71 = arith.constant dense<0.000000e+00> : vector<32xf32>
      %296 = vector.multi_reduction <add>, %293, %cst_71 [0] : vector<8x32xf32> to vector<32xf32>
      %297 = vector.shape_cast %296 : vector<32xf32> to vector<1x32xf32>
      %cst_72 = arith.constant dense<0.000000e+00> : vector<1xf32>
      %298 = vector.multi_reduction <add>, %297, %cst_72 [1] : vector<1x32xf32> to vector<1xf32>
      %299 = vector.shape_cast %298 : vector<1xf32> to vector<1x1xf32>
      %cst_73 = arith.constant 2.560000e+02 : f32
      %300 = vector.broadcast %cst_73 : f32 to vector<1x1xf32>
      %301 = arith.divf %299, %300 : vector<1x1xf32>
      %302 = vector.broadcast %301 : vector<1x1xf32> to vector<8x32xf32>
      %303 = arith.subf %293, %302 : vector<8x32xf32>
      %304 = arith.mulf %303, %303 : vector<8x32xf32>
      %cst_74 = arith.constant dense<0.000000e+00> : vector<32xf32>
      %305 = vector.multi_reduction <add>, %304, %cst_74 [0] : vector<8x32xf32> to vector<32xf32>
      %306 = vector.shape_cast %305 : vector<32xf32> to vector<1x32xf32>
      %cst_75 = arith.constant dense<0.000000e+00> : vector<1xf32>
      %307 = vector.multi_reduction <add>, %306, %cst_75 [1] : vector<1x32xf32> to vector<1xf32>
      %308 = vector.shape_cast %307 : vector<1xf32> to vector<1x1xf32>
      %cst_76 = arith.constant 2.560000e+02 : f32
      %309 = vector.broadcast %cst_76 : f32 to vector<1x1xf32>
      %310 = arith.divf %308, %309 : vector<1x1xf32>
      %cst_77 = arith.constant 9.99999974E-6 : f32
      %311 = vector.broadcast %cst_77 : f32 to vector<1x1xf32>
      %312 = arith.addf %310, %311 : vector<1x1xf32>
      %313 = math.rsqrt %312 : vector<1x1xf32>
      %314 = vector.broadcast %313 : vector<1x1xf32> to vector<8x32xf32>
      %315 = arith.mulf %303, %314 : vector<8x32xf32>
      %316 = vector.broadcast %294 : vector<1x1xf32> to vector<8x32xf32>
      %317 = arith.mulf %315, %316 : vector<8x32xf32>
      %318 = vector.broadcast %295 : vector<1x1xf32> to vector<8x32xf32>
      %319 = arith.addf %317, %318 : vector<8x32xf32>
      %cst_78 = arith.constant 0.000000e+00 : f32
      %320 = vector.broadcast %cst_78 : f32 to vector<8x32xf32>
      %321 = arith.maximumf %319, %320 : vector<8x32xf32>
      %c3 = arith.constant 3 : index
      %c0_79 = arith.constant 0 : index
      %c0_80 = arith.constant 0 : index
      %322 = vector.load %arg6[%c3, %c0_79, %c0_80] : memref<8x32x32xf32, #tpu.memory_space<vmem>>, vector<1x32x32xf32>
      %323 = vector.shape_cast %322 : vector<1x32x32xf32> to vector<32x32xf32>
      %cst_81 = arith.constant dense<0.000000e+00> : vector<8x32xf32>
      %324 = tpu.matmul %321, %323, %cst_81 {dimension_numbers = #tpu.dot_dimension_numbers<[1], [0], [0], [1], [0, 0, 1, 1], [], []>} : vector<8x32xf32>, vector<32x32xf32>, vector<8x32xf32> -> vector<8x32xf32>
      %325 = arith.addf %267, %324 : vector<8x32xf32>
      %326 = vector.extract_strided_slice %8 {offsets = [0, 4], sizes = [1, 1], strides = [1, 1]} : vector<13x32xf32> to vector<1x1xf32>
      %327 = vector.broadcast %326 : vector<1x1xf32> to vector<8x32xf32>
      %328 = arith.mulf %74, %327 : vector<8x32xf32>
      %329 = vector.extract_strided_slice %8 {offsets = [1, 4], sizes = [1, 1], strides = [1, 1]} : vector<13x32xf32> to vector<1x1xf32>
      %330 = vector.broadcast %329 : vector<1x1xf32> to vector<8x32xf32>
      %331 = arith.mulf %38, %330 : vector<8x32xf32>
      %332 = arith.addf %328, %331 : vector<8x32xf32>
      %333 = vector.extract_strided_slice %8 {offsets = [2, 4], sizes = [1, 1], strides = [1, 1]} : vector<13x32xf32> to vector<1x1xf32>
      %334 = vector.broadcast %333 : vector<1x1xf32> to vector<8x32xf32>
      %335 = arith.mulf %79, %334 : vector<8x32xf32>
      %336 = arith.addf %332, %335 : vector<8x32xf32>
      %337 = vector.extract_strided_slice %8 {offsets = [3, 4], sizes = [1, 1], strides = [1, 1]} : vector<13x32xf32> to vector<1x1xf32>
      %338 = vector.broadcast %337 : vector<1x1xf32> to vector<8x32xf32>
      %339 = arith.mulf %84, %338 : vector<8x32xf32>
      %340 = arith.addf %336, %339 : vector<8x32xf32>
      %341 = vector.extract_strided_slice %8 {offsets = [4, 4], sizes = [1, 1], strides = [1, 1]} : vector<13x32xf32> to vector<1x1xf32>
      %342 = vector.broadcast %341 : vector<1x1xf32> to vector<8x32xf32>
      %343 = arith.mulf %64, %342 : vector<8x32xf32>
      %344 = arith.addf %340, %343 : vector<8x32xf32>
      %345 = vector.extract_strided_slice %8 {offsets = [5, 4], sizes = [1, 1], strides = [1, 1]} : vector<13x32xf32> to vector<1x1xf32>
      %346 = vector.broadcast %345 : vector<1x1xf32> to vector<8x32xf32>
      %347 = arith.mulf %89, %346 : vector<8x32xf32>
      %348 = arith.addf %344, %347 : vector<8x32xf32>
      %349 = vector.extract_strided_slice %8 {offsets = [6, 4], sizes = [1, 1], strides = [1, 1]} : vector<13x32xf32> to vector<1x1xf32>
      %350 = vector.broadcast %349 : vector<1x1xf32> to vector<8x32xf32>
      %351 = arith.addf %348, %350 : vector<8x32xf32>
      %352 = vector.extract_strided_slice %8 {offsets = [7, 4], sizes = [1, 1], strides = [1, 1]} : vector<13x32xf32> to vector<1x1xf32>
      %353 = vector.extract_strided_slice %8 {offsets = [8, 4], sizes = [1, 1], strides = [1, 1]} : vector<13x32xf32> to vector<1x1xf32>
      %cst_82 = arith.constant dense<0.000000e+00> : vector<32xf32>
      %354 = vector.multi_reduction <add>, %351, %cst_82 [0] : vector<8x32xf32> to vector<32xf32>
      %355 = vector.shape_cast %354 : vector<32xf32> to vector<1x32xf32>
      %cst_83 = arith.constant dense<0.000000e+00> : vector<1xf32>
      %356 = vector.multi_reduction <add>, %355, %cst_83 [1] : vector<1x32xf32> to vector<1xf32>
      %357 = vector.shape_cast %356 : vector<1xf32> to vector<1x1xf32>
      %cst_84 = arith.constant 2.560000e+02 : f32
      %358 = vector.broadcast %cst_84 : f32 to vector<1x1xf32>
      %359 = arith.divf %357, %358 : vector<1x1xf32>
      %360 = vector.broadcast %359 : vector<1x1xf32> to vector<8x32xf32>
      %361 = arith.subf %351, %360 : vector<8x32xf32>
      %362 = arith.mulf %361, %361 : vector<8x32xf32>
      %cst_85 = arith.constant dense<0.000000e+00> : vector<32xf32>
      %363 = vector.multi_reduction <add>, %362, %cst_85 [0] : vector<8x32xf32> to vector<32xf32>
      %364 = vector.shape_cast %363 : vector<32xf32> to vector<1x32xf32>
      %cst_86 = arith.constant dense<0.000000e+00> : vector<1xf32>
      %365 = vector.multi_reduction <add>, %364, %cst_86 [1] : vector<1x32xf32> to vector<1xf32>
      %366 = vector.shape_cast %365 : vector<1xf32> to vector<1x1xf32>
      %cst_87 = arith.constant 2.560000e+02 : f32
      %367 = vector.broadcast %cst_87 : f32 to vector<1x1xf32>
      %368 = arith.divf %366, %367 : vector<1x1xf32>
      %cst_88 = arith.constant 9.99999974E-6 : f32
      %369 = vector.broadcast %cst_88 : f32 to vector<1x1xf32>
      %370 = arith.addf %368, %369 : vector<1x1xf32>
      %371 = math.rsqrt %370 : vector<1x1xf32>
      %372 = vector.broadcast %371 : vector<1x1xf32> to vector<8x32xf32>
      %373 = arith.mulf %361, %372 : vector<8x32xf32>
      %374 = vector.broadcast %352 : vector<1x1xf32> to vector<8x32xf32>
      %375 = arith.mulf %373, %374 : vector<8x32xf32>
      %376 = vector.broadcast %353 : vector<1x1xf32> to vector<8x32xf32>
      %377 = arith.addf %375, %376 : vector<8x32xf32>
      %cst_89 = arith.constant 0.000000e+00 : f32
      %378 = vector.broadcast %cst_89 : f32 to vector<8x32xf32>
      %379 = arith.maximumf %377, %378 : vector<8x32xf32>
      %c4 = arith.constant 4 : index
      %c0_90 = arith.constant 0 : index
      %c0_91 = arith.constant 0 : index
      %380 = vector.load %arg6[%c4, %c0_90, %c0_91] : memref<8x32x32xf32, #tpu.memory_space<vmem>>, vector<1x32x32xf32>
      %381 = vector.shape_cast %380 : vector<1x32x32xf32> to vector<32x32xf32>
      %cst_92 = arith.constant dense<0.000000e+00> : vector<8x32xf32>
      %382 = tpu.matmul %379, %381, %cst_92 {dimension_numbers = #tpu.dot_dimension_numbers<[1], [0], [0], [1], [0, 0, 1, 1], [], []>} : vector<8x32xf32>, vector<32x32xf32>, vector<8x32xf32> -> vector<8x32xf32>
      %383 = arith.addf %325, %382 : vector<8x32xf32>
      %384 = vector.extract_strided_slice %8 {offsets = [0, 5], sizes = [1, 1], strides = [1, 1]} : vector<13x32xf32> to vector<1x1xf32>
      %385 = vector.broadcast %384 : vector<1x1xf32> to vector<8x32xf32>
      %386 = arith.mulf %74, %385 : vector<8x32xf32>
      %387 = vector.extract_strided_slice %8 {offsets = [1, 5], sizes = [1, 1], strides = [1, 1]} : vector<13x32xf32> to vector<1x1xf32>
      %388 = vector.broadcast %387 : vector<1x1xf32> to vector<8x32xf32>
      %389 = arith.mulf %38, %388 : vector<8x32xf32>
      %390 = arith.addf %386, %389 : vector<8x32xf32>
      %391 = vector.extract_strided_slice %8 {offsets = [2, 5], sizes = [1, 1], strides = [1, 1]} : vector<13x32xf32> to vector<1x1xf32>
      %392 = vector.broadcast %391 : vector<1x1xf32> to vector<8x32xf32>
      %393 = arith.mulf %79, %392 : vector<8x32xf32>
      %394 = arith.addf %390, %393 : vector<8x32xf32>
      %395 = vector.extract_strided_slice %8 {offsets = [3, 5], sizes = [1, 1], strides = [1, 1]} : vector<13x32xf32> to vector<1x1xf32>
      %396 = vector.broadcast %395 : vector<1x1xf32> to vector<8x32xf32>
      %397 = arith.mulf %84, %396 : vector<8x32xf32>
      %398 = arith.addf %394, %397 : vector<8x32xf32>
      %399 = vector.extract_strided_slice %8 {offsets = [4, 5], sizes = [1, 1], strides = [1, 1]} : vector<13x32xf32> to vector<1x1xf32>
      %400 = vector.broadcast %399 : vector<1x1xf32> to vector<8x32xf32>
      %401 = arith.mulf %64, %400 : vector<8x32xf32>
      %402 = arith.addf %398, %401 : vector<8x32xf32>
      %403 = vector.extract_strided_slice %8 {offsets = [5, 5], sizes = [1, 1], strides = [1, 1]} : vector<13x32xf32> to vector<1x1xf32>
      %404 = vector.broadcast %403 : vector<1x1xf32> to vector<8x32xf32>
      %405 = arith.mulf %89, %404 : vector<8x32xf32>
      %406 = arith.addf %402, %405 : vector<8x32xf32>
      %407 = vector.extract_strided_slice %8 {offsets = [6, 5], sizes = [1, 1], strides = [1, 1]} : vector<13x32xf32> to vector<1x1xf32>
      %408 = vector.broadcast %407 : vector<1x1xf32> to vector<8x32xf32>
      %409 = arith.addf %406, %408 : vector<8x32xf32>
      %410 = vector.extract_strided_slice %8 {offsets = [7, 5], sizes = [1, 1], strides = [1, 1]} : vector<13x32xf32> to vector<1x1xf32>
      %411 = vector.extract_strided_slice %8 {offsets = [8, 5], sizes = [1, 1], strides = [1, 1]} : vector<13x32xf32> to vector<1x1xf32>
      %cst_93 = arith.constant dense<0.000000e+00> : vector<32xf32>
      %412 = vector.multi_reduction <add>, %409, %cst_93 [0] : vector<8x32xf32> to vector<32xf32>
      %413 = vector.shape_cast %412 : vector<32xf32> to vector<1x32xf32>
      %cst_94 = arith.constant dense<0.000000e+00> : vector<1xf32>
      %414 = vector.multi_reduction <add>, %413, %cst_94 [1] : vector<1x32xf32> to vector<1xf32>
      %415 = vector.shape_cast %414 : vector<1xf32> to vector<1x1xf32>
      %cst_95 = arith.constant 2.560000e+02 : f32
      %416 = vector.broadcast %cst_95 : f32 to vector<1x1xf32>
      %417 = arith.divf %415, %416 : vector<1x1xf32>
      %418 = vector.broadcast %417 : vector<1x1xf32> to vector<8x32xf32>
      %419 = arith.subf %409, %418 : vector<8x32xf32>
      %420 = arith.mulf %419, %419 : vector<8x32xf32>
      %cst_96 = arith.constant dense<0.000000e+00> : vector<32xf32>
      %421 = vector.multi_reduction <add>, %420, %cst_96 [0] : vector<8x32xf32> to vector<32xf32>
      %422 = vector.shape_cast %421 : vector<32xf32> to vector<1x32xf32>
      %cst_97 = arith.constant dense<0.000000e+00> : vector<1xf32>
      %423 = vector.multi_reduction <add>, %422, %cst_97 [1] : vector<1x32xf32> to vector<1xf32>
      %424 = vector.shape_cast %423 : vector<1xf32> to vector<1x1xf32>
      %cst_98 = arith.constant 2.560000e+02 : f32
      %425 = vector.broadcast %cst_98 : f32 to vector<1x1xf32>
      %426 = arith.divf %424, %425 : vector<1x1xf32>
      %cst_99 = arith.constant 9.99999974E-6 : f32
      %427 = vector.broadcast %cst_99 : f32 to vector<1x1xf32>
      %428 = arith.addf %426, %427 : vector<1x1xf32>
      %429 = math.rsqrt %428 : vector<1x1xf32>
      %430 = vector.broadcast %429 : vector<1x1xf32> to vector<8x32xf32>
      %431 = arith.mulf %419, %430 : vector<8x32xf32>
      %432 = vector.broadcast %410 : vector<1x1xf32> to vector<8x32xf32>
      %433 = arith.mulf %431, %432 : vector<8x32xf32>
      %434 = vector.broadcast %411 : vector<1x1xf32> to vector<8x32xf32>
      %435 = arith.addf %433, %434 : vector<8x32xf32>
      %cst_100 = arith.constant 0.000000e+00 : f32
      %436 = vector.broadcast %cst_100 : f32 to vector<8x32xf32>
      %437 = arith.maximumf %435, %436 : vector<8x32xf32>
      %c5 = arith.constant 5 : index
      %c0_101 = arith.constant 0 : index
      %c0_102 = arith.constant 0 : index
      %438 = vector.load %arg6[%c5, %c0_101, %c0_102] : memref<8x32x32xf32, #tpu.memory_space<vmem>>, vector<1x32x32xf32>
      %439 = vector.shape_cast %438 : vector<1x32x32xf32> to vector<32x32xf32>
      %cst_103 = arith.constant dense<0.000000e+00> : vector<8x32xf32>
      %440 = tpu.matmul %437, %439, %cst_103 {dimension_numbers = #tpu.dot_dimension_numbers<[1], [0], [0], [1], [0, 0, 1, 1], [], []>} : vector<8x32xf32>, vector<32x32xf32>, vector<8x32xf32> -> vector<8x32xf32>
      %441 = arith.addf %383, %440 : vector<8x32xf32>
      %442 = vector.extract_strided_slice %8 {offsets = [0, 6], sizes = [1, 1], strides = [1, 1]} : vector<13x32xf32> to vector<1x1xf32>
      %443 = vector.broadcast %442 : vector<1x1xf32> to vector<8x32xf32>
      %444 = arith.mulf %74, %443 : vector<8x32xf32>
      %445 = vector.extract_strided_slice %8 {offsets = [1, 6], sizes = [1, 1], strides = [1, 1]} : vector<13x32xf32> to vector<1x1xf32>
      %446 = vector.broadcast %445 : vector<1x1xf32> to vector<8x32xf32>
      %447 = arith.mulf %38, %446 : vector<8x32xf32>
      %448 = arith.addf %444, %447 : vector<8x32xf32>
      %449 = vector.extract_strided_slice %8 {offsets = [2, 6], sizes = [1, 1], strides = [1, 1]} : vector<13x32xf32> to vector<1x1xf32>
      %450 = vector.broadcast %449 : vector<1x1xf32> to vector<8x32xf32>
      %451 = arith.mulf %79, %450 : vector<8x32xf32>
      %452 = arith.addf %448, %451 : vector<8x32xf32>
      %453 = vector.extract_strided_slice %8 {offsets = [3, 6], sizes = [1, 1], strides = [1, 1]} : vector<13x32xf32> to vector<1x1xf32>
      %454 = vector.broadcast %453 : vector<1x1xf32> to vector<8x32xf32>
      %455 = arith.mulf %84, %454 : vector<8x32xf32>
      %456 = arith.addf %452, %455 : vector<8x32xf32>
      %457 = vector.extract_strided_slice %8 {offsets = [4, 6], sizes = [1, 1], strides = [1, 1]} : vector<13x32xf32> to vector<1x1xf32>
      %458 = vector.broadcast %457 : vector<1x1xf32> to vector<8x32xf32>
      %459 = arith.mulf %64, %458 : vector<8x32xf32>
      %460 = arith.addf %456, %459 : vector<8x32xf32>
      %461 = vector.extract_strided_slice %8 {offsets = [5, 6], sizes = [1, 1], strides = [1, 1]} : vector<13x32xf32> to vector<1x1xf32>
      %462 = vector.broadcast %461 : vector<1x1xf32> to vector<8x32xf32>
      %463 = arith.mulf %89, %462 : vector<8x32xf32>
      %464 = arith.addf %460, %463 : vector<8x32xf32>
      %465 = vector.extract_strided_slice %8 {offsets = [6, 6], sizes = [1, 1], strides = [1, 1]} : vector<13x32xf32> to vector<1x1xf32>
      %466 = vector.broadcast %465 : vector<1x1xf32> to vector<8x32xf32>
      %467 = arith.addf %464, %466 : vector<8x32xf32>
      %468 = vector.extract_strided_slice %8 {offsets = [7, 6], sizes = [1, 1], strides = [1, 1]} : vector<13x32xf32> to vector<1x1xf32>
      %469 = vector.extract_strided_slice %8 {offsets = [8, 6], sizes = [1, 1], strides = [1, 1]} : vector<13x32xf32> to vector<1x1xf32>
      %cst_104 = arith.constant dense<0.000000e+00> : vector<32xf32>
      %470 = vector.multi_reduction <add>, %467, %cst_104 [0] : vector<8x32xf32> to vector<32xf32>
      %471 = vector.shape_cast %470 : vector<32xf32> to vector<1x32xf32>
      %cst_105 = arith.constant dense<0.000000e+00> : vector<1xf32>
      %472 = vector.multi_reduction <add>, %471, %cst_105 [1] : vector<1x32xf32> to vector<1xf32>
      %473 = vector.shape_cast %472 : vector<1xf32> to vector<1x1xf32>
      %cst_106 = arith.constant 2.560000e+02 : f32
      %474 = vector.broadcast %cst_106 : f32 to vector<1x1xf32>
      %475 = arith.divf %473, %474 : vector<1x1xf32>
      %476 = vector.broadcast %475 : vector<1x1xf32> to vector<8x32xf32>
      %477 = arith.subf %467, %476 : vector<8x32xf32>
      %478 = arith.mulf %477, %477 : vector<8x32xf32>
      %cst_107 = arith.constant dense<0.000000e+00> : vector<32xf32>
      %479 = vector.multi_reduction <add>, %478, %cst_107 [0] : vector<8x32xf32> to vector<32xf32>
      %480 = vector.shape_cast %479 : vector<32xf32> to vector<1x32xf32>
      %cst_108 = arith.constant dense<0.000000e+00> : vector<1xf32>
      %481 = vector.multi_reduction <add>, %480, %cst_108 [1] : vector<1x32xf32> to vector<1xf32>
      %482 = vector.shape_cast %481 : vector<1xf32> to vector<1x1xf32>
      %cst_109 = arith.constant 2.560000e+02 : f32
      %483 = vector.broadcast %cst_109 : f32 to vector<1x1xf32>
      %484 = arith.divf %482, %483 : vector<1x1xf32>
      %cst_110 = arith.constant 9.99999974E-6 : f32
      %485 = vector.broadcast %cst_110 : f32 to vector<1x1xf32>
      %486 = arith.addf %484, %485 : vector<1x1xf32>
      %487 = math.rsqrt %486 : vector<1x1xf32>
      %488 = vector.broadcast %487 : vector<1x1xf32> to vector<8x32xf32>
      %489 = arith.mulf %477, %488 : vector<8x32xf32>
      %490 = vector.broadcast %468 : vector<1x1xf32> to vector<8x32xf32>
      %491 = arith.mulf %489, %490 : vector<8x32xf32>
      %492 = vector.broadcast %469 : vector<1x1xf32> to vector<8x32xf32>
      %493 = arith.addf %491, %492 : vector<8x32xf32>
      %cst_111 = arith.constant 0.000000e+00 : f32
      %494 = vector.broadcast %cst_111 : f32 to vector<8x32xf32>
      %495 = arith.maximumf %493, %494 : vector<8x32xf32>
      %c6 = arith.constant 6 : index
      %c0_112 = arith.constant 0 : index
      %c0_113 = arith.constant 0 : index
      %496 = vector.load %arg6[%c6, %c0_112, %c0_113] : memref<8x32x32xf32, #tpu.memory_space<vmem>>, vector<1x32x32xf32>
      %497 = vector.shape_cast %496 : vector<1x32x32xf32> to vector<32x32xf32>
      %cst_114 = arith.constant dense<0.000000e+00> : vector<8x32xf32>
      %498 = tpu.matmul %495, %497, %cst_114 {dimension_numbers = #tpu.dot_dimension_numbers<[1], [0], [0], [1], [0, 0, 1, 1], [], []>} : vector<8x32xf32>, vector<32x32xf32>, vector<8x32xf32> -> vector<8x32xf32>
      %499 = arith.addf %441, %498 : vector<8x32xf32>
      %500 = vector.extract_strided_slice %8 {offsets = [0, 7], sizes = [1, 1], strides = [1, 1]} : vector<13x32xf32> to vector<1x1xf32>
      %501 = vector.broadcast %500 : vector<1x1xf32> to vector<8x32xf32>
      %502 = arith.mulf %74, %501 : vector<8x32xf32>
      %503 = vector.extract_strided_slice %8 {offsets = [1, 7], sizes = [1, 1], strides = [1, 1]} : vector<13x32xf32> to vector<1x1xf32>
      %504 = vector.broadcast %503 : vector<1x1xf32> to vector<8x32xf32>
      %505 = arith.mulf %38, %504 : vector<8x32xf32>
      %506 = arith.addf %502, %505 : vector<8x32xf32>
      %507 = vector.extract_strided_slice %8 {offsets = [2, 7], sizes = [1, 1], strides = [1, 1]} : vector<13x32xf32> to vector<1x1xf32>
      %508 = vector.broadcast %507 : vector<1x1xf32> to vector<8x32xf32>
      %509 = arith.mulf %79, %508 : vector<8x32xf32>
      %510 = arith.addf %506, %509 : vector<8x32xf32>
      %511 = vector.extract_strided_slice %8 {offsets = [3, 7], sizes = [1, 1], strides = [1, 1]} : vector<13x32xf32> to vector<1x1xf32>
      %512 = vector.broadcast %511 : vector<1x1xf32> to vector<8x32xf32>
      %513 = arith.mulf %84, %512 : vector<8x32xf32>
      %514 = arith.addf %510, %513 : vector<8x32xf32>
      %515 = vector.extract_strided_slice %8 {offsets = [4, 7], sizes = [1, 1], strides = [1, 1]} : vector<13x32xf32> to vector<1x1xf32>
      %516 = vector.broadcast %515 : vector<1x1xf32> to vector<8x32xf32>
      %517 = arith.mulf %64, %516 : vector<8x32xf32>
      %518 = arith.addf %514, %517 : vector<8x32xf32>
      %519 = vector.extract_strided_slice %8 {offsets = [5, 7], sizes = [1, 1], strides = [1, 1]} : vector<13x32xf32> to vector<1x1xf32>
      %520 = vector.broadcast %519 : vector<1x1xf32> to vector<8x32xf32>
      %521 = arith.mulf %89, %520 : vector<8x32xf32>
      %522 = arith.addf %518, %521 : vector<8x32xf32>
      %523 = vector.extract_strided_slice %8 {offsets = [6, 7], sizes = [1, 1], strides = [1, 1]} : vector<13x32xf32> to vector<1x1xf32>
      %524 = vector.broadcast %523 : vector<1x1xf32> to vector<8x32xf32>
      %525 = arith.addf %522, %524 : vector<8x32xf32>
      %526 = vector.extract_strided_slice %8 {offsets = [7, 7], sizes = [1, 1], strides = [1, 1]} : vector<13x32xf32> to vector<1x1xf32>
      %527 = vector.extract_strided_slice %8 {offsets = [8, 7], sizes = [1, 1], strides = [1, 1]} : vector<13x32xf32> to vector<1x1xf32>
      %cst_115 = arith.constant dense<0.000000e+00> : vector<32xf32>
      %528 = vector.multi_reduction <add>, %525, %cst_115 [0] : vector<8x32xf32> to vector<32xf32>
      %529 = vector.shape_cast %528 : vector<32xf32> to vector<1x32xf32>
      %cst_116 = arith.constant dense<0.000000e+00> : vector<1xf32>
      %530 = vector.multi_reduction <add>, %529, %cst_116 [1] : vector<1x32xf32> to vector<1xf32>
      %531 = vector.shape_cast %530 : vector<1xf32> to vector<1x1xf32>
      %cst_117 = arith.constant 2.560000e+02 : f32
      %532 = vector.broadcast %cst_117 : f32 to vector<1x1xf32>
      %533 = arith.divf %531, %532 : vector<1x1xf32>
      %534 = vector.broadcast %533 : vector<1x1xf32> to vector<8x32xf32>
      %535 = arith.subf %525, %534 : vector<8x32xf32>
      %536 = arith.mulf %535, %535 : vector<8x32xf32>
      %cst_118 = arith.constant dense<0.000000e+00> : vector<32xf32>
      %537 = vector.multi_reduction <add>, %536, %cst_118 [0] : vector<8x32xf32> to vector<32xf32>
      %538 = vector.shape_cast %537 : vector<32xf32> to vector<1x32xf32>
      %cst_119 = arith.constant dense<0.000000e+00> : vector<1xf32>
      %539 = vector.multi_reduction <add>, %538, %cst_119 [1] : vector<1x32xf32> to vector<1xf32>
      %540 = vector.shape_cast %539 : vector<1xf32> to vector<1x1xf32>
      %cst_120 = arith.constant 2.560000e+02 : f32
      %541 = vector.broadcast %cst_120 : f32 to vector<1x1xf32>
      %542 = arith.divf %540, %541 : vector<1x1xf32>
      %cst_121 = arith.constant 9.99999974E-6 : f32
      %543 = vector.broadcast %cst_121 : f32 to vector<1x1xf32>
      %544 = arith.addf %542, %543 : vector<1x1xf32>
      %545 = math.rsqrt %544 : vector<1x1xf32>
      %546 = vector.broadcast %545 : vector<1x1xf32> to vector<8x32xf32>
      %547 = arith.mulf %535, %546 : vector<8x32xf32>
      %548 = vector.broadcast %526 : vector<1x1xf32> to vector<8x32xf32>
      %549 = arith.mulf %547, %548 : vector<8x32xf32>
      %550 = vector.broadcast %527 : vector<1x1xf32> to vector<8x32xf32>
      %551 = arith.addf %549, %550 : vector<8x32xf32>
      %cst_122 = arith.constant 0.000000e+00 : f32
      %552 = vector.broadcast %cst_122 : f32 to vector<8x32xf32>
      %553 = arith.maximumf %551, %552 : vector<8x32xf32>
      %c7 = arith.constant 7 : index
      %c0_123 = arith.constant 0 : index
      %c0_124 = arith.constant 0 : index
      %554 = vector.load %arg6[%c7, %c0_123, %c0_124] : memref<8x32x32xf32, #tpu.memory_space<vmem>>, vector<1x32x32xf32>
      %555 = vector.shape_cast %554 : vector<1x32x32xf32> to vector<32x32xf32>
      %cst_125 = arith.constant dense<0.000000e+00> : vector<8x32xf32>
      %556 = tpu.matmul %553, %555, %cst_125 {dimension_numbers = #tpu.dot_dimension_numbers<[1], [0], [0], [1], [0, 0, 1, 1], [], []>} : vector<8x32xf32>, vector<32x32xf32>, vector<8x32xf32> -> vector<8x32xf32>
      %557 = arith.addf %499, %556 : vector<8x32xf32>
      %558 = vector.extract_strided_slice %8 {offsets = [11, 0], sizes = [1, 32], strides = [1, 1]} : vector<13x32xf32> to vector<1x32xf32>
      %559 = vector.extract_strided_slice %8 {offsets = [12, 0], sizes = [1, 32], strides = [1, 1]} : vector<13x32xf32> to vector<1x32xf32>
      %cst_126 = arith.constant dense<0.000000e+00> : vector<32xf32>
      %560 = vector.multi_reduction <add>, %557, %cst_126 [0] : vector<8x32xf32> to vector<32xf32>
      %561 = vector.shape_cast %560 : vector<32xf32> to vector<1x32xf32>
      %cst_127 = arith.constant 8.000000e+00 : f32
      %562 = vector.broadcast %cst_127 : f32 to vector<1x32xf32>
      %563 = arith.divf %561, %562 : vector<1x32xf32>
      %564 = vector.broadcast %563 : vector<1x32xf32> to vector<8x32xf32>
      %565 = arith.subf %557, %564 : vector<8x32xf32>
      %566 = arith.mulf %565, %565 : vector<8x32xf32>
      %cst_128 = arith.constant dense<0.000000e+00> : vector<32xf32>
      %567 = vector.multi_reduction <add>, %566, %cst_128 [0] : vector<8x32xf32> to vector<32xf32>
      %568 = vector.shape_cast %567 : vector<32xf32> to vector<1x32xf32>
      %cst_129 = arith.constant 8.000000e+00 : f32
      %569 = vector.broadcast %cst_129 : f32 to vector<1x32xf32>
      %570 = arith.divf %568, %569 : vector<1x32xf32>
      %cst_130 = arith.constant 9.99999974E-6 : f32
      %571 = vector.broadcast %cst_130 : f32 to vector<1x32xf32>
      %572 = arith.addf %570, %571 : vector<1x32xf32>
      %573 = math.rsqrt %572 : vector<1x32xf32>
      %574 = vector.broadcast %573 : vector<1x32xf32> to vector<8x32xf32>
      %575 = arith.mulf %565, %574 : vector<8x32xf32>
      %576 = vector.broadcast %558 : vector<1x32xf32> to vector<8x32xf32>
      %577 = arith.mulf %575, %576 : vector<8x32xf32>
      %578 = vector.broadcast %559 : vector<1x32xf32> to vector<8x32xf32>
      %579 = arith.addf %577, %578 : vector<8x32xf32>
      %cst_131 = arith.constant 0.000000e+00 : f32
      %580 = vector.broadcast %cst_131 : f32 to vector<8x32xf32>
      %581 = arith.maximumf %579, %580 : vector<8x32xf32>
      %c0_132 = arith.constant 0 : index
      %c0_133 = arith.constant 0 : index
      %582 = vector.load %arg9[%c0_132, %c0_133] : memref<8x32xf32, #tpu.memory_space<vmem>>, vector<8x32xf32>
      tpu.vector_store %arg9[%c0_132, %c0_133], %581 {strides = array<i32>} : memref<8x32xf32, #tpu.memory_space<vmem>>, vector<8x32xf32>,
    } else {
    }
    %c0 = arith.constant 0 : index
    %c0_1 = arith.constant 0 : index
    %3 = vector.load %arg7[%c0, %c0_1] : memref<128x32xf32, #tpu.memory_space<vmem>>, vector<128x32xf32>
    %4 = math.tanh %3 : vector<128x32xf32>
    %c0_2 = arith.constant 0 : index
    %c0_3 = arith.constant 0 : index
    %5 = vector.load %arg9[%c0_2, %c0_3] : memref<8x32xf32, #tpu.memory_space<vmem>>, vector<8x32xf32>
    %cst = arith.constant dense<0.000000e+00> : vector<8x128xf32>
    %6 = tpu.matmul %5, %4, %cst {dimension_numbers = #tpu.dot_dimension_numbers<[1], [1], [0], [0], [0, 0, 1, 0], [], []>} : vector<8x32xf32>, vector<128x32xf32>, vector<8x128xf32> -> vector<8x128xf32>
    %c0_4 = arith.constant 0 : index
    %c0_5 = arith.constant 0 : index
    %7 = vector.load %arg8[%c0_4, %c0_5] : memref<8x128xf32, #tpu.memory_space<vmem>>, vector<8x128xf32>
    tpu.vector_store %arg8[%c0_4, %c0_5], %6 {strides = array<i32>} : memref<8x128xf32, #tpu.memory_space<vmem>>, vector<8x128xf32>,
    return
  }
  func.func @transform_0(%arg0: i32, %arg1: i32) -> (i32, i32) {
    %c0_i32 = arith.constant 0 : i32
    %c0_i32_0 = arith.constant 0 : i32
    %c0_i32_1 = arith.constant 0 : i32
    return %c0_i32, %c0_i32_0 : i32, i32
  }
  func.func @transform_1(%arg0: i32, %arg1: i32) -> (i32, i32) {
    %c0_i32 = arith.constant 0 : i32
    %c0_i32_0 = arith.constant 0 : i32
    %c0_i32_1 = arith.constant 0 : i32
    return %c0_i32, %c0_i32_0 : i32, i32
  }
  func.func @transform_2(%arg0: i32, %arg1: i32) -> (i32, i32) {
    %c0_i32 = arith.constant 0 : i32
    %c0_i32_0 = arith.constant 0 : i32
    %c0_i32_1 = arith.constant 0 : i32
    return %c0_i32, %c0_i32_0 : i32, i32
  }
  func.func @transform_3(%arg0: i32, %arg1: i32) -> (i32, i32) {
    %c0_i32 = arith.constant 0 : i32
    %c0_i32_0 = arith.constant 0 : i32
    %c0_i32_1 = arith.constant 0 : i32
    return %c0_i32, %c0_i32_0 : i32, i32
  }
  func.func @transform_4(%arg0: i32, %arg1: i32) -> (i32, i32, i32) {
    %c0_i32 = arith.constant 0 : i32
    %c0_i32_0 = arith.constant 0 : i32
    %c0_i32_1 = arith.constant 0 : i32
    %c0_i32_2 = arith.constant 0 : i32
    return %c0_i32, %c0_i32_0, %c0_i32_1 : i32, i32, i32
  }
  func.func @transform_5(%arg0: i32, %arg1: i32) -> (i32, i32) {
    %c1_i32 = arith.constant 1 : i32
    %0 = arith.muli %arg0, %c1_i32 : i32
    %1 = arith.addi %0, %arg1 : i32
    %c0_i32 = arith.constant 0 : i32
    %2 = arith.minsi %1, %c0_i32 : i32
    %c0_i32_0 = arith.constant 0 : i32
    %c0_i32_1 = arith.constant 0 : i32
    return %2, %c0_i32_0 : i32, i32
  }
  func.func @transform_6(%arg0: i32, %arg1: i32) -> (i32, i32) {
    %c1_i32 = arith.constant 1 : i32
    %0 = arith.muli %arg0, %c1_i32 : i32
    %1 = arith.addi %0, %arg1 : i32
    %c0_i32 = arith.constant 0 : i32
    %c0_i32_0 = arith.constant 0 : i32
    return %c0_i32, %1 : i32, i32
  }
}

module attributes {stable_mosaic.version = 11 : i64} {
  func.func @_conv_evolve_kernel(%arg0: i32, %arg1: i32, %arg2: memref<8x32xf32, #tpu.memory_space<vmem>>, %arg3: memref<8x32xf32, #tpu.memory_space<vmem>>, %arg4: memref<8x32xf32, #tpu.memory_space<vmem>>, %arg5: memref<13x32xf32, #tpu.memory_space<vmem>>, %arg6: memref<8x32x32xf32, #tpu.memory_space<vmem>>, %arg7: memref<128x32xf32, #tpu.memory_space<vmem>>, %arg8: memref<8x128xf32, #tpu.memory_space<vmem>>, %arg9: memref<8x32xf32, #tpu.memory_space<vmem>>) attributes {dimension_semantics = [#tpu.dimension_semantics<parallel>, #tpu.dimension_semantics<arbitrary>], iteration_bounds = array<i64: 1, 1>, scalar_prefetch = 0 : i64, scratch_operands = 1 : i64, tpu.core_type = #tpu.core_type<tc>, window_params = [{pipeline_mode = #tpu.pipeline_mode<synchronous>, transform_indices = @transform_0, window_bounds = array<i64: 8, 32>}, {pipeline_mode = #tpu.pipeline_mode<synchronous>, transform_indices = @transform_1, window_bounds = array<i64: 8, 32>}, {pipeline_mode = #tpu.pipeline_mode<synchronous>, transform_indices = @transform_2, window_bounds = array<i64: 8, 32>}, {pipeline_mode = #tpu.pipeline_mode<synchronous>, transform_indices = @transform_3, window_bounds = array<i64: 13, 32>}, {pipeline_mode = #tpu.pipeline_mode<synchronous>, transform_indices = @transform_4, window_bounds = array<i64: 8, 32, 32>}, {transform_indices = @transform_5, window_bounds = array<i64: 128, 32>}, {transform_indices = @transform_6, window_bounds = array<i64: 8, 128>}]} {
    %c0_i32 = arith.constant 0 : i32
    %0 = arith.cmpi eq, %arg1, %c0_i32 : i32
    %1 = arith.extui %0 : i1 to i32
    %c0_i32_0 = arith.constant 0 : i32
    %2 = arith.cmpi ne, %1, %c0_i32_0 : i32
    scf.if %2 {
      %c0_6 = arith.constant 0 : index
      %c0_7 = arith.constant 0 : index
      %8 = vector.load %arg5[%c0_6, %c0_7] : memref<13x32xf32, #tpu.memory_space<vmem>>, vector<13x32xf32>
      %c0_8 = arith.constant 0 : index
      %c0_9 = arith.constant 0 : index
      %9 = vector.load %arg2[%c0_8, %c0_9] : memref<8x32xf32, #tpu.memory_space<vmem>>, vector<8x32xf32>
      %c0_10 = arith.constant 0 : index
      %c0_11 = arith.constant 0 : index
      %10 = vector.load %arg3[%c0_10, %c0_11] : memref<8x32xf32, #tpu.memory_space<vmem>>, vector<8x32xf32>
      %11 = arith.addf %9, %10 : vector<8x32xf32>
      %c0_12 = arith.constant 0 : index
      %c0_13 = arith.constant 0 : index
      %12 = vector.load %arg4[%c0_12, %c0_13] : memref<8x32xf32, #tpu.memory_space<vmem>>, vector<8x32xf32>
      %13 = vector.extract_strided_slice %8 {offsets = [9, 0], sizes = [1, 1], strides = [1, 1]} : vector<13x32xf32> to vector<1x1xf32>
      %14 = vector.extract_strided_slice %8 {offsets = [9, 2], sizes = [1, 1], strides = [1, 1]} : vector<13x32xf32> to vector<1x1xf32>
      %cst_14 = arith.constant dense<0.000000e+00> : vector<32xf32>
      %15 = vector.multi_reduction <add>, %11, %cst_14 [0] : vector<8x32xf32> to vector<32xf32>
      %16 = vector.shape_cast %15 : vector<32xf32> to vector<1x32xf32>
      %cst_15 = arith.constant dense<0.000000e+00> : vector<1xf32>
      %17 = vector.multi_reduction <add>, %16, %cst_15 [1] : vector<1x32xf32> to vector<1xf32>
      %18 = vector.shape_cast %17 : vector<1xf32> to vector<1x1xf32>
      %cst_16 = arith.constant 2.560000e+02 : f32
      %19 = vector.broadcast %cst_16 : f32 to vector<1x1xf32>
      %20 = arith.divf %18, %19 : vector<1x1xf32>
      %21 = vector.broadcast %20 : vector<1x1xf32> to vector<8x32xf32>
      %22 = arith.subf %11, %21 : vector<8x32xf32>
      %23 = arith.mulf %22, %22 : vector<8x32xf32>
      %cst_17 = arith.constant dense<0.000000e+00> : vector<32xf32>
      %24 = vector.multi_reduction <add>, %23, %cst_17 [0] : vector<8x32xf32> to vector<32xf32>
      %25 = vector.shape_cast %24 : vector<32xf32> to vector<1x32xf32>
      %cst_18 = arith.constant dense<0.000000e+00> : vector<1xf32>
      %26 = vector.multi_reduction <add>, %25, %cst_18 [1] : vector<1x32xf32> to vector<1xf32>
      %27 = vector.shape_cast %26 : vector<1xf32> to vector<1x1xf32>
      %cst_19 = arith.constant 2.560000e+02 : f32
      %28 = vector.broadcast %cst_19 : f32 to vector<1x1xf32>
      %29 = arith.divf %27, %28 : vector<1x1xf32>
      %cst_20 = arith.constant 9.99999974E-6 : f32
      %30 = vector.broadcast %cst_20 : f32 to vector<1x1xf32>
      %31 = arith.addf %29, %30 : vector<1x1xf32>
      %32 = math.rsqrt %31 : vector<1x1xf32>
      %33 = vector.broadcast %32 : vector<1x1xf32> to vector<8x32xf32>
      %34 = arith.mulf %22, %33 : vector<8x32xf32>
      %35 = vector.broadcast %13 : vector<1x1xf32> to vector<8x32xf32>
      %36 = arith.mulf %34, %35 : vector<8x32xf32>
      %37 = vector.broadcast %14 : vector<1x1xf32> to vector<8x32xf32>
      %38 = arith.addf %36, %37 : vector<8x32xf32>
      %39 = vector.extract_strided_slice %8 {offsets = [9, 1], sizes = [1, 1], strides = [1, 1]} : vector<13x32xf32> to vector<1x1xf32>
      %40 = vector.extract_strided_slice %8 {offsets = [9, 3], sizes = [1, 1], strides = [1, 1]} : vector<13x32xf32> to vector<1x1xf32>
      %cst_21 = arith.constant dense<0.000000e+00> : vector<32xf32>
      %41 = vector.multi_reduction <add>, %12, %cst_21 [0] : vector<8x32xf32> to vector<32xf32>
      %42 = vector.shape_cast %41 : vector<32xf32> to vector<1x32xf32>
      %cst_22 = arith.constant dense<0.000000e+00> : vector<1xf32>
      %43 = vector.multi_reduction <add>, %42, %cst_22 [1] : vector<1x32xf32> to vector<1xf32>
      %44 = vector.shape_cast %43 : vector<1xf32> to vector<1x1xf32>
      %cst_23 = arith.constant 2.560000e+02 : f32
      %45 = vector.broadcast %cst_23 : f32 to vector<1x1xf32>
      %46 = arith.divf %44, %45 : vector<1x1xf32>
      %47 = vector.broadcast %46 : vector<1x1xf32> to vector<8x32xf32>
      %48 = arith.subf %12, %47 : vector<8x32xf32>
      %49 = arith.mulf %48, %48 : vector<8x32xf32>
      %cst_24 = arith.constant dense<0.000000e+00> : vector<32xf32>
      %50 = vector.multi_reduction <add>, %49, %cst_24 [0] : vector<8x32xf32> to vector<32xf32>
      %51 = vector.shape_cast %50 : vector<32xf32> to vector<1x32xf32>
      %cst_25 = arith.constant dense<0.000000e+00> : vector<1xf32>
      %52 = vector.multi_reduction <add>, %51, %cst_25 [1] : vector<1x32xf32> to vector<1xf32>
      %53 = vector.shape_cast %52 : vector<1xf32> to vector<1x1xf32>
      %cst_26 = arith.constant 2.560000e+02 : f32
      %54 = vector.broadcast %cst_26 : f32 to vector<1x1xf32>
      %55 = arith.divf %53, %54 : vector<1x1xf32>
      %cst_27 = arith.constant 9.99999974E-6 : f32
      %56 = vector.broadcast %cst_27 : f32 to vector<1x1xf32>
      %57 = arith.addf %55, %56 : vector<1x1xf32>
      %58 = math.rsqrt %57 : vector<1x1xf32>
      %59 = vector.broadcast %58 : vector<1x1xf32> to vector<8x32xf32>
      %60 = arith.mulf %48, %59 : vector<8x32xf32>
      %61 = vector.broadcast %39 : vector<1x1xf32> to vector<8x32xf32>
      %62 = arith.mulf %60, %61 : vector<8x32xf32>
      %63 = vector.broadcast %40 : vector<1x1xf32> to vector<8x32xf32>
      %64 = arith.addf %62, %63 : vector<8x32xf32>
      %65 = tpu.iota {dimensions = array<i32: 1>} : vector<1x32xi32>
      %c0_i32_28 = arith.constant 0 : i32
      %66 = vector.broadcast %c0_i32_28 : i32 to vector<1x32xi32>
      %67 = arith.cmpi eq, %65, %66 : vector<1x32xi32>
      %c31_i32 = arith.constant 31 : i32
      %68 = vector.broadcast %c31_i32 : i32 to vector<1x32xi32>
      %69 = arith.cmpi eq, %65, %68 : vector<1x32xi32>
      %c1_i32 = arith.constant 1 : i32
      %70 = tpu.dynamic_rotate %38 by %c1_i32 dim 1 : vector<8x32xf32>, i32 -> vector<8x32xf32>
      %cst_29 = arith.constant 0.000000e+00 : f32
      %71 = vector.shape_cast %67 : vector<1x32xi1> to vector<1x32xi1>
      %72 = vector.broadcast %71 : vector<1x32xi1> to vector<8x32xi1>
      %73 = vector.broadcast %cst_29 : f32 to vector<8x32xf32>
      %74 = arith.select %72, %73, %70 : vector<8x32xi1>, vector<8x32xf32>
      %c31_i32_30 = arith.constant 31 : i32
      %75 = tpu.dynamic_rotate %38 by %c31_i32_30 dim 1 : vector<8x32xf32>, i32 -> vector<8x32xf32>
      %cst_31 = arith.constant 0.000000e+00 : f32
      %76 = vector.shape_cast %69 : vector<1x32xi1> to vector<1x32xi1>
      %77 = vector.broadcast %76 : vector<1x32xi1> to vector<8x32xi1>
      %78 = vector.broadcast %cst_31 : f32 to vector<8x32xf32>
      %79 = arith.select %77, %78, %75 : vector<8x32xi1>, vector<8x32xf32>
      %c1_i32_32 = arith.constant 1 : i32
      %80 = tpu.dynamic_rotate %64 by %c1_i32_32 dim 1 : vector<8x32xf32>, i32 -> vector<8x32xf32>
      %cst_33 = arith.constant 0.000000e+00 : f32
      %81 = vector.shape_cast %67 : vector<1x32xi1> to vector<1x32xi1>
      %82 = vector.broadcast %81 : vector<1x32xi1> to vector<8x32xi1>
      %83 = vector.broadcast %cst_33 : f32 to vector<8x32xf32>
      %84 = arith.select %82, %83, %80 : vector<8x32xi1>, vector<8x32xf32>
      %c31_i32_34 = arith.constant 31 : i32
      %85 = tpu.dynamic_rotate %64 by %c31_i32_34 dim 1 : vector<8x32xf32>, i32 -> vector<8x32xf32>
      %cst_35 = arith.constant 0.000000e+00 : f32
      %86 = vector.shape_cast %69 : vector<1x32xi1> to vector<1x32xi1>
      %87 = vector.broadcast %86 : vector<1x32xi1> to vector<8x32xi1>
      %88 = vector.broadcast %cst_35 : f32 to vector<8x32xf32>
      %89 = arith.select %87, %88, %85 : vector<8x32xi1>, vector<8x32xf32>
      %cst_36 = arith.constant 0.000000e+00 : f32
      %90 = vector.broadcast %cst_36 : f32 to vector<8x32xf32>
      %91 = vector.extract_strided_slice %8 {offsets = [10, 0], sizes = [1, 32], strides = [1, 1]} : vector<13x32xf32> to vector<1x32xf32>
      %92 = vector.broadcast %91 : vector<1x32xf32> to vector<8x32xf32>
      %93 = arith.addf %90, %92 : vector<8x32xf32>
      %94 = vector.extract_strided_slice %8 {offsets = [0, 0], sizes = [1, 1], strides = [1, 1]} : vector<13x32xf32> to vector<1x1xf32>
      %95 = vector.broadcast %94 : vector<1x1xf32> to vector<8x32xf32>
      %96 = arith.mulf %74, %95 : vector<8x32xf32>
      %97 = vector.extract_strided_slice %8 {offsets = [1, 0], sizes = [1, 1], strides = [1, 1]} : vector<13x32xf32> to vector<1x1xf32>
      %98 = vector.broadcast %97 : vector<1x1xf32> to vector<8x32xf32>
      %99 = arith.mulf %38, %98 : vector<8x32xf32>
      %100 = arith.addf %96, %99 : vector<8x32xf32>
      %101 = vector.extract_strided_slice %8 {offsets = [2, 0], sizes = [1, 1], strides = [1, 1]} : vector<13x32xf32> to vector<1x1xf32>
      %102 = vector.broadcast %101 : vector<1x1xf32> to vector<8x32xf32>
      %103 = arith.mulf %79, %102 : vector<8x32xf32>
      %104 = arith.addf %100, %103 : vector<8x32xf32>
      %105 = vector.extract_strided_slice %8 {offsets = [3, 0], sizes = [1, 1], strides = [1, 1]} : vector<13x32xf32> to vector<1x1xf32>
      %106 = vector.broadcast %105 : vector<1x1xf32> to vector<8x32xf32>
      %107 = arith.mulf %84, %106 : vector<8x32xf32>
      %108 = arith.addf %104, %107 : vector<8x32xf32>
      %109 = vector.extract_strided_slice %8 {offsets = [4, 0], sizes = [1, 1], strides = [1, 1]} : vector<13x32xf32> to vector<1x1xf32>
      %110 = vector.broadcast %109 : vector<1x1xf32> to vector<8x32xf32>
      %111 = arith.mulf %64, %110 : vector<8x32xf32>
      %112 = arith.addf %108, %111 : vector<8x32xf32>
      %113 = vector.extract_strided_slice %8 {offsets = [5, 0], sizes = [1, 1], strides = [1, 1]} : vector<13x32xf32> to vector<1x1xf32>
      %114 = vector.broadcast %113 : vector<1x1xf32> to vector<8x32xf32>
      %115 = arith.mulf %89, %114 : vector<8x32xf32>
      %116 = arith.addf %112, %115 : vector<8x32xf32>
      %117 = vector.extract_strided_slice %8 {offsets = [6, 0], sizes = [1, 1], strides = [1, 1]} : vector<13x32xf32> to vector<1x1xf32>
      %118 = vector.broadcast %117 : vector<1x1xf32> to vector<8x32xf32>
      %119 = arith.addf %116, %118 : vector<8x32xf32>
      %120 = vector.extract_strided_slice %8 {offsets = [7, 0], sizes = [1, 1], strides = [1, 1]} : vector<13x32xf32> to vector<1x1xf32>
      %121 = vector.extract_strided_slice %8 {offsets = [8, 0], sizes = [1, 1], strides = [1, 1]} : vector<13x32xf32> to vector<1x1xf32>
      %cst_37 = arith.constant dense<0.000000e+00> : vector<32xf32>
      %122 = vector.multi_reduction <add>, %119, %cst_37 [0] : vector<8x32xf32> to vector<32xf32>
      %123 = vector.shape_cast %122 : vector<32xf32> to vector<1x32xf32>
      %cst_38 = arith.constant dense<0.000000e+00> : vector<1xf32>
      %124 = vector.multi_reduction <add>, %123, %cst_38 [1] : vector<1x32xf32> to vector<1xf32>
      %125 = vector.shape_cast %124 : vector<1xf32> to vector<1x1xf32>
      %cst_39 = arith.constant 2.560000e+02 : f32
      %126 = vector.broadcast %cst_39 : f32 to vector<1x1xf32>
      %127 = arith.divf %125, %126 : vector<1x1xf32>
      %128 = vector.broadcast %127 : vector<1x1xf32> to vector<8x32xf32>
      %129 = arith.subf %119, %128 : vector<8x32xf32>
      %130 = arith.mulf %129, %129 : vector<8x32xf32>
      %cst_40 = arith.constant dense<0.000000e+00> : vector<32xf32>
      %131 = vector.multi_reduction <add>, %130, %cst_40 [0] : vector<8x32xf32> to vector<32xf32>
      %132 = vector.shape_cast %131 : vector<32xf32> to vector<1x32xf32>
      %cst_41 = arith.constant dense<0.000000e+00> : vector<1xf32>
      %133 = vector.multi_reduction <add>, %132, %cst_41 [1] : vector<1x32xf32> to vector<1xf32>
      %134 = vector.shape_cast %133 : vector<1xf32> to vector<1x1xf32>
      %cst_42 = arith.constant 2.560000e+02 : f32
      %135 = vector.broadcast %cst_42 : f32 to vector<1x1xf32>
      %136 = arith.divf %134, %135 : vector<1x1xf32>
      %cst_43 = arith.constant 9.99999974E-6 : f32
      %137 = vector.broadcast %cst_43 : f32 to vector<1x1xf32>
      %138 = arith.addf %136, %137 : vector<1x1xf32>
      %139 = math.rsqrt %138 : vector<1x1xf32>
      %140 = vector.broadcast %139 : vector<1x1xf32> to vector<8x32xf32>
      %141 = arith.mulf %129, %140 : vector<8x32xf32>
      %142 = vector.broadcast %120 : vector<1x1xf32> to vector<8x32xf32>
      %143 = arith.mulf %141, %142 : vector<8x32xf32>
      %144 = vector.broadcast %121 : vector<1x1xf32> to vector<8x32xf32>
      %145 = arith.addf %143, %144 : vector<8x32xf32>
      %cst_44 = arith.constant 0.000000e+00 : f32
      %146 = vector.broadcast %cst_44 : f32 to vector<8x32xf32>
      %147 = arith.maximumf %145, %146 : vector<8x32xf32>
      %c0_45 = arith.constant 0 : index
      %c0_46 = arith.constant 0 : index
      %c0_47 = arith.constant 0 : index
      %148 = vector.load %arg6[%c0_45, %c0_46, %c0_47] : memref<8x32x32xf32, #tpu.memory_space<vmem>>, vector<1x32x32xf32>
      %149 = vector.shape_cast %148 : vector<1x32x32xf32> to vector<32x32xf32>
      %cst_48 = arith.constant dense<0.000000e+00> : vector<8x32xf32>
      %150 = tpu.matmul %147, %149, %cst_48 {dimension_numbers = #tpu.dot_dimension_numbers<[1], [0], [0], [1], [0, 0, 1, 1], [], []>} : vector<8x32xf32>, vector<32x32xf32>, vector<8x32xf32> -> vector<8x32xf32>
      %151 = arith.addf %93, %150 : vector<8x32xf32>
      %152 = vector.extract_strided_slice %8 {offsets = [0, 1], sizes = [1, 1], strides = [1, 1]} : vector<13x32xf32> to vector<1x1xf32>
      %153 = vector.broadcast %152 : vector<1x1xf32> to vector<8x32xf32>
      %154 = arith.mulf %74, %153 : vector<8x32xf32>
      %155 = vector.extract_strided_slice %8 {offsets = [1, 1], sizes = [1, 1], strides = [1, 1]} : vector<13x32xf32> to vector<1x1xf32>
      %156 = vector.broadcast %155 : vector<1x1xf32> to vector<8x32xf32>
      %157 = arith.mulf %38, %156 : vector<8x32xf32>
      %158 = arith.addf %154, %157 : vector<8x32xf32>
      %159 = vector.extract_strided_slice %8 {offsets = [2, 1], sizes = [1, 1], strides = [1, 1]} : vector<13x32xf32> to vector<1x1xf32>
      %160 = vector.broadcast %159 : vector<1x1xf32> to vector<8x32xf32>
      %161 = arith.mulf %79, %160 : vector<8x32xf32>
      %162 = arith.addf %158, %161 : vector<8x32xf32>
      %163 = vector.extract_strided_slice %8 {offsets = [3, 1], sizes = [1, 1], strides = [1, 1]} : vector<13x32xf32> to vector<1x1xf32>
      %164 = vector.broadcast %163 : vector<1x1xf32> to vector<8x32xf32>
      %165 = arith.mulf %84, %164 : vector<8x32xf32>
      %166 = arith.addf %162, %165 : vector<8x32xf32>
      %167 = vector.extract_strided_slice %8 {offsets = [4, 1], sizes = [1, 1], strides = [1, 1]} : vector<13x32xf32> to vector<1x1xf32>
      %168 = vector.broadcast %167 : vector<1x1xf32> to vector<8x32xf32>
      %169 = arith.mulf %64, %168 : vector<8x32xf32>
      %170 = arith.addf %166, %169 : vector<8x32xf32>
      %171 = vector.extract_strided_slice %8 {offsets = [5, 1], sizes = [1, 1], strides = [1, 1]} : vector<13x32xf32> to vector<1x1xf32>
      %172 = vector.broadcast %171 : vector<1x1xf32> to vector<8x32xf32>
      %173 = arith.mulf %89, %172 : vector<8x32xf32>
      %174 = arith.addf %170, %173 : vector<8x32xf32>
      %175 = vector.extract_strided_slice %8 {offsets = [6, 1], sizes = [1, 1], strides = [1, 1]} : vector<13x32xf32> to vector<1x1xf32>
      %176 = vector.broadcast %175 : vector<1x1xf32> to vector<8x32xf32>
      %177 = arith.addf %174, %176 : vector<8x32xf32>
      %178 = vector.extract_strided_slice %8 {offsets = [7, 1], sizes = [1, 1], strides = [1, 1]} : vector<13x32xf32> to vector<1x1xf32>
      %179 = vector.extract_strided_slice %8 {offsets = [8, 1], sizes = [1, 1], strides = [1, 1]} : vector<13x32xf32> to vector<1x1xf32>
      %cst_49 = arith.constant dense<0.000000e+00> : vector<32xf32>
      %180 = vector.multi_reduction <add>, %177, %cst_49 [0] : vector<8x32xf32> to vector<32xf32>
      %181 = vector.shape_cast %180 : vector<32xf32> to vector<1x32xf32>
      %cst_50 = arith.constant dense<0.000000e+00> : vector<1xf32>
      %182 = vector.multi_reduction <add>, %181, %cst_50 [1] : vector<1x32xf32> to vector<1xf32>
      %183 = vector.shape_cast %182 : vector<1xf32> to vector<1x1xf32>
      %cst_51 = arith.constant 2.560000e+02 : f32
      %184 = vector.broadcast %cst_51 : f32 to vector<1x1xf32>
      %185 = arith.divf %183, %184 : vector<1x1xf32>
      %186 = vector.broadcast %185 : vector<1x1xf32> to vector<8x32xf32>
      %187 = arith.subf %177, %186 : vector<8x32xf32>
      %188 = arith.mulf %187, %187 : vector<8x32xf32>
      %cst_52 = arith.constant dense<0.000000e+00> : vector<32xf32>
      %189 = vector.multi_reduction <add>, %188, %cst_52 [0] : vector<8x32xf32> to vector<32xf32>
      %190 = vector.shape_cast %189 : vector<32xf32> to vector<1x32xf32>
      %cst_53 = arith.constant dense<0.000000e+00> : vector<1xf32>
      %191 = vector.multi_reduction <add>, %190, %cst_53 [1] : vector<1x32xf32> to vector<1xf32>
      %192 = vector.shape_cast %191 : vector<1xf32> to vector<1x1xf32>
      %cst_54 = arith.constant 2.560000e+02 : f32
      %193 = vector.broadcast %cst_54 : f32 to vector<1x1xf32>
      %194 = arith.divf %192, %193 : vector<1x1xf32>
      %cst_55 = arith.constant 9.99999974E-6 : f32
      %195 = vector.broadcast %cst_55 : f32 to vector<1x1xf32>
      %196 = arith.addf %194, %195 : vector<1x1xf32>
      %197 = math.rsqrt %196 : vector<1x1xf32>
      %198 = vector.broadcast %197 : vector<1x1xf32> to vector<8x32xf32>
      %199 = arith.mulf %187, %198 : vector<8x32xf32>
      %200 = vector.broadcast %178 : vector<1x1xf32> to vector<8x32xf32>
      %201 = arith.mulf %199, %200 : vector<8x32xf32>
      %202 = vector.broadcast %179 : vector<1x1xf32> to vector<8x32xf32>
      %203 = arith.addf %201, %202 : vector<8x32xf32>
      %cst_56 = arith.constant 0.000000e+00 : f32
      %204 = vector.broadcast %cst_56 : f32 to vector<8x32xf32>
      %205 = arith.maximumf %203, %204 : vector<8x32xf32>
      %c1 = arith.constant 1 : index
      %c0_57 = arith.constant 0 : index
      %c0_58 = arith.constant 0 : index
      %206 = vector.load %arg6[%c1, %c0_57, %c0_58] : memref<8x32x32xf32, #tpu.memory_space<vmem>>, vector<1x32x32xf32>
      %207 = vector.shape_cast %206 : vector<1x32x32xf32> to vector<32x32xf32>
      %cst_59 = arith.constant dense<0.000000e+00> : vector<8x32xf32>
      %208 = tpu.matmul %205, %207, %cst_59 {dimension_numbers = #tpu.dot_dimension_numbers<[1], [0], [0], [1], [0, 0, 1, 1], [], []>} : vector<8x32xf32>, vector<32x32xf32>, vector<8x32xf32> -> vector<8x32xf32>
      %209 = arith.addf %151, %208 : vector<8x32xf32>
      %210 = vector.extract_strided_slice %8 {offsets = [0, 2], sizes = [1, 1], strides = [1, 1]} : vector<13x32xf32> to vector<1x1xf32>
      %211 = vector.broadcast %210 : vector<1x1xf32> to vector<8x32xf32>
      %212 = arith.mulf %74, %211 : vector<8x32xf32>
      %213 = vector.extract_strided_slice %8 {offsets = [1, 2], sizes = [1, 1], strides = [1, 1]} : vector<13x32xf32> to vector<1x1xf32>
      %214 = vector.broadcast %213 : vector<1x1xf32> to vector<8x32xf32>
      %215 = arith.mulf %38, %214 : vector<8x32xf32>
      %216 = arith.addf %212, %215 : vector<8x32xf32>
      %217 = vector.extract_strided_slice %8 {offsets = [2, 2], sizes = [1, 1], strides = [1, 1]} : vector<13x32xf32> to vector<1x1xf32>
      %218 = vector.broadcast %217 : vector<1x1xf32> to vector<8x32xf32>
      %219 = arith.mulf %79, %218 : vector<8x32xf32>
      %220 = arith.addf %216, %219 : vector<8x32xf32>
      %221 = vector.extract_strided_slice %8 {offsets = [3, 2], sizes = [1, 1], strides = [1, 1]} : vector<13x32xf32> to vector<1x1xf32>
      %222 = vector.broadcast %221 : vector<1x1xf32> to vector<8x32xf32>
      %223 = arith.mulf %84, %222 : vector<8x32xf32>
      %224 = arith.addf %220, %223 : vector<8x32xf32>
      %225 = vector.extract_strided_slice %8 {offsets = [4, 2], sizes = [1, 1], strides = [1, 1]} : vector<13x32xf32> to vector<1x1xf32>
      %226 = vector.broadcast %225 : vector<1x1xf32> to vector<8x32xf32>
      %227 = arith.mulf %64, %226 : vector<8x32xf32>
      %228 = arith.addf %224, %227 : vector<8x32xf32>
      %229 = vector.extract_strided_slice %8 {offsets = [5, 2], sizes = [1, 1], strides = [1, 1]} : vector<13x32xf32> to vector<1x1xf32>
      %230 = vector.broadcast %229 : vector<1x1xf32> to vector<8x32xf32>
      %231 = arith.mulf %89, %230 : vector<8x32xf32>
      %232 = arith.addf %228, %231 : vector<8x32xf32>
      %233 = vector.extract_strided_slice %8 {offsets = [6, 2], sizes = [1, 1], strides = [1, 1]} : vector<13x32xf32> to vector<1x1xf32>
      %234 = vector.broadcast %233 : vector<1x1xf32> to vector<8x32xf32>
      %235 = arith.addf %232, %234 : vector<8x32xf32>
      %236 = vector.extract_strided_slice %8 {offsets = [7, 2], sizes = [1, 1], strides = [1, 1]} : vector<13x32xf32> to vector<1x1xf32>
      %237 = vector.extract_strided_slice %8 {offsets = [8, 2], sizes = [1, 1], strides = [1, 1]} : vector<13x32xf32> to vector<1x1xf32>
      %cst_60 = arith.constant dense<0.000000e+00> : vector<32xf32>
      %238 = vector.multi_reduction <add>, %235, %cst_60 [0] : vector<8x32xf32> to vector<32xf32>
      %239 = vector.shape_cast %238 : vector<32xf32> to vector<1x32xf32>
      %cst_61 = arith.constant dense<0.000000e+00> : vector<1xf32>
      %240 = vector.multi_reduction <add>, %239, %cst_61 [1] : vector<1x32xf32> to vector<1xf32>
      %241 = vector.shape_cast %240 : vector<1xf32> to vector<1x1xf32>
      %cst_62 = arith.constant 2.560000e+02 : f32
      %242 = vector.broadcast %cst_62 : f32 to vector<1x1xf32>
      %243 = arith.divf %241, %242 : vector<1x1xf32>
      %244 = vector.broadcast %243 : vector<1x1xf32> to vector<8x32xf32>
      %245 = arith.subf %235, %244 : vector<8x32xf32>
      %246 = arith.mulf %245, %245 : vector<8x32xf32>
      %cst_63 = arith.constant dense<0.000000e+00> : vector<32xf32>
      %247 = vector.multi_reduction <add>, %246, %cst_63 [0] : vector<8x32xf32> to vector<32xf32>
      %248 = vector.shape_cast %247 : vector<32xf32> to vector<1x32xf32>
      %cst_64 = arith.constant dense<0.000000e+00> : vector<1xf32>
      %249 = vector.multi_reduction <add>, %248, %cst_64 [1] : vector<1x32xf32> to vector<1xf32>
      %250 = vector.shape_cast %249 : vector<1xf32> to vector<1x1xf32>
      %cst_65 = arith.constant 2.560000e+02 : f32
      %251 = vector.broadcast %cst_65 : f32 to vector<1x1xf32>
      %252 = arith.divf %250, %251 : vector<1x1xf32>
      %cst_66 = arith.constant 9.99999974E-6 : f32
      %253 = vector.broadcast %cst_66 : f32 to vector<1x1xf32>
      %254 = arith.addf %252, %253 : vector<1x1xf32>
      %255 = math.rsqrt %254 : vector<1x1xf32>
      %256 = vector.broadcast %255 : vector<1x1xf32> to vector<8x32xf32>
      %257 = arith.mulf %245, %256 : vector<8x32xf32>
      %258 = vector.broadcast %236 : vector<1x1xf32> to vector<8x32xf32>
      %259 = arith.mulf %257, %258 : vector<8x32xf32>
      %260 = vector.broadcast %237 : vector<1x1xf32> to vector<8x32xf32>
      %261 = arith.addf %259, %260 : vector<8x32xf32>
      %cst_67 = arith.constant 0.000000e+00 : f32
      %262 = vector.broadcast %cst_67 : f32 to vector<8x32xf32>
      %263 = arith.maximumf %261, %262 : vector<8x32xf32>
      %c2 = arith.constant 2 : index
      %c0_68 = arith.constant 0 : index
      %c0_69 = arith.constant 0 : index
      %264 = vector.load %arg6[%c2, %c0_68, %c0_69] : memref<8x32x32xf32, #tpu.memory_space<vmem>>, vector<1x32x32xf32>
      %265 = vector.shape_cast %264 : vector<1x32x32xf32> to vector<32x32xf32>
      %cst_70 = arith.constant dense<0.000000e+00> : vector<8x32xf32>
      %266 = tpu.matmul %263, %265, %cst_70 {dimension_numbers = #tpu.dot_dimension_numbers<[1], [0], [0], [1], [0, 0, 1, 1], [], []>} : vector<8x32xf32>, vector<32x32xf32>, vector<8x32xf32> -> vector<8x32xf32>
      %267 = arith.addf %209, %266 : vector<8x32xf32>
      %268 = vector.extract_strided_slice %8 {offsets = [0, 3], sizes = [1, 1], strides = [1, 1]} : vector<13x32xf32> to vector<1x1xf32>
      %269 = vector.broadcast %268 : vector<1x1xf32> to vector<8x32xf32>
      %270 = arith.mulf %74, %269 : vector<8x32xf32>
      %271 = vector.extract_strided_slice %8 {offsets = [1, 3], sizes = [1, 1], strides = [1, 1]} : vector<13x32xf32> to vector<1x1xf32>
      %272 = vector.broadcast %271 : vector<1x1xf32> to vector<8x32xf32>
      %273 = arith.mulf %38, %272 : vector<8x32xf32>
      %274 = arith.addf %270, %273 : vector<8x32xf32>
      %275 = vector.extract_strided_slice %8 {offsets = [2, 3], sizes = [1, 1], strides = [1, 1]} : vector<13x32xf32> to vector<1x1xf32>
      %276 = vector.broadcast %275 : vector<1x1xf32> to vector<8x32xf32>
      %277 = arith.mulf %79, %276 : vector<8x32xf32>
      %278 = arith.addf %274, %277 : vector<8x32xf32>
      %279 = vector.extract_strided_slice %8 {offsets = [3, 3], sizes = [1, 1], strides = [1, 1]} : vector<13x32xf32> to vector<1x1xf32>
      %280 = vector.broadcast %279 : vector<1x1xf32> to vector<8x32xf32>
      %281 = arith.mulf %84, %280 : vector<8x32xf32>
      %282 = arith.addf %278, %281 : vector<8x32xf32>
      %283 = vector.extract_strided_slice %8 {offsets = [4, 3], sizes = [1, 1], strides = [1, 1]} : vector<13x32xf32> to vector<1x1xf32>
      %284 = vector.broadcast %283 : vector<1x1xf32> to vector<8x32xf32>
      %285 = arith.mulf %64, %284 : vector<8x32xf32>
      %286 = arith.addf %282, %285 : vector<8x32xf32>
      %287 = vector.extract_strided_slice %8 {offsets = [5, 3], sizes = [1, 1], strides = [1, 1]} : vector<13x32xf32> to vector<1x1xf32>
      %288 = vector.broadcast %287 : vector<1x1xf32> to vector<8x32xf32>
      %289 = arith.mulf %89, %288 : vector<8x32xf32>
      %290 = arith.addf %286, %289 : vector<8x32xf32>
      %291 = vector.extract_strided_slice %8 {offsets = [6, 3], sizes = [1, 1], strides = [1, 1]} : vector<13x32xf32> to vector<1x1xf32>
      %292 = vector.broadcast %291 : vector<1x1xf32> to vector<8x32xf32>
      %293 = arith.addf %290, %292 : vector<8x32xf32>
      %294 = vector.extract_strided_slice %8 {offsets = [7, 3], sizes = [1, 1], strides = [1, 1]} : vector<13x32xf32> to vector<1x1xf32>
      %295 = vector.extract_strided_slice %8 {offsets = [8, 3], sizes = [1, 1], strides = [1, 1]} : vector<13x32xf32> to vector<1x1xf32>
      %cst_71 = arith.constant dense<0.000000e+00> : vector<32xf32>
      %296 = vector.multi_reduction <add>, %293, %cst_71 [0] : vector<8x32xf32> to vector<32xf32>
      %297 = vector.shape_cast %296 : vector<32xf32> to vector<1x32xf32>
      %cst_72 = arith.constant dense<0.000000e+00> : vector<1xf32>
      %298 = vector.multi_reduction <add>, %297, %cst_72 [1] : vector<1x32xf32> to vector<1xf32>
      %299 = vector.shape_cast %298 : vector<1xf32> to vector<1x1xf32>
      %cst_73 = arith.constant 2.560000e+02 : f32
      %300 = vector.broadcast %cst_73 : f32 to vector<1x1xf32>
      %301 = arith.divf %299, %300 : vector<1x1xf32>
      %302 = vector.broadcast %301 : vector<1x1xf32> to vector<8x32xf32>
      %303 = arith.subf %293, %302 : vector<8x32xf32>
      %304 = arith.mulf %303, %303 : vector<8x32xf32>
      %cst_74 = arith.constant dense<0.000000e+00> : vector<32xf32>
      %305 = vector.multi_reduction <add>, %304, %cst_74 [0] : vector<8x32xf32> to vector<32xf32>
      %306 = vector.shape_cast %305 : vector<32xf32> to vector<1x32xf32>
      %cst_75 = arith.constant dense<0.000000e+00> : vector<1xf32>
      %307 = vector.multi_reduction <add>, %306, %cst_75 [1] : vector<1x32xf32> to vector<1xf32>
      %308 = vector.shape_cast %307 : vector<1xf32> to vector<1x1xf32>
      %cst_76 = arith.constant 2.560000e+02 : f32
      %309 = vector.broadcast %cst_76 : f32 to vector<1x1xf32>
      %310 = arith.divf %308, %309 : vector<1x1xf32>
      %cst_77 = arith.constant 9.99999974E-6 : f32
      %311 = vector.broadcast %cst_77 : f32 to vector<1x1xf32>
      %312 = arith.addf %310, %311 : vector<1x1xf32>
      %313 = math.rsqrt %312 : vector<1x1xf32>
      %314 = vector.broadcast %313 : vector<1x1xf32> to vector<8x32xf32>
      %315 = arith.mulf %303, %314 : vector<8x32xf32>
      %316 = vector.broadcast %294 : vector<1x1xf32> to vector<8x32xf32>
      %317 = arith.mulf %315, %316 : vector<8x32xf32>
      %318 = vector.broadcast %295 : vector<1x1xf32> to vector<8x32xf32>
      %319 = arith.addf %317, %318 : vector<8x32xf32>
      %cst_78 = arith.constant 0.000000e+00 : f32
      %320 = vector.broadcast %cst_78 : f32 to vector<8x32xf32>
      %321 = arith.maximumf %319, %320 : vector<8x32xf32>
      %c3 = arith.constant 3 : index
      %c0_79 = arith.constant 0 : index
      %c0_80 = arith.constant 0 : index
      %322 = vector.load %arg6[%c3, %c0_79, %c0_80] : memref<8x32x32xf32, #tpu.memory_space<vmem>>, vector<1x32x32xf32>
      %323 = vector.shape_cast %322 : vector<1x32x32xf32> to vector<32x32xf32>
      %cst_81 = arith.constant dense<0.000000e+00> : vector<8x32xf32>
      %324 = tpu.matmul %321, %323, %cst_81 {dimension_numbers = #tpu.dot_dimension_numbers<[1], [0], [0], [1], [0, 0, 1, 1], [], []>} : vector<8x32xf32>, vector<32x32xf32>, vector<8x32xf32> -> vector<8x32xf32>
      %325 = arith.addf %267, %324 : vector<8x32xf32>
      %326 = vector.extract_strided_slice %8 {offsets = [0, 4], sizes = [1, 1], strides = [1, 1]} : vector<13x32xf32> to vector<1x1xf32>
      %327 = vector.broadcast %326 : vector<1x1xf32> to vector<8x32xf32>
      %328 = arith.mulf %74, %327 : vector<8x32xf32>
      %329 = vector.extract_strided_slice %8 {offsets = [1, 4], sizes = [1, 1], strides = [1, 1]} : vector<13x32xf32> to vector<1x1xf32>
      %330 = vector.broadcast %329 : vector<1x1xf32> to vector<8x32xf32>
      %331 = arith.mulf %38, %330 : vector<8x32xf32>
      %332 = arith.addf %328, %331 : vector<8x32xf32>
      %333 = vector.extract_strided_slice %8 {offsets = [2, 4], sizes = [1, 1], strides = [1, 1]} : vector<13x32xf32> to vector<1x1xf32>
      %334 = vector.broadcast %333 : vector<1x1xf32> to vector<8x32xf32>
      %335 = arith.mulf %79, %334 : vector<8x32xf32>
      %336 = arith.addf %332, %335 : vector<8x32xf32>
      %337 = vector.extract_strided_slice %8 {offsets = [3, 4], sizes = [1, 1], strides = [1, 1]} : vector<13x32xf32> to vector<1x1xf32>
      %338 = vector.broadcast %337 : vector<1x1xf32> to vector<8x32xf32>
      %339 = arith.mulf %84, %338 : vector<8x32xf32>
      %340 = arith.addf %336, %339 : vector<8x32xf32>
      %341 = vector.extract_strided_slice %8 {offsets = [4, 4], sizes = [1, 1], strides = [1, 1]} : vector<13x32xf32> to vector<1x1xf32>
      %342 = vector.broadcast %341 : vector<1x1xf32> to vector<8x32xf32>
      %343 = arith.mulf %64, %342 : vector<8x32xf32>
      %344 = arith.addf %340, %343 : vector<8x32xf32>
      %345 = vector.extract_strided_slice %8 {offsets = [5, 4], sizes = [1, 1], strides = [1, 1]} : vector<13x32xf32> to vector<1x1xf32>
      %346 = vector.broadcast %345 : vector<1x1xf32> to vector<8x32xf32>
      %347 = arith.mulf %89, %346 : vector<8x32xf32>
      %348 = arith.addf %344, %347 : vector<8x32xf32>
      %349 = vector.extract_strided_slice %8 {offsets = [6, 4], sizes = [1, 1], strides = [1, 1]} : vector<13x32xf32> to vector<1x1xf32>
      %350 = vector.broadcast %349 : vector<1x1xf32> to vector<8x32xf32>
      %351 = arith.addf %348, %350 : vector<8x32xf32>
      %352 = vector.extract_strided_slice %8 {offsets = [7, 4], sizes = [1, 1], strides = [1, 1]} : vector<13x32xf32> to vector<1x1xf32>
      %353 = vector.extract_strided_slice %8 {offsets = [8, 4], sizes = [1, 1], strides = [1, 1]} : vector<13x32xf32> to vector<1x1xf32>
      %cst_82 = arith.constant dense<0.000000e+00> : vector<32xf32>
      %354 = vector.multi_reduction <add>, %351, %cst_82 [0] : vector<8x32xf32> to vector<32xf32>
      %355 = vector.shape_cast %354 : vector<32xf32> to vector<1x32xf32>
      %cst_83 = arith.constant dense<0.000000e+00> : vector<1xf32>
      %356 = vector.multi_reduction <add>, %355, %cst_83 [1] : vector<1x32xf32> to vector<1xf32>
      %357 = vector.shape_cast %356 : vector<1xf32> to vector<1x1xf32>
      %cst_84 = arith.constant 2.560000e+02 : f32
      %358 = vector.broadcast %cst_84 : f32 to vector<1x1xf32>
      %359 = arith.divf %357, %358 : vector<1x1xf32>
      %360 = vector.broadcast %359 : vector<1x1xf32> to vector<8x32xf32>
      %361 = arith.subf %351, %360 : vector<8x32xf32>
      %362 = arith.mulf %361, %361 : vector<8x32xf32>
      %cst_85 = arith.constant dense<0.000000e+00> : vector<32xf32>
      %363 = vector.multi_reduction <add>, %362, %cst_85 [0] : vector<8x32xf32> to vector<32xf32>
      %364 = vector.shape_cast %363 : vector<32xf32> to vector<1x32xf32>
      %cst_86 = arith.constant dense<0.000000e+00> : vector<1xf32>
      %365 = vector.multi_reduction <add>, %364, %cst_86 [1] : vector<1x32xf32> to vector<1xf32>
      %366 = vector.shape_cast %365 : vector<1xf32> to vector<1x1xf32>
      %cst_87 = arith.constant 2.560000e+02 : f32
      %367 = vector.broadcast %cst_87 : f32 to vector<1x1xf32>
      %368 = arith.divf %366, %367 : vector<1x1xf32>
      %cst_88 = arith.constant 9.99999974E-6 : f32
      %369 = vector.broadcast %cst_88 : f32 to vector<1x1xf32>
      %370 = arith.addf %368, %369 : vector<1x1xf32>
      %371 = math.rsqrt %370 : vector<1x1xf32>
      %372 = vector.broadcast %371 : vector<1x1xf32> to vector<8x32xf32>
      %373 = arith.mulf %361, %372 : vector<8x32xf32>
      %374 = vector.broadcast %352 : vector<1x1xf32> to vector<8x32xf32>
      %375 = arith.mulf %373, %374 : vector<8x32xf32>
      %376 = vector.broadcast %353 : vector<1x1xf32> to vector<8x32xf32>
      %377 = arith.addf %375, %376 : vector<8x32xf32>
      %cst_89 = arith.constant 0.000000e+00 : f32
      %378 = vector.broadcast %cst_89 : f32 to vector<8x32xf32>
      %379 = arith.maximumf %377, %378 : vector<8x32xf32>
      %c4 = arith.constant 4 : index
      %c0_90 = arith.constant 0 : index
      %c0_91 = arith.constant 0 : index
      %380 = vector.load %arg6[%c4, %c0_90, %c0_91] : memref<8x32x32xf32, #tpu.memory_space<vmem>>, vector<1x32x32xf32>
      %381 = vector.shape_cast %380 : vector<1x32x32xf32> to vector<32x32xf32>
      %cst_92 = arith.constant dense<0.000000e+00> : vector<8x32xf32>
      %382 = tpu.matmul %379, %381, %cst_92 {dimension_numbers = #tpu.dot_dimension_numbers<[1], [0], [0], [1], [0, 0, 1, 1], [], []>} : vector<8x32xf32>, vector<32x32xf32>, vector<8x32xf32> -> vector<8x32xf32>
      %383 = arith.addf %325, %382 : vector<8x32xf32>
      %384 = vector.extract_strided_slice %8 {offsets = [0, 5], sizes = [1, 1], strides = [1, 1]} : vector<13x32xf32> to vector<1x1xf32>
      %385 = vector.broadcast %384 : vector<1x1xf32> to vector<8x32xf32>
      %386 = arith.mulf %74, %385 : vector<8x32xf32>
      %387 = vector.extract_strided_slice %8 {offsets = [1, 5], sizes = [1, 1], strides = [1, 1]} : vector<13x32xf32> to vector<1x1xf32>
      %388 = vector.broadcast %387 : vector<1x1xf32> to vector<8x32xf32>
      %389 = arith.mulf %38, %388 : vector<8x32xf32>
      %390 = arith.addf %386, %389 : vector<8x32xf32>
      %391 = vector.extract_strided_slice %8 {offsets = [2, 5], sizes = [1, 1], strides = [1, 1]} : vector<13x32xf32> to vector<1x1xf32>
      %392 = vector.broadcast %391 : vector<1x1xf32> to vector<8x32xf32>
      %393 = arith.mulf %79, %392 : vector<8x32xf32>
      %394 = arith.addf %390, %393 : vector<8x32xf32>
      %395 = vector.extract_strided_slice %8 {offsets = [3, 5], sizes = [1, 1], strides = [1, 1]} : vector<13x32xf32> to vector<1x1xf32>
      %396 = vector.broadcast %395 : vector<1x1xf32> to vector<8x32xf32>
      %397 = arith.mulf %84, %396 : vector<8x32xf32>
      %398 = arith.addf %394, %397 : vector<8x32xf32>
      %399 = vector.extract_strided_slice %8 {offsets = [4, 5], sizes = [1, 1], strides = [1, 1]} : vector<13x32xf32> to vector<1x1xf32>
      %400 = vector.broadcast %399 : vector<1x1xf32> to vector<8x32xf32>
      %401 = arith.mulf %64, %400 : vector<8x32xf32>
      %402 = arith.addf %398, %401 : vector<8x32xf32>
      %403 = vector.extract_strided_slice %8 {offsets = [5, 5], sizes = [1, 1], strides = [1, 1]} : vector<13x32xf32> to vector<1x1xf32>
      %404 = vector.broadcast %403 : vector<1x1xf32> to vector<8x32xf32>
      %405 = arith.mulf %89, %404 : vector<8x32xf32>
      %406 = arith.addf %402, %405 : vector<8x32xf32>
      %407 = vector.extract_strided_slice %8 {offsets = [6, 5], sizes = [1, 1], strides = [1, 1]} : vector<13x32xf32> to vector<1x1xf32>
      %408 = vector.broadcast %407 : vector<1x1xf32> to vector<8x32xf32>
      %409 = arith.addf %406, %408 : vector<8x32xf32>
      %410 = vector.extract_strided_slice %8 {offsets = [7, 5], sizes = [1, 1], strides = [1, 1]} : vector<13x32xf32> to vector<1x1xf32>
      %411 = vector.extract_strided_slice %8 {offsets = [8, 5], sizes = [1, 1], strides = [1, 1]} : vector<13x32xf32> to vector<1x1xf32>
      %cst_93 = arith.constant dense<0.000000e+00> : vector<32xf32>
      %412 = vector.multi_reduction <add>, %409, %cst_93 [0] : vector<8x32xf32> to vector<32xf32>
      %413 = vector.shape_cast %412 : vector<32xf32> to vector<1x32xf32>
      %cst_94 = arith.constant dense<0.000000e+00> : vector<1xf32>
      %414 = vector.multi_reduction <add>, %413, %cst_94 [1] : vector<1x32xf32> to vector<1xf32>
      %415 = vector.shape_cast %414 : vector<1xf32> to vector<1x1xf32>
      %cst_95 = arith.constant 2.560000e+02 : f32
      %416 = vector.broadcast %cst_95 : f32 to vector<1x1xf32>
      %417 = arith.divf %415, %416 : vector<1x1xf32>
      %418 = vector.broadcast %417 : vector<1x1xf32> to vector<8x32xf32>
      %419 = arith.subf %409, %418 : vector<8x32xf32>
      %420 = arith.mulf %419, %419 : vector<8x32xf32>
      %cst_96 = arith.constant dense<0.000000e+00> : vector<32xf32>
      %421 = vector.multi_reduction <add>, %420, %cst_96 [0] : vector<8x32xf32> to vector<32xf32>
      %422 = vector.shape_cast %421 : vector<32xf32> to vector<1x32xf32>
      %cst_97 = arith.constant dense<0.000000e+00> : vector<1xf32>
      %423 = vector.multi_reduction <add>, %422, %cst_97 [1] : vector<1x32xf32> to vector<1xf32>
      %424 = vector.shape_cast %423 : vector<1xf32> to vector<1x1xf32>
      %cst_98 = arith.constant 2.560000e+02 : f32
      %425 = vector.broadcast %cst_98 : f32 to vector<1x1xf32>
      %426 = arith.divf %424, %425 : vector<1x1xf32>
      %cst_99 = arith.constant 9.99999974E-6 : f32
      %427 = vector.broadcast %cst_99 : f32 to vector<1x1xf32>
      %428 = arith.addf %426, %427 : vector<1x1xf32>
      %429 = math.rsqrt %428 : vector<1x1xf32>
      %430 = vector.broadcast %429 : vector<1x1xf32> to vector<8x32xf32>
      %431 = arith.mulf %419, %430 : vector<8x32xf32>
      %432 = vector.broadcast %410 : vector<1x1xf32> to vector<8x32xf32>
      %433 = arith.mulf %431, %432 : vector<8x32xf32>
      %434 = vector.broadcast %411 : vector<1x1xf32> to vector<8x32xf32>
      %435 = arith.addf %433, %434 : vector<8x32xf32>
      %cst_100 = arith.constant 0.000000e+00 : f32
      %436 = vector.broadcast %cst_100 : f32 to vector<8x32xf32>
      %437 = arith.maximumf %435, %436 : vector<8x32xf32>
      %c5 = arith.constant 5 : index
      %c0_101 = arith.constant 0 : index
      %c0_102 = arith.constant 0 : index
      %438 = vector.load %arg6[%c5, %c0_101, %c0_102] : memref<8x32x32xf32, #tpu.memory_space<vmem>>, vector<1x32x32xf32>
      %439 = vector.shape_cast %438 : vector<1x32x32xf32> to vector<32x32xf32>
      %cst_103 = arith.constant dense<0.000000e+00> : vector<8x32xf32>
      %440 = tpu.matmul %437, %439, %cst_103 {dimension_numbers = #tpu.dot_dimension_numbers<[1], [0], [0], [1], [0, 0, 1, 1], [], []>} : vector<8x32xf32>, vector<32x32xf32>, vector<8x32xf32> -> vector<8x32xf32>
      %441 = arith.addf %383, %440 : vector<8x32xf32>
      %442 = vector.extract_strided_slice %8 {offsets = [0, 6], sizes = [1, 1], strides = [1, 1]} : vector<13x32xf32> to vector<1x1xf32>
      %443 = vector.broadcast %442 : vector<1x1xf32> to vector<8x32xf32>
      %444 = arith.mulf %74, %443 : vector<8x32xf32>
      %445 = vector.extract_strided_slice %8 {offsets = [1, 6], sizes = [1, 1], strides = [1, 1]} : vector<13x32xf32> to vector<1x1xf32>
      %446 = vector.broadcast %445 : vector<1x1xf32> to vector<8x32xf32>
      %447 = arith.mulf %38, %446 : vector<8x32xf32>
      %448 = arith.addf %444, %447 : vector<8x32xf32>
      %449 = vector.extract_strided_slice %8 {offsets = [2, 6], sizes = [1, 1], strides = [1, 1]} : vector<13x32xf32> to vector<1x1xf32>
      %450 = vector.broadcast %449 : vector<1x1xf32> to vector<8x32xf32>
      %451 = arith.mulf %79, %450 : vector<8x32xf32>
      %452 = arith.addf %448, %451 : vector<8x32xf32>
      %453 = vector.extract_strided_slice %8 {offsets = [3, 6], sizes = [1, 1], strides = [1, 1]} : vector<13x32xf32> to vector<1x1xf32>
      %454 = vector.broadcast %453 : vector<1x1xf32> to vector<8x32xf32>
      %455 = arith.mulf %84, %454 : vector<8x32xf32>
      %456 = arith.addf %452, %455 : vector<8x32xf32>
      %457 = vector.extract_strided_slice %8 {offsets = [4, 6], sizes = [1, 1], strides = [1, 1]} : vector<13x32xf32> to vector<1x1xf32>
      %458 = vector.broadcast %457 : vector<1x1xf32> to vector<8x32xf32>
      %459 = arith.mulf %64, %458 : vector<8x32xf32>
      %460 = arith.addf %456, %459 : vector<8x32xf32>
      %461 = vector.extract_strided_slice %8 {offsets = [5, 6], sizes = [1, 1], strides = [1, 1]} : vector<13x32xf32> to vector<1x1xf32>
      %462 = vector.broadcast %461 : vector<1x1xf32> to vector<8x32xf32>
      %463 = arith.mulf %89, %462 : vector<8x32xf32>
      %464 = arith.addf %460, %463 : vector<8x32xf32>
      %465 = vector.extract_strided_slice %8 {offsets = [6, 6], sizes = [1, 1], strides = [1, 1]} : vector<13x32xf32> to vector<1x1xf32>
      %466 = vector.broadcast %465 : vector<1x1xf32> to vector<8x32xf32>
      %467 = arith.addf %464, %466 : vector<8x32xf32>
      %468 = vector.extract_strided_slice %8 {offsets = [7, 6], sizes = [1, 1], strides = [1, 1]} : vector<13x32xf32> to vector<1x1xf32>
      %469 = vector.extract_strided_slice %8 {offsets = [8, 6], sizes = [1, 1], strides = [1, 1]} : vector<13x32xf32> to vector<1x1xf32>
      %cst_104 = arith.constant dense<0.000000e+00> : vector<32xf32>
      %470 = vector.multi_reduction <add>, %467, %cst_104 [0] : vector<8x32xf32> to vector<32xf32>
      %471 = vector.shape_cast %470 : vector<32xf32> to vector<1x32xf32>
      %cst_105 = arith.constant dense<0.000000e+00> : vector<1xf32>
      %472 = vector.multi_reduction <add>, %471, %cst_105 [1] : vector<1x32xf32> to vector<1xf32>
      %473 = vector.shape_cast %472 : vector<1xf32> to vector<1x1xf32>
      %cst_106 = arith.constant 2.560000e+02 : f32
      %474 = vector.broadcast %cst_106 : f32 to vector<1x1xf32>
      %475 = arith.divf %473, %474 : vector<1x1xf32>
      %476 = vector.broadcast %475 : vector<1x1xf32> to vector<8x32xf32>
      %477 = arith.subf %467, %476 : vector<8x32xf32>
      %478 = arith.mulf %477, %477 : vector<8x32xf32>
      %cst_107 = arith.constant dense<0.000000e+00> : vector<32xf32>
      %479 = vector.multi_reduction <add>, %478, %cst_107 [0] : vector<8x32xf32> to vector<32xf32>
      %480 = vector.shape_cast %479 : vector<32xf32> to vector<1x32xf32>
      %cst_108 = arith.constant dense<0.000000e+00> : vector<1xf32>
      %481 = vector.multi_reduction <add>, %480, %cst_108 [1] : vector<1x32xf32> to vector<1xf32>
      %482 = vector.shape_cast %481 : vector<1xf32> to vector<1x1xf32>
      %cst_109 = arith.constant 2.560000e+02 : f32
      %483 = vector.broadcast %cst_109 : f32 to vector<1x1xf32>
      %484 = arith.divf %482, %483 : vector<1x1xf32>
      %cst_110 = arith.constant 9.99999974E-6 : f32
      %485 = vector.broadcast %cst_110 : f32 to vector<1x1xf32>
      %486 = arith.addf %484, %485 : vector<1x1xf32>
      %487 = math.rsqrt %486 : vector<1x1xf32>
      %488 = vector.broadcast %487 : vector<1x1xf32> to vector<8x32xf32>
      %489 = arith.mulf %477, %488 : vector<8x32xf32>
      %490 = vector.broadcast %468 : vector<1x1xf32> to vector<8x32xf32>
      %491 = arith.mulf %489, %490 : vector<8x32xf32>
      %492 = vector.broadcast %469 : vector<1x1xf32> to vector<8x32xf32>
      %493 = arith.addf %491, %492 : vector<8x32xf32>
      %cst_111 = arith.constant 0.000000e+00 : f32
      %494 = vector.broadcast %cst_111 : f32 to vector<8x32xf32>
      %495 = arith.maximumf %493, %494 : vector<8x32xf32>
      %c6 = arith.constant 6 : index
      %c0_112 = arith.constant 0 : index
      %c0_113 = arith.constant 0 : index
      %496 = vector.load %arg6[%c6, %c0_112, %c0_113] : memref<8x32x32xf32, #tpu.memory_space<vmem>>, vector<1x32x32xf32>
      %497 = vector.shape_cast %496 : vector<1x32x32xf32> to vector<32x32xf32>
      %cst_114 = arith.constant dense<0.000000e+00> : vector<8x32xf32>
      %498 = tpu.matmul %495, %497, %cst_114 {dimension_numbers = #tpu.dot_dimension_numbers<[1], [0], [0], [1], [0, 0, 1, 1], [], []>} : vector<8x32xf32>, vector<32x32xf32>, vector<8x32xf32> -> vector<8x32xf32>
      %499 = arith.addf %441, %498 : vector<8x32xf32>
      %500 = vector.extract_strided_slice %8 {offsets = [0, 7], sizes = [1, 1], strides = [1, 1]} : vector<13x32xf32> to vector<1x1xf32>
      %501 = vector.broadcast %500 : vector<1x1xf32> to vector<8x32xf32>
      %502 = arith.mulf %74, %501 : vector<8x32xf32>
      %503 = vector.extract_strided_slice %8 {offsets = [1, 7], sizes = [1, 1], strides = [1, 1]} : vector<13x32xf32> to vector<1x1xf32>
      %504 = vector.broadcast %503 : vector<1x1xf32> to vector<8x32xf32>
      %505 = arith.mulf %38, %504 : vector<8x32xf32>
      %506 = arith.addf %502, %505 : vector<8x32xf32>
      %507 = vector.extract_strided_slice %8 {offsets = [2, 7], sizes = [1, 1], strides = [1, 1]} : vector<13x32xf32> to vector<1x1xf32>
      %508 = vector.broadcast %507 : vector<1x1xf32> to vector<8x32xf32>
      %509 = arith.mulf %79, %508 : vector<8x32xf32>
      %510 = arith.addf %506, %509 : vector<8x32xf32>
      %511 = vector.extract_strided_slice %8 {offsets = [3, 7], sizes = [1, 1], strides = [1, 1]} : vector<13x32xf32> to vector<1x1xf32>
      %512 = vector.broadcast %511 : vector<1x1xf32> to vector<8x32xf32>
      %513 = arith.mulf %84, %512 : vector<8x32xf32>
      %514 = arith.addf %510, %513 : vector<8x32xf32>
      %515 = vector.extract_strided_slice %8 {offsets = [4, 7], sizes = [1, 1], strides = [1, 1]} : vector<13x32xf32> to vector<1x1xf32>
      %516 = vector.broadcast %515 : vector<1x1xf32> to vector<8x32xf32>
      %517 = arith.mulf %64, %516 : vector<8x32xf32>
      %518 = arith.addf %514, %517 : vector<8x32xf32>
      %519 = vector.extract_strided_slice %8 {offsets = [5, 7], sizes = [1, 1], strides = [1, 1]} : vector<13x32xf32> to vector<1x1xf32>
      %520 = vector.broadcast %519 : vector<1x1xf32> to vector<8x32xf32>
      %521 = arith.mulf %89, %520 : vector<8x32xf32>
      %522 = arith.addf %518, %521 : vector<8x32xf32>
      %523 = vector.extract_strided_slice %8 {offsets = [6, 7], sizes = [1, 1], strides = [1, 1]} : vector<13x32xf32> to vector<1x1xf32>
      %524 = vector.broadcast %523 : vector<1x1xf32> to vector<8x32xf32>
      %525 = arith.addf %522, %524 : vector<8x32xf32>
      %526 = vector.extract_strided_slice %8 {offsets = [7, 7], sizes = [1, 1], strides = [1, 1]} : vector<13x32xf32> to vector<1x1xf32>
      %527 = vector.extract_strided_slice %8 {offsets = [8, 7], sizes = [1, 1], strides = [1, 1]} : vector<13x32xf32> to vector<1x1xf32>
      %cst_115 = arith.constant dense<0.000000e+00> : vector<32xf32>
      %528 = vector.multi_reduction <add>, %525, %cst_115 [0] : vector<8x32xf32> to vector<32xf32>
      %529 = vector.shape_cast %528 : vector<32xf32> to vector<1x32xf32>
      %cst_116 = arith.constant dense<0.000000e+00> : vector<1xf32>
      %530 = vector.multi_reduction <add>, %529, %cst_116 [1] : vector<1x32xf32> to vector<1xf32>
      %531 = vector.shape_cast %530 : vector<1xf32> to vector<1x1xf32>
      %cst_117 = arith.constant 2.560000e+02 : f32
      %532 = vector.broadcast %cst_117 : f32 to vector<1x1xf32>
      %533 = arith.divf %531, %532 : vector<1x1xf32>
      %534 = vector.broadcast %533 : vector<1x1xf32> to vector<8x32xf32>
      %535 = arith.subf %525, %534 : vector<8x32xf32>
      %536 = arith.mulf %535, %535 : vector<8x32xf32>
      %cst_118 = arith.constant dense<0.000000e+00> : vector<32xf32>
      %537 = vector.multi_reduction <add>, %536, %cst_118 [0] : vector<8x32xf32> to vector<32xf32>
      %538 = vector.shape_cast %537 : vector<32xf32> to vector<1x32xf32>
      %cst_119 = arith.constant dense<0.000000e+00> : vector<1xf32>
      %539 = vector.multi_reduction <add>, %538, %cst_119 [1] : vector<1x32xf32> to vector<1xf32>
      %540 = vector.shape_cast %539 : vector<1xf32> to vector<1x1xf32>
      %cst_120 = arith.constant 2.560000e+02 : f32
      %541 = vector.broadcast %cst_120 : f32 to vector<1x1xf32>
      %542 = arith.divf %540, %541 : vector<1x1xf32>
      %cst_121 = arith.constant 9.99999974E-6 : f32
      %543 = vector.broadcast %cst_121 : f32 to vector<1x1xf32>
      %544 = arith.addf %542, %543 : vector<1x1xf32>
      %545 = math.rsqrt %544 : vector<1x1xf32>
      %546 = vector.broadcast %545 : vector<1x1xf32> to vector<8x32xf32>
      %547 = arith.mulf %535, %546 : vector<8x32xf32>
      %548 = vector.broadcast %526 : vector<1x1xf32> to vector<8x32xf32>
      %549 = arith.mulf %547, %548 : vector<8x32xf32>
      %550 = vector.broadcast %527 : vector<1x1xf32> to vector<8x32xf32>
      %551 = arith.addf %549, %550 : vector<8x32xf32>
      %cst_122 = arith.constant 0.000000e+00 : f32
      %552 = vector.broadcast %cst_122 : f32 to vector<8x32xf32>
      %553 = arith.maximumf %551, %552 : vector<8x32xf32>
      %c7 = arith.constant 7 : index
      %c0_123 = arith.constant 0 : index
      %c0_124 = arith.constant 0 : index
      %554 = vector.load %arg6[%c7, %c0_123, %c0_124] : memref<8x32x32xf32, #tpu.memory_space<vmem>>, vector<1x32x32xf32>
      %555 = vector.shape_cast %554 : vector<1x32x32xf32> to vector<32x32xf32>
      %cst_125 = arith.constant dense<0.000000e+00> : vector<8x32xf32>
      %556 = tpu.matmul %553, %555, %cst_125 {dimension_numbers = #tpu.dot_dimension_numbers<[1], [0], [0], [1], [0, 0, 1, 1], [], []>} : vector<8x32xf32>, vector<32x32xf32>, vector<8x32xf32> -> vector<8x32xf32>
      %557 = arith.addf %499, %556 : vector<8x32xf32>
      %558 = vector.extract_strided_slice %8 {offsets = [11, 0], sizes = [1, 32], strides = [1, 1]} : vector<13x32xf32> to vector<1x32xf32>
      %559 = vector.extract_strided_slice %8 {offsets = [12, 0], sizes = [1, 32], strides = [1, 1]} : vector<13x32xf32> to vector<1x32xf32>
      %cst_126 = arith.constant dense<0.000000e+00> : vector<32xf32>
      %560 = vector.multi_reduction <add>, %557, %cst_126 [0] : vector<8x32xf32> to vector<32xf32>
      %561 = vector.shape_cast %560 : vector<32xf32> to vector<1x32xf32>
      %cst_127 = arith.constant 8.000000e+00 : f32
      %562 = vector.broadcast %cst_127 : f32 to vector<1x32xf32>
      %563 = arith.divf %561, %562 : vector<1x32xf32>
      %564 = vector.broadcast %563 : vector<1x32xf32> to vector<8x32xf32>
      %565 = arith.subf %557, %564 : vector<8x32xf32>
      %566 = arith.mulf %565, %565 : vector<8x32xf32>
      %cst_128 = arith.constant dense<0.000000e+00> : vector<32xf32>
      %567 = vector.multi_reduction <add>, %566, %cst_128 [0] : vector<8x32xf32> to vector<32xf32>
      %568 = vector.shape_cast %567 : vector<32xf32> to vector<1x32xf32>
      %cst_129 = arith.constant 8.000000e+00 : f32
      %569 = vector.broadcast %cst_129 : f32 to vector<1x32xf32>
      %570 = arith.divf %568, %569 : vector<1x32xf32>
      %cst_130 = arith.constant 9.99999974E-6 : f32
      %571 = vector.broadcast %cst_130 : f32 to vector<1x32xf32>
      %572 = arith.addf %570, %571 : vector<1x32xf32>
      %573 = math.rsqrt %572 : vector<1x32xf32>
      %574 = vector.broadcast %573 : vector<1x32xf32> to vector<8x32xf32>
      %575 = arith.mulf %565, %574 : vector<8x32xf32>
      %576 = vector.broadcast %558 : vector<1x32xf32> to vector<8x32xf32>
      %577 = arith.mulf %575, %576 : vector<8x32xf32>
      %578 = vector.broadcast %559 : vector<1x32xf32> to vector<8x32xf32>
      %579 = arith.addf %577, %578 : vector<8x32xf32>
      %cst_131 = arith.constant 0.000000e+00 : f32
      %580 = vector.broadcast %cst_131 : f32 to vector<8x32xf32>
      %581 = arith.maximumf %579, %580 : vector<8x32xf32>
      %c0_132 = arith.constant 0 : index
      %c0_133 = arith.constant 0 : index
      %582 = vector.load %arg9[%c0_132, %c0_133] : memref<8x32xf32, #tpu.memory_space<vmem>>, vector<8x32xf32>
      tpu.vector_store %arg9[%c0_132, %c0_133], %581 {strides = array<i32>} : memref<8x32xf32, #tpu.memory_space<vmem>>, vector<8x32xf32>,
    } else {
    }
    %c0 = arith.constant 0 : index
    %c0_1 = arith.constant 0 : index
    %3 = vector.load %arg7[%c0, %c0_1] : memref<128x32xf32, #tpu.memory_space<vmem>>, vector<128x32xf32>
    %4 = math.tanh %3 : vector<128x32xf32>
    %c0_2 = arith.constant 0 : index
    %c0_3 = arith.constant 0 : index
    %5 = vector.load %arg9[%c0_2, %c0_3] : memref<8x32xf32, #tpu.memory_space<vmem>>, vector<8x32xf32>
    %cst = arith.constant dense<0.000000e+00> : vector<8x128xf32>
    %6 = tpu.matmul %5, %4, %cst {dimension_numbers = #tpu.dot_dimension_numbers<[1], [1], [0], [0], [0, 0, 1, 0], [], []>} : vector<8x32xf32>, vector<128x32xf32>, vector<8x128xf32> -> vector<8x128xf32>
    %c0_4 = arith.constant 0 : index
    %c0_5 = arith.constant 0 : index
    %7 = vector.load %arg8[%c0_4, %c0_5] : memref<8x128xf32, #tpu.memory_space<vmem>>, vector<8x128xf32>
    tpu.vector_store %arg8[%c0_4, %c0_5], %6 {strides = array<i32>} : memref<8x128xf32, #tpu.memory_space<vmem>>, vector<8x128xf32>,
    return
  }
  func.func @transform_0(%arg0: i32, %arg1: i32) -> (i32, i32) {
    %c0_i32 = arith.constant 0 : i32
    %c0_i32_0 = arith.constant 0 : i32
    %c0_i32_1 = arith.constant 0 : i32
    return %c0_i32, %c0_i32_0 : i32, i32
  }
  func.func @transform_1(%arg0: i32, %arg1: i32) -> (i32, i32) {
    %c0_i32 = arith.constant 0 : i32
    %c0_i32_0 = arith.constant 0 : i32
    %c0_i32_1 = arith.constant 0 : i32
    return %c0_i32, %c0_i32_0 : i32, i32
  }
  func.func @transform_2(%arg0: i32, %arg1: i32) -> (i32, i32) {
    %c0_i32 = arith.constant 0 : i32
    %c0_i32_0 = arith.constant 0 : i32
    %c0_i32_1 = arith.constant 0 : i32
    return %c0_i32, %c0_i32_0 : i32, i32
  }
  func.func @transform_3(%arg0: i32, %arg1: i32) -> (i32, i32) {
    %c0_i32 = arith.constant 0 : i32
    %c0_i32_0 = arith.constant 0 : i32
    %c0_i32_1 = arith.constant 0 : i32
    return %c0_i32, %c0_i32_0 : i32, i32
  }
  func.func @transform_4(%arg0: i32, %arg1: i32) -> (i32, i32, i32) {
    %c0_i32 = arith.constant 0 : i32
    %c0_i32_0 = arith.constant 0 : i32
    %c0_i32_1 = arith.constant 0 : i32
    %c0_i32_2 = arith.constant 0 : i32
    return %c0_i32, %c0_i32_0, %c0_i32_1 : i32, i32, i32
  }
  func.func @transform_5(%arg0: i32, %arg1: i32) -> (i32, i32) {
    %c1_i32 = arith.constant 1 : i32
    %0 = arith.muli %arg0, %c1_i32 : i32
    %1 = arith.addi %0, %arg1 : i32
    %c0_i32 = arith.constant 0 : i32
    %2 = arith.minsi %1, %c0_i32 : i32
    %c0_i32_0 = arith.constant 0 : i32
    %c0_i32_1 = arith.constant 0 : i32
    return %2, %c0_i32_0 : i32, i32
  }
  func.func @transform_6(%arg0: i32, %arg1: i32) -> (i32, i32) {
    %c1_i32 = arith.constant 1 : i32
    %0 = arith.muli %arg0, %c1_i32 : i32
    %1 = arith.addi %0, %arg1 : i32
    %c0_i32 = arith.constant 0 : i32
    %c0_i32_0 = arith.constant 0 : i32
    return %c0_i32, %1 : i32, i32
  }
}

</mosaic_0001>

<llo_original>
// kernel: tpu_custom_call.1
$region0: #{tpu_custom_call.1}
  #allocation0 [shape = 'u32[]', space=smem, size = 0x4, offset = 0x4, fixed_abs, tag = 'smem constant byte address 0x4 - core index']
  #allocation1 [shape = 'u32[72,128]{1,0:T(1,128)}', space=vmem, size = 0x9000, scoped, tag = 'internal scratch']
  #allocation2 [shape = 'f32[8,32]{1,0:T(8,128)}', space=vmem, size = 0x1000, scoped, tag = 'scratch operand']
  %s0 = inlined_call_operand.vmem [shape: f32[8,32], index: 0, kind: input, shape index: {}]
  %s1 = inlined_call_operand.vmem [shape: f32[8,32], index: 1, kind: input, shape index: {}]
  %s2 = inlined_call_operand.vmem [shape: f32[8,32], index: 2, kind: input, shape index: {}]
  %s3 = inlined_call_operand.vmem [shape: f32[13,32], index: 3, kind: input, shape index: {}]
  %s4 = inlined_call_operand.hbm [shape: f32[8,32,32], index: 4, kind: input, shape index: {}]
  %s5 = inlined_call_operand.vmem [shape: f32[128,32], index: 5, kind: input, shape index: {}]
  %s6 = inlined_call_operand.hbm [shape: f32[8,128], index: 6, kind: output, shape index: {}]
  %s7 = sld [smem:[#allocation0]]
  $region42: #{tpu_custom_call.1} parent=0
    _
  %s9 = ssub.s32 1, %s7
  %s10 = scalar_select 0, %s9, %s7
  $region1: #{tpu_custom_call.1} parent=0
    #allocation3 [shape = 'u8[131072]{0}', space=vmem, size = 0x20000, scoped, tag = 'input window, operand 4, single buffered']
    #allocation4 [shape = 's32[1]{0}', space=sflag, size = 0x4, scoped, tag = 'scoped memory for tpu_custom_call.1']
    #allocation5 [shape = 's32[1]{0}', space=sflag, size = 0x4, scoped, tag = 'scoped memory for tpu_custom_call.1']
    #allocation6 [shape = 'u8[4096]{0}', space=vmem, size = 0x1000, scoped, tag = 'output window, operand 0, single buffered']
    %11 = vsyncpa [#allocation4], 0
    %12 = vsyncpa [#allocation5], 0
    // Predicated region
    $region2: #{tpu_custom_call.1} parent=1 // pred_check
      _
    $region3: #{tpu_custom_call.1} parent=1 // pred_check_branch
      %14 = sbr.rel (0) target = $region5
    $region4: #{tpu_custom_call.1} parent=1 // pred_region
      _
    $region5: #{tpu_custom_call.1} parent=1 // pred_fallthru
      _
    // Predicated region
    $region6: #{tpu_custom_call.1} parent=1 // pred_check
      _
    $region7: #{tpu_custom_call.1} parent=1 // pred_check_branch
      %16 = sbr.rel (0) target = $region9
    $region8: #{tpu_custom_call.1} parent=1 // pred_region
      _
    $region9: #{tpu_custom_call.1} parent=1 // pred_fallthru
      _
    // Predicated region
    $region10: #{tpu_custom_call.1} parent=1 // pred_check
      _
    $region11: #{tpu_custom_call.1} parent=1 // pred_check_branch
      %18 = sbr.rel (0) target = $region13
    $region12: #{tpu_custom_call.1} parent=1 // pred_region
      _
    $region13: #{tpu_custom_call.1} parent=1 // pred_fallthru
      _
    // Predicated region
    $region14: #{tpu_custom_call.1} parent=1 // pred_check
      _
    $region15: #{tpu_custom_call.1} parent=1 // pred_check_branch
      %20 = sbr.rel (0) target = $region17
    $region16: #{tpu_custom_call.1} parent=1 // pred_region
      _
    $region17: #{tpu_custom_call.1} parent=1 // pred_fallthru
      _
    // Predicated region
    $region18: #{tpu_custom_call.1} parent=1 // pred_check
      _
    $region19: #{tpu_custom_call.1} parent=1 // pred_check_branch
      %22 = sbr.rel (0) target = $region21
    $region20: #{tpu_custom_call.1} parent=1 // pred_region
      %24 = vsyncadd [#allocation4], 0
      %s25 = sshll.u32 %s4, 4
      %s26 = int_to_ptr.hbm [resolvable:$true] %s25
      %s27 = sshll.u32 [#allocation3], 4
      %s28 = int_to_ptr.vmem [resolvable:$true] %s27
      %33 = dma.hbm_to_vmem [thread:$0]  %s26, 4096, %s28, [#allocation4], 128, 128, 8
    $region21: #{tpu_custom_call.1} parent=1 // pred_fallthru
      _
    // Predicated region
    $region22: #{tpu_custom_call.1} parent=1 // pred_check
      _
    $region23: #{tpu_custom_call.1} parent=1 // pred_check_branch
      %35 = sbr.rel (0) target = $region25
    $region24: #{tpu_custom_call.1} parent=1 // pred_region
      %s36 = sadd.s32 0, 0
      %p37 = scmp.lt.s32.totalorder %s36, 0
      %s38 = scalar_select %p37, %s36, 0
      %s39 = smul.u32 16, %s38
      %p40 = scmp.lt.s32.totalorder %s39, 15
      %s41 = scalar_select %p40, %s39, 15
      %s42 = smul.addr %s41, 8
      %s43 = scalar_lea.vmem %s5, %s42
      %s44 = sadd.s32 0, 0
      %p45 = scmp.lt.s32.totalorder %s44, 0
      %s46 = scalar_select %p45, %s44, 0
      %s47 = smul.u32 16, %s46
    $region25: #{tpu_custom_call.1} parent=1 // pred_fallthru
      _
    // Predicated region
    $region26: #{tpu_custom_call.1} parent=1 // pred_check
      _
    $region27: #{tpu_custom_call.1} parent=1 // pred_check_branch
      %49 = sbr.rel (0) target = $region29
    $region28: #{tpu_custom_call.1} parent=1 // pred_region
      %51 = dma.done [#allocation4], 4096
    $region29: #{tpu_custom_call.1} parent=1 // pred_fallthru
      _
    %s52 = sadd.s32 0, 0
    %p53 = scmp.lt.s32.totalorder %s52, 0
    %s54 = scalar_select %p53, %s52, 0
    %s55 = smul.u32 16, %s54
    %p56 = scmp.lt.s32.totalorder %s55, 15
    %s57 = scalar_select %p56, %s55, 15
    %s58 = smul.addr %s57, 8
    %s59 = scalar_lea.vmem %s5, %s58
    %s60 = sadd.s32 0, 0
    %p61 = scmp.lt.s32.totalorder %s60, 0
    %s62 = scalar_select %p61, %s60, 0
    %s63 = smul.u32 16, %s62
    %p64 = scmp.lt.s32.totalorder %s63, 15
    %s65 = scalar_select %p64, %s63, 15
    %s66 = smul.addr %s65, 8
    %s67 = scalar_lea.vmem %s5, %s66
    %s68 = sadd.s32 0, 0
    %p69 = scmp.lt.s32.totalorder %s68, 0
    %s70 = scalar_select %p69, %s68, 0
    %s71 = smul.u32 16, %s70
    %s72 = sadd.s32 0, 0
    %p73 = scmp.eq.s32.totalorder 0, 0
    // Predicated region
    $region30: #{tpu_custom_call.1} parent=1 // pred_check
      %p74 = pneg %p73
    $region31: #{tpu_custom_call.1} parent=1 // pred_check_branch
      %76 = sbr.rel (%p74) target = $region33
    $region32: #{tpu_custom_call.1} parent=1 // pred_region
      %v77 = vld [vmem:[%s3] sm:$0xff]
      %v78 = vld [vmem:[%s3 + $0x8] sm:$0x1f]
      %v79 = vld [vmem:[%s0] sm:$0xff]
      %v80 = vld [vmem:[%s1] sm:$0xff]
      %v81 = vadd.f32 %v79, %v80
      %v82 = vld [vmem:[%s2] sm:$0xff]
      %vm83 = vcmask 261120
      %v84 = vsel %vm83, %v81, 0.0
      %v85 = vrot.slane %v84, 4
      %v86 = vadd.f32 %v84, %v85
      %v87 = vrot.slane %v86, 2
      %v88 = vadd.f32 %v86, %v87
      %v89 = vrot.slane %v88, 1
      %v90 = vadd.f32 %v88, %v89
      %v91 = vsel %vm83, %v90, 0.0
      %92 = vadd.xlane.f32.xlu0 %v91
      %v93 = vpop.xlane.xlu0 %92
      %v94 = vrcp.pop 256.0
      %v95 = vmul.f32 256.0, %v94
      %v96 = vsub.f32 1.0, %v95
      %v97 = vmul.f32 %v94, %v96
      %v98 = vadd.f32 %v94, %v97
      %vm99 = vweird.f32 %v94
      %v100 = vsel %vm99, %v94, %v98
      %v101 = vmul.f32 %v93, %v100
      %v102 = vsub.f32 %v81, %v101
      %v103 = vmul.f32 %v102, %v102
      %v104 = vsel %vm83, %v103, 0.0
      %v105 = vrot.slane %v104, 4
      %v106 = vadd.f32 %v104, %v105
      %v107 = vrot.slane %v106, 2
      %v108 = vadd.f32 %v106, %v107
      %v109 = vrot.slane %v108, 1
      %v110 = vadd.f32 %v108, %v109
      %v111 = vsel %vm83, %v110, 0.0
      %112 = vadd.xlane.f32.xlu0 %v111
      %v113 = vpop.xlane.xlu0 %112
      %v114 = vmul.f32 %v113, %v100
      %v115 = vadd.f32 %v114, 1e-05
      %v116 = vrsqrt.pop %v115
      %v117 = vmul.f32 %v116, %v115
      %v118 = vmul.f32 %v117, %v116
      %v119 = vmul.f32 0.5, %v118
      %v120 = vsub.f32 1.5, %v119
      %v121 = vmul.f32 %v116, %v120
      %vm122 = vweird.f32 %v115
      %vm123 = vweird.f32 %v116
      %vm124 = vmor %vm122, %vm123
      %v125 = vsel %vm124, %v116, %v121
      %v126 = vmul.f32 %v102, %v125
      %v128 = vrot.slane %v78, 1
      %s129 = vtos %v128
      %v130 = vstv %s129
      %v132 = vmul.f32 %v126, %v130
      %133 = vrot.lane.b32.xlu0 %v128, 126
      %v134 = vpop.permute.xlu0 %133
      %s135 = vtos %v134
      %v136 = vstv %s135
      %v138 = vadd.f32 %v132, %v136
      %v139 = vsel %vm83, %v82, 0.0
      %v140 = vrot.slane %v139, 4
      %v141 = vadd.f32 %v139, %v140
      %v142 = vrot.slane %v141, 2
      %v143 = vadd.f32 %v141, %v142
      %v144 = vrot.slane %v143, 1
      %v145 = vadd.f32 %v143, %v144
      %v146 = vsel %vm83, %v145, 0.0
      %147 = vadd.xlane.f32.xlu0 %v146
      %v148 = vpop.xlane.xlu0 %147
      %v149 = vmul.f32 %v148, %v100
      %v150 = vsub.f32 %v82, %v149
      %v151 = vmul.f32 %v150, %v150
      %v152 = vsel %vm83, %v151, 0.0
      %v153 = vrot.slane %v152, 4
      %v154 = vadd.f32 %v152, %v153
      %v155 = vrot.slane %v154, 2
      %v156 = vadd.f32 %v154, %v155
      %v157 = vrot.slane %v156, 1
      %v158 = vadd.f32 %v156, %v157
      %v159 = vsel %vm83, %v158, 0.0
      %160 = vadd.xlane.f32.xlu0 %v159
      %v161 = vpop.xlane.xlu0 %160
      %v162 = vmul.f32 %v161, %v100
      %v163 = vadd.f32 %v162, 1e-05
      %v164 = vrsqrt.pop %v163
      %v165 = vmul.f32 %v164, %v163
      %v166 = vmul.f32 %v165, %v164
      %v167 = vmul.f32 0.5, %v166
      %v168 = vsub.f32 1.5, %v167
      %v169 = vmul.f32 %v164, %v168
      %vm170 = vweird.f32 %v163
      %vm171 = vweird.f32 %v164
      %vm172 = vmor %vm170, %vm171
      %v173 = vsel %vm172, %v164, %v169
      %v174 = vmul.f32 %v150, %v173
      %175 = vrot.lane.b32.xlu0 %v128, 127
      %v176 = vpop.permute.xlu0 %175
      %s177 = vtos %v176
      %v178 = vstv %s177
      %v180 = vmul.f32 %v174, %v178
      %181 = vrot.lane.b32.xlu0 %v128, 125
      %v182 = vpop.permute.xlu0 %181
      %s183 = vtos %v182
      %v184 = vstv %s183
      %v186 = vadd.f32 %v180, %v184
      %v187 = vlaneseq
      %v188 = vand.u32 %v187, 127
      %vm189 = vcmp.eq.s32.totalorder %v188, 0
      %vm190 = vcmp.eq.s32.totalorder %v188, 31
      %vm191 = vcmask 1047808
      %192 = vrot.lane.b32.xlu0 %v138, 32
      %v193 = vpop.permute.xlu0 %192
      %v194 = vsel %vm191, %v193, %v138
      %195 = vrot.lane.b32.xlu0 %v194, 32
      %v196 = vpop.permute.xlu0 %195
      %v197 = vsel %vm191, %v196, %v138
      %v198 = vsel %vm189, 1, 0
      %vm199 = vcmp.eq.s32.totalorder %v198, 1
      %201 = vrot.lane.b32.xlu0 %v197, 97
      %v202 = vpop.permute.xlu0 %201
      %v204 = vsel %vm199, 0.0, %v202
      %v205 = vsel %vm190, 1, 0
      %vm206 = vcmp.eq.s32.totalorder %v205, 1
      %207 = vrot.lane.b32.xlu0 %v197, 127
      %v208 = vpop.permute.xlu0 %207
      %v210 = vsel %vm206, 0.0, %v208
      %211 = vrot.lane.b32.xlu0 %v186, 32
      %v212 = vpop.permute.xlu0 %211
      %v213 = vsel %vm191, %v212, %v186
      %214 = vrot.lane.b32.xlu0 %v213, 32
      %v215 = vpop.permute.xlu0 %214
      %v216 = vsel %vm191, %v215, %v186
      %218 = vrot.lane.b32.xlu0 %v216, 97
      %v219 = vpop.permute.xlu0 %218
      %v221 = vsel %vm199, 0.0, %v219
      %222 = vrot.lane.b32.xlu0 %v216, 127
      %v223 = vpop.permute.xlu0 %222
      %v225 = vsel %vm206, 0.0, %v223
      %v226 = vperm.slane %v78, 2
      %v227 = vadd.f32 %v226, 0.0
      %s229 = vtos %v77
      %v230 = vstv %s229
      %v232 = vmul.f32 %v204, %v230
      %v233 = vrot.slane %v77, 1
      %s234 = vtos %v233
      %v235 = vstv %s234
      %v237 = vmul.f32 %v138, %v235
      %v238 = vadd.f32 %v232, %v237
      %v239 = vrot.slane %v77, 2
      %s240 = vtos %v239
      %v241 = vstv %s240
      %v243 = vmul.f32 %v210, %v241
      %v244 = vadd.f32 %v238, %v243
      %v245 = vrot.slane %v77, 3
      %s246 = vtos %v245
      %v247 = vstv %s246
      %v249 = vmul.f32 %v221, %v247
      %v250 = vadd.f32 %v244, %v249
      %v251 = vrot.slane %v77, 4
      %s252 = vtos %v251
      %v253 = vstv %s252
      %v255 = vmul.f32 %v186, %v253
      %v256 = vadd.f32 %v250, %v255
      %v257 = vrot.slane %v77, 5
      %s258 = vtos %v257
      %v259 = vstv %s258
      %v261 = vmul.f32 %v225, %v259
      %v262 = vadd.f32 %v256, %v261
      %v263 = vrot.slane %v77, 6
      %s264 = vtos %v263
      %v265 = vstv %s264
      %v267 = vadd.f32 %v262, %v265
      %v268 = vsel %vm83, %v267, 0.0
      %v269 = vrot.slane %v268, 4
      %v270 = vadd.f32 %v268, %v269
      %v271 = vrot.slane %v270, 2
      %v272 = vadd.f32 %v270, %v271
      %v273 = vrot.slane %v272, 1
      %v274 = vadd.f32 %v272, %v273
      %v275 = vsel %vm83, %v274, 0.0
      %276 = vadd.xlane.f32.xlu0 %v275
      %v277 = vpop.xlane.xlu0 %276
      %v278 = vmul.f32 %v277, %v100
      %v279 = vsub.f32 %v267, %v278
      %v280 = vmul.f32 %v279, %v279
      %v281 = vsel %vm83, %v280, 0.0
      %v282 = vrot.slane %v281, 4
      %v283 = vadd.f32 %v281, %v282
      %v284 = vrot.slane %v283, 2
      %v285 = vadd.f32 %v283, %v284
      %v286 = vrot.slane %v285, 1
      %v287 = vadd.f32 %v285, %v286
      %v288 = vsel %vm83, %v287, 0.0
      %289 = vadd.xlane.f32.xlu0 %v288
      %v290 = vpop.xlane.xlu0 %289
      %v291 = vmul.f32 %v290, %v100
      %v292 = vadd.f32 %v291, 1e-05
      %v293 = vrsqrt.pop %v292
      %v294 = vmul.f32 %v293, %v292
      %v295 = vmul.f32 %v294, %v293
      %v296 = vmul.f32 0.5, %v295
      %v297 = vsub.f32 1.5, %v296
      %v298 = vmul.f32 %v293, %v297
      %vm299 = vweird.f32 %v292
      %vm300 = vweird.f32 %v293
      %vm301 = vmor %vm299, %vm300
      %v302 = vsel %vm301, %v293, %v298
      %v303 = vmul.f32 %v279, %v302
      %v304 = vrot.slane %v77, 7
      %s305 = vtos %v304
      %v306 = vstv %s305
      %v308 = vmul.f32 %v303, %v306
      %s309 = vtos %v78
      %v310 = vstv %s309
      %v312 = vadd.f32 %v308, %v310
      %v313 = vmax.f32 %v312, 0.0
      %v314 = vld [vmem:[#allocation3] sm:$0xff]
      %v315 = vld [vmem:[#allocation3 + $0x8] sm:$0xff]
      %v316 = vld [vmem:[#allocation3 + $0x10] sm:$0xff]
      %v317 = vld [vmem:[#allocation3 + $0x18] sm:$0xff]
      %v319 = vsel %vm83, %v313, 0
      %321 = vmatpush.msra.mxu0 0.0
      %322 = vmatpush.msra.mxu0 0.0
      %323 = vmatpush.msra.mxu0 0.0
      %324 = vmatpush.msra.mxu0 0.0
      %325 = vmatpush.msra.mxu0 0.0
      %326 = vmatpush.msra.mxu0 0.0
      %327 = vmatpush.msra.mxu0 0.0
      %328 = vmatpush.msra.mxu0 0.0
      %329 = vmatpush.msra.mxu0 0.0
      %330 = vmatpush.msra.mxu0 0.0
      %331 = vmatpush.msra.mxu0 0.0
      %332 = vmatpush.msra.mxu0 0.0
      %333 = vmatpush.msra.mxu0 %v317
      %334 = vmatpush.msra.mxu0 %v316
      %335 = vmatpush.msra.mxu0 %v315
      %336 = vmatpush.msra.mxu0 %v314
      %337 = vmatmul.f32.gmra.mxu0 %v319
      %v338 = vpop.f32.mrf.mxu0
      %v339 = vadd.f32 0.0, %v338
      %340 = vdwg.mxu0
      %v341 = vadd.f32 %v227, %v339
      %342 = vrot.lane.b32.xlu0 %v77, 127
      %v343 = vpop.permute.xlu0 %342
      %s344 = vtos %v343
      %v345 = vstv %s344
      %v347 = vmul.f32 %v204, %v345
      %348 = vrot.lane.b32.xlu0 %v233, 127
      %v349 = vpop.permute.xlu0 %348
      %s350 = vtos %v349
      %v351 = vstv %s350
      %v353 = vmul.f32 %v138, %v351
      %v354 = vadd.f32 %v347, %v353
      %355 = vrot.lane.b32.xlu0 %v239, 127
      %v356 = vpop.permute.xlu0 %355
      %s357 = vtos %v356
      %v358 = vstv %s357
      %v360 = vmul.f32 %v210, %v358
      %v361 = vadd.f32 %v354, %v360
      %362 = vrot.lane.b32.xlu0 %v245, 127
      %v363 = vpop.permute.xlu0 %362
      %s364 = vtos %v363
      %v365 = vstv %s364
      %v367 = vmul.f32 %v221, %v365
      %v368 = vadd.f32 %v361, %v367
      %369 = vrot.lane.b32.xlu0 %v251, 127
      %v370 = vpop.permute.xlu0 %369
      %s371 = vtos %v370
      %v372 = vstv %s371
      %v374 = vmul.f32 %v186, %v372
      %v375 = vadd.f32 %v368, %v374
      %376 = vrot.lane.b32.xlu0 %v257, 127
      %v377 = vpop.permute.xlu0 %376
      %s378 = vtos %v377
      %v379 = vstv %s378
      %v381 = vmul.f32 %v225, %v379
      %v382 = vadd.f32 %v375, %v381
      %383 = vrot.lane.b32.xlu0 %v263, 127
      %v384 = vpop.permute.xlu0 %383
      %s385 = vtos %v384
      %v386 = vstv %s385
      %v388 = vadd.f32 %v382, %v386
      %v389 = vsel %vm83, %v388, 0.0
      %v390 = vrot.slane %v389, 4
      %v391 = vadd.f32 %v389, %v390
      %v392 = vrot.slane %v391, 2
      %v393 = vadd.f32 %v391, %v392
      %v394 = vrot.slane %v393, 1
      %v395 = vadd.f32 %v393, %v394
      %v396 = vsel %vm83, %v395, 0.0
      %397 = vadd.xlane.f32.xlu0 %v396
      %v398 = vpop.xlane.xlu0 %397
      %v399 = vmul.f32 %v398, %v100
      %v400 = vsub.f32 %v388, %v399
      %v401 = vmul.f32 %v400, %v400
      %v402 = vsel %vm83, %v401, 0.0
      %v403 = vrot.slane %v402, 4
      %v404 = vadd.f32 %v402, %v403
      %v405 = vrot.slane %v404, 2
      %v406 = vadd.f32 %v404, %v405
      %v407 = vrot.slane %v406, 1
      %v408 = vadd.f32 %v406, %v407
      %v409 = vsel %vm83, %v408, 0.0
      %410 = vadd.xlane.f32.xlu0 %v409
      %v411 = vpop.xlane.xlu0 %410
      %v412 = vmul.f32 %v411, %v100
      %v413 = vadd.f32 %v412, 1e-05
      %v414 = vrsqrt.pop %v413
      %v415 = vmul.f32 %v414, %v413
      %v416 = vmul.f32 %v415, %v414
      %v417 = vmul.f32 0.5, %v416
      %v418 = vsub.f32 1.5, %v417
      %v419 = vmul.f32 %v414, %v418
      %vm420 = vweird.f32 %v413
      %vm421 = vweird.f32 %v414
      %vm422 = vmor %vm420, %vm421
      %v423 = vsel %vm422, %v414, %v419
      %v424 = vmul.f32 %v400, %v423
      %425 = vrot.lane.b32.xlu0 %v304, 127
      %v426 = vpop.permute.xlu0 %425
      %s427 = vtos %v426
      %v428 = vstv %s427
      %v430 = vmul.f32 %v424, %v428
      %431 = vrot.lane.b32.xlu0 %v78, 127
      %v432 = vpop.permute.xlu0 %431
      %s433 = vtos %v432
      %v434 = vstv %s433
      %v436 = vadd.f32 %v430, %v434
      %v437 = vmax.f32 %v436, 0.0
      %s438 = scalar_lea.vmem [#allocation3], 32
      %v439 = vld [vmem:[%s438] sm:$0xff]
      %v440 = vld [vmem:[%s438 + $0x8] sm:$0xff]
      %v441 = vld [vmem:[%s438 + $0x10] sm:$0xff]
      %v442 = vld [vmem:[%s438 + $0x18] sm:$0xff]
      %v444 = vsel %vm83, %v437, 0
      %446 = vmatpush.msra.mxu0 0.0
      %447 = vmatpush.msra.mxu0 0.0
      %448 = vmatpush.msra.mxu0 0.0
      %449 = vmatpush.msra.mxu0 0.0
      %450 = vmatpush.msra.mxu0 0.0
      %451 = vmatpush.msra.mxu0 0.0
      %452 = vmatpush.msra.mxu0 0.0
      %453 = vmatpush.msra.mxu0 0.0
      %454 = vmatpush.msra.mxu0 0.0
      %455 = vmatpush.msra.mxu0 0.0
      %456 = vmatpush.msra.mxu0 0.0
      %457 = vmatpush.msra.mxu0 0.0
      %458 = vmatpush.msra.mxu0 %v442
      %459 = vmatpush.msra.mxu0 %v441
      %460 = vmatpush.msra.mxu0 %v440
      %461 = vmatpush.msra.mxu0 %v439
      %462 = vmatmul.f32.gmra.mxu0 %v444
      %v463 = vpop.f32.mrf.mxu0
      %v464 = vadd.f32 0.0, %v463
      %465 = vdwg.mxu0
      %v466 = vadd.f32 %v341, %v464
      %467 = vrot.lane.b32.xlu0 %v77, 126
      %v468 = vpop.permute.xlu0 %467
      %s469 = vtos %v468
      %v470 = vstv %s469
      %v472 = vmul.f32 %v204, %v470
      %473 = vrot.lane.b32.xlu0 %v233, 126
      %v474 = vpop.permute.xlu0 %473
      %s475 = vtos %v474
      %v476 = vstv %s475
      %v478 = vmul.f32 %v138, %v476
      %v479 = vadd.f32 %v472, %v478
      %480 = vrot.lane.b32.xlu0 %v239, 126
      %v481 = vpop.permute.xlu0 %480
      %s482 = vtos %v481
      %v483 = vstv %s482
      %v485 = vmul.f32 %v210, %v483
      %v486 = vadd.f32 %v479, %v485
      %487 = vrot.lane.b32.xlu0 %v245, 126
      %v488 = vpop.permute.xlu0 %487
      %s489 = vtos %v488
      %v490 = vstv %s489
      %v492 = vmul.f32 %v221, %v490
      %v493 = vadd.f32 %v486, %v492
      %494 = vrot.lane.b32.xlu0 %v251, 126
      %v495 = vpop.permute.xlu0 %494
      %s496 = vtos %v495
      %v497 = vstv %s496
      %v499 = vmul.f32 %v186, %v497
      %v500 = vadd.f32 %v493, %v499
      %501 = vrot.lane.b32.xlu0 %v257, 126
      %v502 = vpop.permute.xlu0 %501
      %s503 = vtos %v502
      %v504 = vstv %s503
      %v506 = vmul.f32 %v225, %v504
      %v507 = vadd.f32 %v500, %v506
      %508 = vrot.lane.b32.xlu0 %v263, 126
      %v509 = vpop.permute.xlu0 %508
      %s510 = vtos %v509
      %v511 = vstv %s510
      %v513 = vadd.f32 %v507, %v511
      %v514 = vsel %vm83, %v513, 0.0
      %v515 = vrot.slane %v514, 4
      %v516 = vadd.f32 %v514, %v515
      %v517 = vrot.slane %v516, 2
      %v518 = vadd.f32 %v516, %v517
      %v519 = vrot.slane %v518, 1
      %v520 = vadd.f32 %v518, %v519
      %v521 = vsel %vm83, %v520, 0.0
      %522 = vadd.xlane.f32.xlu0 %v521
      %v523 = vpop.xlane.xlu0 %522
      %v524 = vmul.f32 %v523, %v100
      %v525 = vsub.f32 %v513, %v524
      %v526 = vmul.f32 %v525, %v525
      %v527 = vsel %vm83, %v526, 0.0
      %v528 = vrot.slane %v527, 4
      %v529 = vadd.f32 %v527, %v528
      %v530 = vrot.slane %v529, 2
      %v531 = vadd.f32 %v529, %v530
      %v532 = vrot.slane %v531, 1
      %v533 = vadd.f32 %v531, %v532
      %v534 = vsel %vm83, %v533, 0.0
      %535 = vadd.xlane.f32.xlu0 %v534
      %v536 = vpop.xlane.xlu0 %535
      %v537 = vmul.f32 %v536, %v100
      %v538 = vadd.f32 %v537, 1e-05
      %v539 = vrsqrt.pop %v538
      %v540 = vmul.f32 %v539, %v538
      %v541 = vmul.f32 %v540, %v539
      %v542 = vmul.f32 0.5, %v541
      %v543 = vsub.f32 1.5, %v542
      %v544 = vmul.f32 %v539, %v543
      %vm545 = vweird.f32 %v538
      %vm546 = vweird.f32 %v539
      %vm547 = vmor %vm545, %vm546
      %v548 = vsel %vm547, %v539, %v544
      %v549 = vmul.f32 %v525, %v548
      %550 = vrot.lane.b32.xlu0 %v304, 126
      %v551 = vpop.permute.xlu0 %550
      %s552 = vtos %v551
      %v553 = vstv %s552
      %v555 = vmul.f32 %v549, %v553
      %556 = vrot.lane.b32.xlu0 %v78, 126
      %v557 = vpop.permute.xlu0 %556
      %s558 = vtos %v557
      %v559 = vstv %s558
      %v561 = vadd.f32 %v555, %v559
      %v562 = vmax.f32 %v561, 0.0
      %s563 = scalar_lea.vmem [#allocation3], 64
      %v564 = vld [vmem:[%s563] sm:$0xff]
      %v565 = vld [vmem:[%s563 + $0x8] sm:$0xff]
      %v566 = vld [vmem:[%s563 + $0x10] sm:$0xff]
      %v567 = vld [vmem:[%s563 + $0x18] sm:$0xff]
      %v569 = vsel %vm83, %v562, 0
      %571 = vmatpush.msra.mxu0 0.0
      %572 = vmatpush.msra.mxu0 0.0
      %573 = vmatpush.msra.mxu0 0.0
      %574 = vmatpush.msra.mxu0 0.0
      %575 = vmatpush.msra.mxu0 0.0
      %576 = vmatpush.msra.mxu0 0.0
      %577 = vmatpush.msra.mxu0 0.0
      %578 = vmatpush.msra.mxu0 0.0
      %579 = vmatpush.msra.mxu0 0.0
      %580 = vmatpush.msra.mxu0 0.0
      %581 = vmatpush.msra.mxu0 0.0
      %582 = vmatpush.msra.mxu0 0.0
      %583 = vmatpush.msra.mxu0 %v567
      %584 = vmatpush.msra.mxu0 %v566
      %585 = vmatpush.msra.mxu0 %v565
      %586 = vmatpush.msra.mxu0 %v564
      %587 = vmatmul.f32.gmra.mxu0 %v569
      %v588 = vpop.f32.mrf.mxu0
      %v589 = vadd.f32 0.0, %v588
      %590 = vdwg.mxu0
      %v591 = vadd.f32 %v466, %v589
      %592 = vrot.lane.b32.xlu0 %v77, 125
      %v593 = vpop.permute.xlu0 %592
      %s594 = vtos %v593
      %v595 = vstv %s594
      %v597 = vmul.f32 %v204, %v595
      %598 = vrot.lane.b32.xlu0 %v233, 125
      %v599 = vpop.permute.xlu0 %598
      %s600 = vtos %v599
      %v601 = vstv %s600
      %v603 = vmul.f32 %v138, %v601
      %v604 = vadd.f32 %v597, %v603
      %605 = vrot.lane.b32.xlu0 %v239, 125
      %v606 = vpop.permute.xlu0 %605
      %s607 = vtos %v606
      %v608 = vstv %s607
      %v610 = vmul.f32 %v210, %v608
      %v611 = vadd.f32 %v604, %v610
      %612 = vrot.lane.b32.xlu0 %v245, 125
      %v613 = vpop.permute.xlu0 %612
      %s614 = vtos %v613
      %v615 = vstv %s614
      %v617 = vmul.f32 %v221, %v615
      %v618 = vadd.f32 %v611, %v617
      %619 = vrot.lane.b32.xlu0 %v251, 125
      %v620 = vpop.permute.xlu0 %619
      %s621 = vtos %v620
      %v622 = vstv %s621
      %v624 = vmul.f32 %v186, %v622
      %v625 = vadd.f32 %v618, %v624
      %626 = vrot.lane.b32.xlu0 %v257, 125
      %v627 = vpop.permute.xlu0 %626
      %s628 = vtos %v627
      %v629 = vstv %s628
      %v631 = vmul.f32 %v225, %v629
      %v632 = vadd.f32 %v625, %v631
      %633 = vrot.lane.b32.xlu0 %v263, 125
      %v634 = vpop.permute.xlu0 %633
      %s635 = vtos %v634
      %v636 = vstv %s635
      %v638 = vadd.f32 %v632, %v636
      %v639 = vsel %vm83, %v638, 0.0
      %v640 = vrot.slane %v639, 4
      %v641 = vadd.f32 %v639, %v640
      %v642 = vrot.slane %v641, 2
      %v643 = vadd.f32 %v641, %v642
      %v644 = vrot.slane %v643, 1
      %v645 = vadd.f32 %v643, %v644
      %v646 = vsel %vm83, %v645, 0.0
      %647 = vadd.xlane.f32.xlu0 %v646
      %v648 = vpop.xlane.xlu0 %647
      %v649 = vmul.f32 %v648, %v100
      %v650 = vsub.f32 %v638, %v649
      %v651 = vmul.f32 %v650, %v650
      %v652 = vsel %vm83, %v651, 0.0
      %v653 = vrot.slane %v652, 4
      %v654 = vadd.f32 %v652, %v653
      %v655 = vrot.slane %v654, 2
      %v656 = vadd.f32 %v654, %v655
      %v657 = vrot.slane %v656, 1
      %v658 = vadd.f32 %v656, %v657
      %v659 = vsel %vm83, %v658, 0.0
      %660 = vadd.xlane.f32.xlu0 %v659
      %v661 = vpop.xlane.xlu0 %660
      %v662 = vmul.f32 %v661, %v100
      %v663 = vadd.f32 %v662, 1e-05
      %v664 = vrsqrt.pop %v663
      %v665 = vmul.f32 %v664, %v663
      %v666 = vmul.f32 %v665, %v664
      %v667 = vmul.f32 0.5, %v666
      %v668 = vsub.f32 1.5, %v667
      %v669 = vmul.f32 %v664, %v668
      %vm670 = vweird.f32 %v663
      %vm671 = vweird.f32 %v664
      %vm672 = vmor %vm670, %vm671
      %v673 = vsel %vm672, %v664, %v669
      %v674 = vmul.f32 %v650, %v673
      %675 = vrot.lane.b32.xlu0 %v304, 125
      %v676 = vpop.permute.xlu0 %675
      %s677 = vtos %v676
      %v678 = vstv %s677
      %v680 = vmul.f32 %v674, %v678
      %681 = vrot.lane.b32.xlu0 %v78, 125
      %v682 = vpop.permute.xlu0 %681
      %s683 = vtos %v682
      %v684 = vstv %s683
      %v686 = vadd.f32 %v680, %v684
      %v687 = vmax.f32 %v686, 0.0
      %s688 = scalar_lea.vmem [#allocation3], 96
      %v689 = vld [vmem:[%s688] sm:$0xff]
      %v690 = vld [vmem:[%s688 + $0x8] sm:$0xff]
      %v691 = vld [vmem:[%s688 + $0x10] sm:$0xff]
      %v692 = vld [vmem:[%s688 + $0x18] sm:$0xff]
      %v694 = vsel %vm83, %v687, 0
      %696 = vmatpush.msra.mxu0 0.0
      %697 = vmatpush.msra.mxu0 0.0
      %698 = vmatpush.msra.mxu0 0.0
      %699 = vmatpush.msra.mxu0 0.0
      %700 = vmatpush.msra.mxu0 0.0
      %701 = vmatpush.msra.mxu0 0.0
      %702 = vmatpush.msra.mxu0 0.0
      %703 = vmatpush.msra.mxu0 0.0
      %704 = vmatpush.msra.mxu0 0.0
      %705 = vmatpush.msra.mxu0 0.0
      %706 = vmatpush.msra.mxu0 0.0
      %707 = vmatpush.msra.mxu0 0.0
      %708 = vmatpush.msra.mxu0 %v692
      %709 = vmatpush.msra.mxu0 %v691
      %710 = vmatpush.msra.mxu0 %v690
      %711 = vmatpush.msra.mxu0 %v689
      %712 = vmatmul.f32.gmra.mxu0 %v694
      %v713 = vpop.f32.mrf.mxu0
      %v714 = vadd.f32 0.0, %v713
      %715 = vdwg.mxu0
      %v716 = vadd.f32 %v591, %v714
      %717 = vrot.lane.b32.xlu0 %v77, 124
      %v718 = vpop.permute.xlu0 %717
      %s719 = vtos %v718
      %v720 = vstv %s719
      %v722 = vmul.f32 %v204, %v720
      %723 = vrot.lane.b32.xlu0 %v233, 124
      %v724 = vpop.permute.xlu0 %723
      %s725 = vtos %v724
      %v726 = vstv %s725
      %v728 = vmul.f32 %v138, %v726
      %v729 = vadd.f32 %v722, %v728
      %730 = vrot.lane.b32.xlu0 %v239, 124
      %v731 = vpop.permute.xlu0 %730
      %s732 = vtos %v731
      %v733 = vstv %s732
      %v735 = vmul.f32 %v210, %v733
      %v736 = vadd.f32 %v729, %v735
      %737 = vrot.lane.b32.xlu0 %v245, 124
      %v738 = vpop.permute.xlu0 %737
      %s739 = vtos %v738
      %v740 = vstv %s739
      %v742 = vmul.f32 %v221, %v740
      %v743 = vadd.f32 %v736, %v742
      %744 = vrot.lane.b32.xlu0 %v251, 124
      %v745 = vpop.permute.xlu0 %744
      %s746 = vtos %v745
      %v747 = vstv %s746
      %v749 = vmul.f32 %v186, %v747
      %v750 = vadd.f32 %v743, %v749
      %751 = vrot.lane.b32.xlu0 %v257, 124
      %v752 = vpop.permute.xlu0 %751
      %s753 = vtos %v752
      %v754 = vstv %s753
      %v756 = vmul.f32 %v225, %v754
      %v757 = vadd.f32 %v750, %v756
      %758 = vrot.lane.b32.xlu0 %v263, 124
      %v759 = vpop.permute.xlu0 %758
      %s760 = vtos %v759
      %v761 = vstv %s760
      %v763 = vadd.f32 %v757, %v761
      %v764 = vsel %vm83, %v763, 0.0
      %v765 = vrot.slane %v764, 4
      %v766 = vadd.f32 %v764, %v765
      %v767 = vrot.slane %v766, 2
      %v768 = vadd.f32 %v766, %v767
      %v769 = vrot.slane %v768, 1
      %v770 = vadd.f32 %v768, %v769
      %v771 = vsel %vm83, %v770, 0.0
      %772 = vadd.xlane.f32.xlu0 %v771
      %v773 = vpop.xlane.xlu0 %772
      %v774 = vmul.f32 %v773, %v100
      %v775 = vsub.f32 %v763, %v774
      %v776 = vmul.f32 %v775, %v775
      %v777 = vsel %vm83, %v776, 0.0
      %v778 = vrot.slane %v777, 4
      %v779 = vadd.f32 %v777, %v778
      %v780 = vrot.slane %v779, 2
      %v781 = vadd.f32 %v779, %v780
      %v782 = vrot.slane %v781, 1
      %v783 = vadd.f32 %v781, %v782
      %v784 = vsel %vm83, %v783, 0.0
      %785 = vadd.xlane.f32.xlu0 %v784
      %v786 = vpop.xlane.xlu0 %785
      %v787 = vmul.f32 %v786, %v100
      %v788 = vadd.f32 %v787, 1e-05
      %v789 = vrsqrt.pop %v788
      %v790 = vmul.f32 %v789, %v788
      %v791 = vmul.f32 %v790, %v789
      %v792 = vmul.f32 0.5, %v791
      %v793 = vsub.f32 1.5, %v792
      %v794 = vmul.f32 %v789, %v793
      %vm795 = vweird.f32 %v788
      %vm796 = vweird.f32 %v789
      %vm797 = vmor %vm795, %vm796
      %v798 = vsel %vm797, %v789, %v794
      %v799 = vmul.f32 %v775, %v798
      %800 = vrot.lane.b32.xlu0 %v304, 124
      %v801 = vpop.permute.xlu0 %800
      %s802 = vtos %v801
      %v803 = vstv %s802
      %v805 = vmul.f32 %v799, %v803
      %806 = vrot.lane.b32.xlu0 %v78, 124
      %v807 = vpop.permute.xlu0 %806
      %s808 = vtos %v807
      %v809 = vstv %s808
      %v811 = vadd.f32 %v805, %v809
      %v812 = vmax.f32 %v811, 0.0
      %s813 = scalar_lea.vmem [#allocation3], 128
      %v814 = vld [vmem:[%s813] sm:$0xff]
      %v815 = vld [vmem:[%s813 + $0x8] sm:$0xff]
      %v816 = vld [vmem:[%s813 + $0x10] sm:$0xff]
      %v817 = vld [vmem:[%s813 + $0x18] sm:$0xff]
      %v819 = vsel %vm83, %v812, 0
      %821 = vmatpush.msra.mxu0 0.0
      %822 = vmatpush.msra.mxu0 0.0
      %823 = vmatpush.msra.mxu0 0.0
      %824 = vmatpush.msra.mxu0 0.0
      %825 = vmatpush.msra.mxu0 0.0
      %826 = vmatpush.msra.mxu0 0.0
      %827 = vmatpush.msra.mxu0 0.0
      %828 = vmatpush.msra.mxu0 0.0
      %829 = vmatpush.msra.mxu0 0.0
      %830 = vmatpush.msra.mxu0 0.0
      %831 = vmatpush.msra.mxu0 0.0
      %832 = vmatpush.msra.mxu0 0.0
      %833 = vmatpush.msra.mxu0 %v817
      %834 = vmatpush.msra.mxu0 %v816
      %835 = vmatpush.msra.mxu0 %v815
      %836 = vmatpush.msra.mxu0 %v814
      %837 = vmatmul.f32.gmra.mxu0 %v819
      %v838 = vpop.f32.mrf.mxu0
      %v839 = vadd.f32 0.0, %v838
      %840 = vdwg.mxu0
      %v841 = vadd.f32 %v716, %v839
      %842 = vrot.lane.b32.xlu0 %v77, 123
      %v843 = vpop.permute.xlu0 %842
      %s844 = vtos %v843
      %v845 = vstv %s844
      %v847 = vmul.f32 %v204, %v845
      %848 = vrot.lane.b32.xlu0 %v233, 123
      %v849 = vpop.permute.xlu0 %848
      %s850 = vtos %v849
      %v851 = vstv %s850
      %v853 = vmul.f32 %v138, %v851
      %v854 = vadd.f32 %v847, %v853
      %855 = vrot.lane.b32.xlu0 %v239, 123
      %v856 = vpop.permute.xlu0 %855
      %s857 = vtos %v856
      %v858 = vstv %s857
      %v860 = vmul.f32 %v210, %v858
      %v861 = vadd.f32 %v854, %v860
      %862 = vrot.lane.b32.xlu0 %v245, 123
      %v863 = vpop.permute.xlu0 %862
      %s864 = vtos %v863
      %v865 = vstv %s864
      %v867 = vmul.f32 %v221, %v865
      %v868 = vadd.f32 %v861, %v867
      %869 = vrot.lane.b32.xlu0 %v251, 123
      %v870 = vpop.permute.xlu0 %869
      %s871 = vtos %v870
      %v872 = vstv %s871
      %v874 = vmul.f32 %v186, %v872
      %v875 = vadd.f32 %v868, %v874
      %876 = vrot.lane.b32.xlu0 %v257, 123
      %v877 = vpop.permute.xlu0 %876
      %s878 = vtos %v877
      %v879 = vstv %s878
      %v881 = vmul.f32 %v225, %v879
      %v882 = vadd.f32 %v875, %v881
      %883 = vrot.lane.b32.xlu0 %v263, 123
      %v884 = vpop.permute.xlu0 %883
      %s885 = vtos %v884
      %v886 = vstv %s885
      %v888 = vadd.f32 %v882, %v886
      %v889 = vsel %vm83, %v888, 0.0
      %v890 = vrot.slane %v889, 4
      %v891 = vadd.f32 %v889, %v890
      %v892 = vrot.slane %v891, 2
      %v893 = vadd.f32 %v891, %v892
      %v894 = vrot.slane %v893, 1
      %v895 = vadd.f32 %v893, %v894
      %v896 = vsel %vm83, %v895, 0.0
      %897 = vadd.xlane.f32.xlu0 %v896
      %v898 = vpop.xlane.xlu0 %897
      %v899 = vmul.f32 %v898, %v100
      %v900 = vsub.f32 %v888, %v899
      %v901 = vmul.f32 %v900, %v900
      %v902 = vsel %vm83, %v901, 0.0
      %v903 = vrot.slane %v902, 4
      %v904 = vadd.f32 %v902, %v903
      %v905 = vrot.slane %v904, 2
      %v906 = vadd.f32 %v904, %v905
      %v907 = vrot.slane %v906, 1
      %v908 = vadd.f32 %v906, %v907
      %v909 = vsel %vm83, %v908, 0.0
      %910 = vadd.xlane.f32.xlu0 %v909
      %v911 = vpop.xlane.xlu0 %910
      %v912 = vmul.f32 %v911, %v100
      %v913 = vadd.f32 %v912, 1e-05
      %v914 = vrsqrt.pop %v913
      %v915 = vmul.f32 %v914, %v913
      %v916 = vmul.f32 %v915, %v914
      %v917 = vmul.f32 0.5, %v916
      %v918 = vsub.f32 1.5, %v917
      %v919 = vmul.f32 %v914, %v918
      %vm920 = vweird.f32 %v913
      %vm921 = vweird.f32 %v914
      %vm922 = vmor %vm920, %vm921
      %v923 = vsel %vm922, %v914, %v919
      %v924 = vmul.f32 %v900, %v923
      %925 = vrot.lane.b32.xlu0 %v304, 123
      %v926 = vpop.permute.xlu0 %925
      %s927 = vtos %v926
      %v928 = vstv %s927
      %v930 = vmul.f32 %v924, %v928
      %931 = vrot.lane.b32.xlu0 %v78, 123
      %v932 = vpop.permute.xlu0 %931
      %s933 = vtos %v932
      %v934 = vstv %s933
      %v936 = vadd.f32 %v930, %v934
      %v937 = vmax.f32 %v936, 0.0
      %s938 = scalar_lea.vmem [#allocation3], 160
      %v939 = vld [vmem:[%s938] sm:$0xff]
      %v940 = vld [vmem:[%s938 + $0x8] sm:$0xff]
      %v941 = vld [vmem:[%s938 + $0x10] sm:$0xff]
      %v942 = vld [vmem:[%s938 + $0x18] sm:$0xff]
      %v944 = vsel %vm83, %v937, 0
      %946 = vmatpush.msra.mxu0 0.0
      %947 = vmatpush.msra.mxu0 0.0
      %948 = vmatpush.msra.mxu0 0.0
      %949 = vmatpush.msra.mxu0 0.0
      %950 = vmatpush.msra.mxu0 0.0
      %951 = vmatpush.msra.mxu0 0.0
      %952 = vmatpush.msra.mxu0 0.0
      %953 = vmatpush.msra.mxu0 0.0
      %954 = vmatpush.msra.mxu0 0.0
      %955 = vmatpush.msra.mxu0 0.0
      %956 = vmatpush.msra.mxu0 0.0
      %957 = vmatpush.msra.mxu0 0.0
      %958 = vmatpush.msra.mxu0 %v942
      %959 = vmatpush.msra.mxu0 %v941
      %960 = vmatpush.msra.mxu0 %v940
      %961 = vmatpush.msra.mxu0 %v939
      %962 = vmatmul.f32.gmra.mxu0 %v944
      %v963 = vpop.f32.mrf.mxu0
      %v964 = vadd.f32 0.0, %v963
      %965 = vdwg.mxu0
      %v966 = vadd.f32 %v841, %v964
      %967 = vrot.lane.b32.xlu0 %v77, 122
      %v968 = vpop.permute.xlu0 %967
      %s969 = vtos %v968
      %v970 = vstv %s969
      %v972 = vmul.f32 %v204, %v970
      %973 = vrot.lane.b32.xlu0 %v233, 122
      %v974 = vpop.permute.xlu0 %973
      %s975 = vtos %v974
      %v976 = vstv %s975
      %v978 = vmul.f32 %v138, %v976
      %v979 = vadd.f32 %v972, %v978
      %980 = vrot.lane.b32.xlu0 %v239, 122
      %v981 = vpop.permute.xlu0 %980
      %s982 = vtos %v981
      %v983 = vstv %s982
      %v985 = vmul.f32 %v210, %v983
      %v986 = vadd.f32 %v979, %v985
      %987 = vrot.lane.b32.xlu0 %v245, 122
      %v988 = vpop.permute.xlu0 %987
      %s989 = vtos %v988
      %v990 = vstv %s989
      %v992 = vmul.f32 %v221, %v990
      %v993 = vadd.f32 %v986, %v992
      %994 = vrot.lane.b32.xlu0 %v251, 122
      %v995 = vpop.permute.xlu0 %994
      %s996 = vtos %v995
      %v997 = vstv %s996
      %v999 = vmul.f32 %v186, %v997
      %v1000 = vadd.f32 %v993, %v999
      %1001 = vrot.lane.b32.xlu0 %v257, 122
      %v1002 = vpop.permute.xlu0 %1001
      %s1003 = vtos %v1002
      %v1004 = vstv %s1003
      %v1006 = vmul.f32 %v225, %v1004
      %v1007 = vadd.f32 %v1000, %v1006
      %1008 = vrot.lane.b32.xlu0 %v263, 122
      %v1009 = vpop.permute.xlu0 %1008
      %s1010 = vtos %v1009
      %v1011 = vstv %s1010
      %v1013 = vadd.f32 %v1007, %v1011
      %v1014 = vsel %vm83, %v1013, 0.0
      %v1015 = vrot.slane %v1014, 4
      %v1016 = vadd.f32 %v1014, %v1015
      %v1017 = vrot.slane %v1016, 2
      %v1018 = vadd.f32 %v1016, %v1017
      %v1019 = vrot.slane %v1018, 1
      %v1020 = vadd.f32 %v1018, %v1019
      %v1021 = vsel %vm83, %v1020, 0.0
      %1022 = vadd.xlane.f32.xlu0 %v1021
      %v1023 = vpop.xlane.xlu0 %1022
      %v1024 = vmul.f32 %v1023, %v100
      %v1025 = vsub.f32 %v1013, %v1024
      %v1026 = vmul.f32 %v1025, %v1025
      %v1027 = vsel %vm83, %v1026, 0.0
      %v1028 = vrot.slane %v1027, 4
      %v1029 = vadd.f32 %v1027, %v1028
      %v1030 = vrot.slane %v1029, 2
      %v1031 = vadd.f32 %v1029, %v1030
      %v1032 = vrot.slane %v1031, 1
      %v1033 = vadd.f32 %v1031, %v1032
      %v1034 = vsel %vm83, %v1033, 0.0
      %1035 = vadd.xlane.f32.xlu0 %v1034
      %v1036 = vpop.xlane.xlu0 %1035
      %v1037 = vmul.f32 %v1036, %v100
      %v1038 = vadd.f32 %v1037, 1e-05
      %v1039 = vrsqrt.pop %v1038
      %v1040 = vmul.f32 %v1039, %v1038
      %v1041 = vmul.f32 %v1040, %v1039
      %v1042 = vmul.f32 0.5, %v1041
      %v1043 = vsub.f32 1.5, %v1042
      %v1044 = vmul.f32 %v1039, %v1043
      %vm1045 = vweird.f32 %v1038
      %vm1046 = vweird.f32 %v1039
      %vm1047 = vmor %vm1045, %vm1046
      %v1048 = vsel %vm1047, %v1039, %v1044
      %v1049 = vmul.f32 %v1025, %v1048
      %1050 = vrot.lane.b32.xlu0 %v304, 122
      %v1051 = vpop.permute.xlu0 %1050
      %s1052 = vtos %v1051
      %v1053 = vstv %s1052
      %v1055 = vmul.f32 %v1049, %v1053
      %1056 = vrot.lane.b32.xlu0 %v78, 122
      %v1057 = vpop.permute.xlu0 %1056
      %s1058 = vtos %v1057
      %v1059 = vstv %s1058
      %v1061 = vadd.f32 %v1055, %v1059
      %v1062 = vmax.f32 %v1061, 0.0
      %s1063 = scalar_lea.vmem [#allocation3], 192
      %v1064 = vld [vmem:[%s1063] sm:$0xff]
      %v1065 = vld [vmem:[%s1063 + $0x8] sm:$0xff]
      %v1066 = vld [vmem:[%s1063 + $0x10] sm:$0xff]
      %v1067 = vld [vmem:[%s1063 + $0x18] sm:$0xff]
      %v1069 = vsel %vm83, %v1062, 0
      %1071 = vmatpush.msra.mxu0 0.0
      %1072 = vmatpush.msra.mxu0 0.0
      %1073 = vmatpush.msra.mxu0 0.0
      %1074 = vmatpush.msra.mxu0 0.0
      %1075 = vmatpush.msra.mxu0 0.0
      %1076 = vmatpush.msra.mxu0 0.0
      %1077 = vmatpush.msra.mxu0 0.0
      %1078 = vmatpush.msra.mxu0 0.0
      %1079 = vmatpush.msra.mxu0 0.0
      %1080 = vmatpush.msra.mxu0 0.0
      %1081 = vmatpush.msra.mxu0 0.0
      %1082 = vmatpush.msra.mxu0 0.0
      %1083 = vmatpush.msra.mxu0 %v1067
      %1084 = vmatpush.msra.mxu0 %v1066
      %1085 = vmatpush.msra.mxu0 %v1065
      %1086 = vmatpush.msra.mxu0 %v1064
      %1087 = vmatmul.f32.gmra.mxu0 %v1069
      %v1088 = vpop.f32.mrf.mxu0
      %v1089 = vadd.f32 0.0, %v1088
      %1090 = vdwg.mxu0
      %v1091 = vadd.f32 %v966, %v1089
      %1092 = vrot.lane.b32.xlu0 %v77, 121
      %v1093 = vpop.permute.xlu0 %1092
      %s1094 = vtos %v1093
      %v1095 = vstv %s1094
      %v1097 = vmul.f32 %v204, %v1095
      %1098 = vrot.lane.b32.xlu0 %v233, 121
      %v1099 = vpop.permute.xlu0 %1098
      %s1100 = vtos %v1099
      %v1101 = vstv %s1100
      %v1103 = vmul.f32 %v138, %v1101
      %v1104 = vadd.f32 %v1097, %v1103
      %1105 = vrot.lane.b32.xlu0 %v239, 121
      %v1106 = vpop.permute.xlu0 %1105
      %s1107 = vtos %v1106
      %v1108 = vstv %s1107
      %v1110 = vmul.f32 %v210, %v1108
      %v1111 = vadd.f32 %v1104, %v1110
      %1112 = vrot.lane.b32.xlu0 %v245, 121
      %v1113 = vpop.permute.xlu0 %1112
      %s1114 = vtos %v1113
      %v1115 = vstv %s1114
      %v1117 = vmul.f32 %v221, %v1115
      %v1118 = vadd.f32 %v1111, %v1117
      %1119 = vrot.lane.b32.xlu0 %v251, 121
      %v1120 = vpop.permute.xlu0 %1119
      %s1121 = vtos %v1120
      %v1122 = vstv %s1121
      %v1124 = vmul.f32 %v186, %v1122
      %v1125 = vadd.f32 %v1118, %v1124
      %1126 = vrot.lane.b32.xlu0 %v257, 121
      %v1127 = vpop.permute.xlu0 %1126
      %s1128 = vtos %v1127
      %v1129 = vstv %s1128
      %v1131 = vmul.f32 %v225, %v1129
      %v1132 = vadd.f32 %v1125, %v1131
      %1133 = vrot.lane.b32.xlu0 %v263, 121
      %v1134 = vpop.permute.xlu0 %1133
      %s1135 = vtos %v1134
      %v1136 = vstv %s1135
      %v1138 = vadd.f32 %v1132, %v1136
      %v1139 = vsel %vm83, %v1138, 0.0
      %v1140 = vrot.slane %v1139, 4
      %v1141 = vadd.f32 %v1139, %v1140
      %v1142 = vrot.slane %v1141, 2
      %v1143 = vadd.f32 %v1141, %v1142
      %v1144 = vrot.slane %v1143, 1
      %v1145 = vadd.f32 %v1143, %v1144
      %v1146 = vsel %vm83, %v1145, 0.0
      %1147 = vadd.xlane.f32.xlu0 %v1146
      %v1148 = vpop.xlane.xlu0 %1147
      %v1149 = vmul.f32 %v1148, %v100
      %v1150 = vsub.f32 %v1138, %v1149
      %v1151 = vmul.f32 %v1150, %v1150
      %v1152 = vsel %vm83, %v1151, 0.0
      %v1153 = vrot.slane %v1152, 4
      %v1154 = vadd.f32 %v1152, %v1153
      %v1155 = vrot.slane %v1154, 2
      %v1156 = vadd.f32 %v1154, %v1155
      %v1157 = vrot.slane %v1156, 1
      %v1158 = vadd.f32 %v1156, %v1157
      %v1159 = vsel %vm83, %v1158, 0.0
      %1160 = vadd.xlane.f32.xlu0 %v1159
      %v1161 = vpop.xlane.xlu0 %1160
      %v1162 = vmul.f32 %v1161, %v100
      %v1163 = vadd.f32 %v1162, 1e-05
      %v1164 = vrsqrt.pop %v1163
      %v1165 = vmul.f32 %v1164, %v1163
      %v1166 = vmul.f32 %v1165, %v1164
      %v1167 = vmul.f32 0.5, %v1166
      %v1168 = vsub.f32 1.5, %v1167
      %v1169 = vmul.f32 %v1164, %v1168
      %vm1170 = vweird.f32 %v1163
      %vm1171 = vweird.f32 %v1164
      %vm1172 = vmor %vm1170, %vm1171
      %v1173 = vsel %vm1172, %v1164, %v1169
      %v1174 = vmul.f32 %v1150, %v1173
      %1175 = vrot.lane.b32.xlu0 %v304, 121
      %v1176 = vpop.permute.xlu0 %1175
      %s1177 = vtos %v1176
      %v1178 = vstv %s1177
      %v1180 = vmul.f32 %v1174, %v1178
      %1181 = vrot.lane.b32.xlu0 %v78, 121
      %v1182 = vpop.permute.xlu0 %1181
      %s1183 = vtos %v1182
      %v1184 = vstv %s1183
      %v1186 = vadd.f32 %v1180, %v1184
      %v1187 = vmax.f32 %v1186, 0.0
      %s1188 = scalar_lea.vmem [#allocation3], 224
      %v1189 = vld [vmem:[%s1188] sm:$0xff]
      %v1190 = vld [vmem:[%s1188 + $0x8] sm:$0xff]
      %v1191 = vld [vmem:[%s1188 + $0x10] sm:$0xff]
      %v1192 = vld [vmem:[%s1188 + $0x18] sm:$0xff]
      %v1194 = vsel %vm83, %v1187, 0
      %1196 = vmatpush.msra.mxu0 0.0
      %1197 = vmatpush.msra.mxu0 0.0
      %1198 = vmatpush.msra.mxu0 0.0
      %1199 = vmatpush.msra.mxu0 0.0
      %1200 = vmatpush.msra.mxu0 0.0
      %1201 = vmatpush.msra.mxu0 0.0
      %1202 = vmatpush.msra.mxu0 0.0
      %1203 = vmatpush.msra.mxu0 0.0
      %1204 = vmatpush.msra.mxu0 0.0
      %1205 = vmatpush.msra.mxu0 0.0
      %1206 = vmatpush.msra.mxu0 0.0
      %1207 = vmatpush.msra.mxu0 0.0
      %1208 = vmatpush.msra.mxu0 %v1192
      %1209 = vmatpush.msra.mxu0 %v1191
      %1210 = vmatpush.msra.mxu0 %v1190
      %1211 = vmatpush.msra.mxu0 %v1189
      %1212 = vmatmul.f32.gmra.mxu0 %v1194
      %v1213 = vpop.f32.mrf.mxu0
      %v1214 = vadd.f32 0.0, %v1213
      %1215 = vdwg.mxu0
      %v1216 = vadd.f32 %v1091, %v1214
      %v1217 = vsel %vm83, %v1216, 0.0
      %v1218 = vrot.slane %v1217, 4
      %v1219 = vadd.f32 %v1217, %v1218
      %v1220 = vrot.slane %v1219, 2
      %v1221 = vadd.f32 %v1219, %v1220
      %v1222 = vrot.slane %v1221, 1
      %v1223 = vadd.f32 %v1221, %v1222
      %v1224 = vrcp.pop 8.0
      %v1225 = vmul.f32 8.0, %v1224
      %v1226 = vsub.f32 1.0, %v1225
      %v1227 = vmul.f32 %v1224, %v1226
      %v1228 = vadd.f32 %v1224, %v1227
      %vm1229 = vweird.f32 %v1224
      %v1230 = vsel %vm1229, %v1224, %v1228
      %v1231 = vmul.f32 %v1223, %v1230
      %v1232 = vsub.f32 %v1216, %v1231
      %v1233 = vmul.f32 %v1232, %v1232
      %v1234 = vsel %vm83, %v1233, 0.0
      %v1235 = vrot.slane %v1234, 4
      %v1236 = vadd.f32 %v1234, %v1235
      %v1237 = vrot.slane %v1236, 2
      %v1238 = vadd.f32 %v1236, %v1237
      %v1239 = vrot.slane %v1238, 1
      %v1240 = vadd.f32 %v1238, %v1239
      %v1241 = vmul.f32 %v1240, %v1230
      %v1242 = vadd.f32 %v1241, 1e-05
      %v1243 = vrsqrt.pop %v1242
      %v1244 = vmul.f32 %v1243, %v1242
      %v1245 = vmul.f32 %v1244, %v1243
      %v1246 = vmul.f32 0.5, %v1245
      %v1247 = vsub.f32 1.5, %v1246
      %v1248 = vmul.f32 %v1243, %v1247
      %vm1249 = vweird.f32 %v1242
      %vm1250 = vweird.f32 %v1243
      %vm1251 = vmor %vm1249, %vm1250
      %v1252 = vsel %vm1251, %v1243, %v1248
      %v1253 = vmul.f32 %v1232, %v1252
      %v1254 = vperm.slane %v78, 3
      %v1255 = vmul.f32 %v1253, %v1254
      %v1256 = vperm.slane %v78, 4
      %v1257 = vadd.f32 %v1255, %v1256
      %v1258 = vmax.f32 %v1257, 0.0
      %1259 = vst.msk [vmem:[#allocation2] sm:$0xff] %vm83, %v1258
    $region33: #{tpu_custom_call.1} parent=1 // pred_fallthru
      _
    %v1260 = vld [vmem:[%s67] sm:$0xff]
    %v1261 = vld [vmem:[%s67 + $0x8] sm:$0xff]
    %v1262 = vld [vmem:[%s67 + $0x10] sm:$0xff]
    %v1263 = vld [vmem:[%s67 + $0x18] sm:$0xff]
    %v1264 = vld [vmem:[%s67 + $0x20] sm:$0xff]
    %v1265 = vld [vmem:[%s67 + $0x28] sm:$0xff]
    %v1266 = vld [vmem:[%s67 + $0x30] sm:$0xff]
    %v1267 = vld [vmem:[%s67 + $0x38] sm:$0xff]
    %v1268 = vld [vmem:[%s67 + $0x40] sm:$0xff]
    %v1269 = vld [vmem:[%s67 + $0x48] sm:$0xff]
    %v1270 = vld [vmem:[%s67 + $0x50] sm:$0xff]
    %v1271 = vld [vmem:[%s67 + $0x58] sm:$0xff]
    %v1272 = vld [vmem:[%s67 + $0x60] sm:$0xff]
    %v1273 = vld [vmem:[%s67 + $0x68] sm:$0xff]
    %v1274 = vld [vmem:[%s67 + $0x70] sm:$0xff]
    %v1275 = vld [vmem:[%s67 + $0x78] sm:$0xff]
    %v1276 = vtanh.pop %v1260
    %v1277 = vtanh.pop %v1261
    %v1278 = vtanh.pop %v1262
    %v1279 = vtanh.pop %v1263
    %v1280 = vtanh.pop %v1264
    %v1281 = vtanh.pop %v1265
    %v1282 = vtanh.pop %v1266
    %v1283 = vtanh.pop %v1267
    %v1284 = vtanh.pop %v1268
    %v1285 = vtanh.pop %v1269
    %v1286 = vtanh.pop %v1270
    %v1287 = vtanh.pop %v1271
    %v1288 = vtanh.pop %v1272
    %v1289 = vtanh.pop %v1273
    %v1290 = vtanh.pop %v1274
    %v1291 = vtanh.pop %v1275
    %v1292 = vld [vmem:[#allocation2] sm:$0xff]
    %vm1293 = vcmask 261120
    %v1295 = vsel %vm1293, %v1292, 0
    %v1298 = vsel %vm1293, %v1276, 0
    %v1301 = vsel %vm1293, %v1277, 0
    %v1304 = vsel %vm1293, %v1278, 0
    %v1307 = vsel %vm1293, %v1279, 0
    %v1310 = vsel %vm1293, %v1280, 0
    %v1313 = vsel %vm1293, %v1281, 0
    %v1316 = vsel %vm1293, %v1282, 0
    %v1319 = vsel %vm1293, %v1283, 0
    %v1322 = vsel %vm1293, %v1284, 0
    %v1325 = vsel %vm1293, %v1285, 0
    %v1328 = vsel %vm1293, %v1286, 0
    %v1331 = vsel %vm1293, %v1287, 0
    %v1334 = vsel %vm1293, %v1288, 0
    %v1337 = vsel %vm1293, %v1289, 0
    %v1340 = vsel %vm1293, %v1290, 0
    %v1343 = vsel %vm1293, %v1291, 0
    %1345 = vmatpush.xpose.msra.mxu0 %v1343
    %1346 = vmatpush.xpose.msra.mxu0 %v1340
    %1347 = vmatpush.xpose.msra.mxu0 %v1337
    %1348 = vmatpush.xpose.msra.mxu0 %v1334
    %1349 = vmatpush.xpose.msra.mxu0 %v1331
    %1350 = vmatpush.xpose.msra.mxu0 %v1328
    %1351 = vmatpush.xpose.msra.mxu0 %v1325
    %1352 = vmatpush.xpose.msra.mxu0 %v1322
    %1353 = vmatpush.xpose.msra.mxu0 %v1319
    %1354 = vmatpush.xpose.msra.mxu0 %v1316
    %1355 = vmatpush.xpose.msra.mxu0 %v1313
    %1356 = vmatpush.xpose.msra.mxu0 %v1310
    %1357 = vmatpush.xpose.msra.mxu0 %v1307
    %1358 = vmatpush.xpose.msra.mxu0 %v1304
    %1359 = vmatpush.xpose.msra.mxu0 %v1301
    %1360 = vmatpush.xpose.msra.mxu0 %v1298
    %1361 = vmatmul.f32.gmra.mxu0 %v1295
    %v1362 = vpop.f32.mrf.mxu0
    %v1363 = vadd.f32 0.0, %v1362
    %1364 = vdwg.mxu0
    %1365 = vst [vmem:[#allocation6] sm:$0xff] %v1363
    // Predicated region
    $region34: #{tpu_custom_call.1} parent=1 // pred_check
      _
    $region35: #{tpu_custom_call.1} parent=1 // pred_check_branch
      %1367 = sbr.rel (0) target = $region37
    $region36: #{tpu_custom_call.1} parent=1 // pred_region
      %s1368 = sadd.s32 0, 0
      %1370 = vsyncadd [#allocation5], 0
      %s1371 = smul.addr %s1368, 8
      %s1372 = scalar_lea.hbm %s6, %s1371
      %s1374 = sshll.u32 [#allocation6], 4
      %s1375 = int_to_ptr.vmem [resolvable:$true] %s1374
      %s1376 = sshll.u32 %s1372, 4
      %s1377 = int_to_ptr.hbm [resolvable:$true] %s1376
      %1379 = dma.vmem_to_hbm [thread:$0]  %s1375, 128, %s1377, [#allocation5]
    $region37: #{tpu_custom_call.1} parent=1 // pred_fallthru
      _
    // Predicated region
    $region38: #{tpu_custom_call.1} parent=1 // pred_check
      _
    $region39: #{tpu_custom_call.1} parent=1 // pred_check_branch
      %1381 = sbr.rel (0) target = $region41
    $region40: #{tpu_custom_call.1} parent=1 // pred_region
      %1383 = dma.done [#allocation5], 128
    $region41: #{tpu_custom_call.1} parent=1 // pred_fallthru
      _
    %1384 = vsyncpa [#allocation4], 1
    %1385 = vsyncpa [#allocation5], 1

// kernel: tpu_custom_call.1
$region0: #{tpu_custom_call.1}
  #allocation0 [shape = 'u32[]', space=smem, size = 0x4, offset = 0x4, fixed_abs, tag = 'smem constant byte address 0x4 - core index']
  #allocation1 [shape = 'u32[72,128]{1,0:T(1,128)}', space=vmem, size = 0x9000, scoped, tag = 'internal scratch']
  #allocation2 [shape = 'f32[8,32]{1,0:T(8,128)}', space=vmem, size = 0x1000, scoped, tag = 'scratch operand']
  %s0 = inlined_call_operand.vmem [shape: f32[8,32], index: 0, kind: input, shape index: {}]
  %s1 = inlined_call_operand.vmem [shape: f32[8,32], index: 1, kind: input, shape index: {}]
  %s2 = inlined_call_operand.vmem [shape: f32[8,32], index: 2, kind: input, shape index: {}]
  %s3 = inlined_call_operand.vmem [shape: f32[13,32], index: 3, kind: input, shape index: {}]
  %s4 = inlined_call_operand.hbm [shape: f32[8,32,32], index: 4, kind: input, shape index: {}]
  %s5 = inlined_call_operand.vmem [shape: f32[128,32], index: 5, kind: input, shape index: {}]
  %s6 = inlined_call_operand.hbm [shape: f32[8,128], index: 6, kind: output, shape index: {}]
  %s7 = sld [smem:[#allocation0]]
  $region42: #{tpu_custom_call.1} parent=0
    _
  %s9 = ssub.s32 1, %s7
  %s10 = scalar_select 0, %s9, %s7
  $region1: #{tpu_custom_call.1} parent=0
    #allocation3 [shape = 'u8[131072]{0}', space=vmem, size = 0x20000, scoped, tag = 'input window, operand 4, single buffered']
    #allocation4 [shape = 's32[1]{0}', space=sflag, size = 0x4, scoped, tag = 'scoped memory for tpu_custom_call.1']
    #allocation5 [shape = 's32[1]{0}', space=sflag, size = 0x4, scoped, tag = 'scoped memory for tpu_custom_call.1']
    #allocation6 [shape = 'u8[4096]{0}', space=vmem, size = 0x1000, scoped, tag = 'output window, operand 0, single buffered']
    %11 = vsyncpa [#allocation4], 0
    %12 = vsyncpa [#allocation5], 0
    // Predicated region
    $region2: #{tpu_custom_call.1} parent=1 // pred_check
      _
    $region3: #{tpu_custom_call.1} parent=1 // pred_check_branch
      %14 = sbr.rel (0) target = $region5
    $region4: #{tpu_custom_call.1} parent=1 // pred_region
      _
    $region5: #{tpu_custom_call.1} parent=1 // pred_fallthru
      _
    // Predicated region
    $region6: #{tpu_custom_call.1} parent=1 // pred_check
      _
    $region7: #{tpu_custom_call.1} parent=1 // pred_check_branch
      %16 = sbr.rel (0) target = $region9
    $region8: #{tpu_custom_call.1} parent=1 // pred_region
      _
    $region9: #{tpu_custom_call.1} parent=1 // pred_fallthru
      _
    // Predicated region
    $region10: #{tpu_custom_call.1} parent=1 // pred_check
      _
    $region11: #{tpu_custom_call.1} parent=1 // pred_check_branch
      %18 = sbr.rel (0) target = $region13
    $region12: #{tpu_custom_call.1} parent=1 // pred_region
      _
    $region13: #{tpu_custom_call.1} parent=1 // pred_fallthru
      _
    // Predicated region
    $region14: #{tpu_custom_call.1} parent=1 // pred_check
      _
    $region15: #{tpu_custom_call.1} parent=1 // pred_check_branch
      %20 = sbr.rel (0) target = $region17
    $region16: #{tpu_custom_call.1} parent=1 // pred_region
      _
    $region17: #{tpu_custom_call.1} parent=1 // pred_fallthru
      _
    // Predicated region
    $region18: #{tpu_custom_call.1} parent=1 // pred_check
      _
    $region19: #{tpu_custom_call.1} parent=1 // pred_check_branch
      %22 = sbr.rel (0) target = $region21
    $region20: #{tpu_custom_call.1} parent=1 // pred_region
      %24 = vsyncadd [#allocation4], 0
      %s25 = sshll.u32 %s4, 4
      %s26 = int_to_ptr.hbm [resolvable:$true] %s25
      %s27 = sshll.u32 [#allocation3], 4
      %s28 = int_to_ptr.vmem [resolvable:$true] %s27
      %33 = dma.hbm_to_vmem [thread:$0]  %s26, 4096, %s28, [#allocation4], 128, 128, 8
    $region21: #{tpu_custom_call.1} parent=1 // pred_fallthru
      _
    // Predicated region
    $region22: #{tpu_custom_call.1} parent=1 // pred_check
      _
    $region23: #{tpu_custom_call.1} parent=1 // pred_check_branch
      %35 = sbr.rel (0) target = $region25
    $region24: #{tpu_custom_call.1} parent=1 // pred_region
      %s36 = sadd.s32 0, 0
      %p37 = scmp.lt.s32.totalorder %s36, 0
      %s38 = scalar_select %p37, %s36, 0
      %s39 = smul.u32 16, %s38
      %p40 = scmp.lt.s32.totalorder %s39, 15
      %s41 = scalar_select %p40, %s39, 15
      %s42 = smul.addr %s41, 8
      %s43 = scalar_lea.vmem %s5, %s42
      %s44 = sadd.s32 0, 0
      %p45 = scmp.lt.s32.totalorder %s44, 0
      %s46 = scalar_select %p45, %s44, 0
      %s47 = smul.u32 16, %s46
    $region25: #{tpu_custom_call.1} parent=1 // pred_fallthru
      _
    // Predicated region
    $region26: #{tpu_custom_call.1} parent=1 // pred_check
      _
    $region27: #{tpu_custom_call.1} parent=1 // pred_check_branch
      %49 = sbr.rel (0) target = $region29
    $region28: #{tpu_custom_call.1} parent=1 // pred_region
      %51 = dma.done [#allocation4], 4096
    $region29: #{tpu_custom_call.1} parent=1 // pred_fallthru
      _
    %s52 = sadd.s32 0, 0
    %p53 = scmp.lt.s32.totalorder %s52, 0
    %s54 = scalar_select %p53, %s52, 0
    %s55 = smul.u32 16, %s54
    %p56 = scmp.lt.s32.totalorder %s55, 15
    %s57 = scalar_select %p56, %s55, 15
    %s58 = smul.addr %s57, 8
    %s59 = scalar_lea.vmem %s5, %s58
    %s60 = sadd.s32 0, 0
    %p61 = scmp.lt.s32.totalorder %s60, 0
    %s62 = scalar_select %p61, %s60, 0
    %s63 = smul.u32 16, %s62
    %p64 = scmp.lt.s32.totalorder %s63, 15
    %s65 = scalar_select %p64, %s63, 15
    %s66 = smul.addr %s65, 8
    %s67 = scalar_lea.vmem %s5, %s66
    %s68 = sadd.s32 0, 0
    %p69 = scmp.lt.s32.totalorder %s68, 0
    %s70 = scalar_select %p69, %s68, 0
    %s71 = smul.u32 16, %s70
    %s72 = sadd.s32 0, 0
    %p73 = scmp.eq.s32.totalorder 0, 0
    // Predicated region
    $region30: #{tpu_custom_call.1} parent=1 // pred_check
      %p74 = pneg %p73
    $region31: #{tpu_custom_call.1} parent=1 // pred_check_branch
      %76 = sbr.rel (%p74) target = $region33
    $region32: #{tpu_custom_call.1} parent=1 // pred_region
      %v77 = vld [vmem:[%s3] sm:$0xff]
      %v78 = vld [vmem:[%s3 + $0x8] sm:$0x1f]
      %v79 = vld [vmem:[%s0] sm:$0xff]
      %v80 = vld [vmem:[%s1] sm:$0xff]
      %v81 = vadd.f32 %v79, %v80
      %v82 = vld [vmem:[%s2] sm:$0xff]
      %vm83 = vcmask 261120
      %v84 = vsel %vm83, %v81, 0.0
      %v85 = vrot.slane %v84, 4
      %v86 = vadd.f32 %v84, %v85
      %v87 = vrot.slane %v86, 2
      %v88 = vadd.f32 %v86, %v87
      %v89 = vrot.slane %v88, 1
      %v90 = vadd.f32 %v88, %v89
      %v91 = vsel %vm83, %v90, 0.0
      %92 = vadd.xlane.f32.xlu0 %v91
      %v93 = vpop.xlane.xlu0 %92
      %v94 = vrcp.pop 256.0
      %v95 = vmul.f32 256.0, %v94
      %v96 = vsub.f32 1.0, %v95
      %v97 = vmul.f32 %v94, %v96
      %v98 = vadd.f32 %v94, %v97
      %vm99 = vweird.f32 %v94
      %v100 = vsel %vm99, %v94, %v98
      %v101 = vmul.f32 %v93, %v100
      %v102 = vsub.f32 %v81, %v101
      %v103 = vmul.f32 %v102, %v102
      %v104 = vsel %vm83, %v103, 0.0
      %v105 = vrot.slane %v104, 4
      %v106 = vadd.f32 %v104, %v105
      %v107 = vrot.slane %v106, 2
      %v108 = vadd.f32 %v106, %v107
      %v109 = vrot.slane %v108, 1
      %v110 = vadd.f32 %v108, %v109
      %v111 = vsel %vm83, %v110, 0.0
      %112 = vadd.xlane.f32.xlu0 %v111
      %v113 = vpop.xlane.xlu0 %112
      %v114 = vmul.f32 %v113, %v100
      %v115 = vadd.f32 %v114, 1e-05
      %v116 = vrsqrt.pop %v115
      %v117 = vmul.f32 %v116, %v115
      %v118 = vmul.f32 %v117, %v116
      %v119 = vmul.f32 0.5, %v118
      %v120 = vsub.f32 1.5, %v119
      %v121 = vmul.f32 %v116, %v120
      %vm122 = vweird.f32 %v115
      %vm123 = vweird.f32 %v116
      %vm124 = vmor %vm122, %vm123
      %v125 = vsel %vm124, %v116, %v121
      %v126 = vmul.f32 %v102, %v125
      %v128 = vrot.slane %v78, 1
      %s129 = vtos %v128
      %v130 = vstv %s129
      %v132 = vmul.f32 %v126, %v130
      %133 = vrot.lane.b32.xlu0 %v128, 126
      %v134 = vpop.permute.xlu0 %133
      %s135 = vtos %v134
      %v136 = vstv %s135
      %v138 = vadd.f32 %v132, %v136
      %v139 = vsel %vm83, %v82, 0.0
      %v140 = vrot.slane %v139, 4
      %v141 = vadd.f32 %v139, %v140
      %v142 = vrot.slane %v141, 2
      %v143 = vadd.f32 %v141, %v142
      %v144 = vrot.slane %v143, 1
      %v145 = vadd.f32 %v143, %v144
      %v146 = vsel %vm83, %v145, 0.0
      %147 = vadd.xlane.f32.xlu0 %v146
      %v148 = vpop.xlane.xlu0 %147
      %v149 = vmul.f32 %v148, %v100
      %v150 = vsub.f32 %v82, %v149
      %v151 = vmul.f32 %v150, %v150
      %v152 = vsel %vm83, %v151, 0.0
      %v153 = vrot.slane %v152, 4
      %v154 = vadd.f32 %v152, %v153
      %v155 = vrot.slane %v154, 2
      %v156 = vadd.f32 %v154, %v155
      %v157 = vrot.slane %v156, 1
      %v158 = vadd.f32 %v156, %v157
      %v159 = vsel %vm83, %v158, 0.0
      %160 = vadd.xlane.f32.xlu0 %v159
      %v161 = vpop.xlane.xlu0 %160
      %v162 = vmul.f32 %v161, %v100
      %v163 = vadd.f32 %v162, 1e-05
      %v164 = vrsqrt.pop %v163
      %v165 = vmul.f32 %v164, %v163
      %v166 = vmul.f32 %v165, %v164
      %v167 = vmul.f32 0.5, %v166
      %v168 = vsub.f32 1.5, %v167
      %v169 = vmul.f32 %v164, %v168
      %vm170 = vweird.f32 %v163
      %vm171 = vweird.f32 %v164
      %vm172 = vmor %vm170, %vm171
      %v173 = vsel %vm172, %v164, %v169
      %v174 = vmul.f32 %v150, %v173
      %175 = vrot.lane.b32.xlu0 %v128, 127
      %v176 = vpop.permute.xlu0 %175
      %s177 = vtos %v176
      %v178 = vstv %s177
      %v180 = vmul.f32 %v174, %v178
      %181 = vrot.lane.b32.xlu0 %v128, 125
      %v182 = vpop.permute.xlu0 %181
      %s183 = vtos %v182
      %v184 = vstv %s183
      %v186 = vadd.f32 %v180, %v184
      %v187 = vlaneseq
      %v188 = vand.u32 %v187, 127
      %vm189 = vcmp.eq.s32.totalorder %v188, 0
      %vm190 = vcmp.eq.s32.totalorder %v188, 31
      %vm191 = vcmask 1047808
      %192 = vrot.lane.b32.xlu0 %v138, 32
      %v193 = vpop.permute.xlu0 %192
      %v194 = vsel %vm191, %v193, %v138
      %195 = vrot.lane.b32.xlu0 %v194, 32
      %v196 = vpop.permute.xlu0 %195
      %v197 = vsel %vm191, %v196, %v138
      %v198 = vsel %vm189, 1, 0
      %vm199 = vcmp.eq.s32.totalorder %v198, 1
      %201 = vrot.lane.b32.xlu0 %v197, 97
      %v202 = vpop.permute.xlu0 %201
      %v204 = vsel %vm199, 0.0, %v202
      %v205 = vsel %vm190, 1, 0
      %vm206 = vcmp.eq.s32.totalorder %v205, 1
      %207 = vrot.lane.b32.xlu0 %v197, 127
      %v208 = vpop.permute.xlu0 %207
      %v210 = vsel %vm206, 0.0, %v208
      %211 = vrot.lane.b32.xlu0 %v186, 32
      %v212 = vpop.permute.xlu0 %211
      %v213 = vsel %vm191, %v212, %v186
      %214 = vrot.lane.b32.xlu0 %v213, 32
      %v215 = vpop.permute.xlu0 %214
      %v216 = vsel %vm191, %v215, %v186
      %218 = vrot.lane.b32.xlu0 %v216, 97
      %v219 = vpop.permute.xlu0 %218
      %v221 = vsel %vm199, 0.0, %v219
      %222 = vrot.lane.b32.xlu0 %v216, 127
      %v223 = vpop.permute.xlu0 %222
      %v225 = vsel %vm206, 0.0, %v223
      %v226 = vperm.slane %v78, 2
      %v227 = vadd.f32 %v226, 0.0
      %s229 = vtos %v77
      %v230 = vstv %s229
      %v232 = vmul.f32 %v204, %v230
      %v233 = vrot.slane %v77, 1
      %s234 = vtos %v233
      %v235 = vstv %s234
      %v237 = vmul.f32 %v138, %v235
      %v238 = vadd.f32 %v232, %v237
      %v239 = vrot.slane %v77, 2
      %s240 = vtos %v239
      %v241 = vstv %s240
      %v243 = vmul.f32 %v210, %v241
      %v244 = vadd.f32 %v238, %v243
      %v245 = vrot.slane %v77, 3
      %s246 = vtos %v245
      %v247 = vstv %s246
      %v249 = vmul.f32 %v221, %v247
      %v250 = vadd.f32 %v244, %v249
      %v251 = vrot.slane %v77, 4
      %s252 = vtos %v251
      %v253 = vstv %s252
      %v255 = vmul.f32 %v186, %v253
      %v256 = vadd.f32 %v250, %v255
      %v257 = vrot.slane %v77, 5
      %s258 = vtos %v257
      %v259 = vstv %s258
      %v261 = vmul.f32 %v225, %v259
      %v262 = vadd.f32 %v256, %v261
      %v263 = vrot.slane %v77, 6
      %s264 = vtos %v263
      %v265 = vstv %s264
      %v267 = vadd.f32 %v262, %v265
      %v268 = vsel %vm83, %v267, 0.0
      %v269 = vrot.slane %v268, 4
      %v270 = vadd.f32 %v268, %v269
      %v271 = vrot.slane %v270, 2
      %v272 = vadd.f32 %v270, %v271
      %v273 = vrot.slane %v272, 1
      %v274 = vadd.f32 %v272, %v273
      %v275 = vsel %vm83, %v274, 0.0
      %276 = vadd.xlane.f32.xlu0 %v275
      %v277 = vpop.xlane.xlu0 %276
      %v278 = vmul.f32 %v277, %v100
      %v279 = vsub.f32 %v267, %v278
      %v280 = vmul.f32 %v279, %v279
      %v281 = vsel %vm83, %v280, 0.0
      %v282 = vrot.slane %v281, 4
      %v283 = vadd.f32 %v281, %v282
      %v284 = vrot.slane %v283, 2
      %v285 = vadd.f32 %v283, %v284
      %v286 = vrot.slane %v285, 1
      %v287 = vadd.f32 %v285, %v286
      %v288 = vsel %vm83, %v287, 0.0
      %289 = vadd.xlane.f32.xlu0 %v288
      %v290 = vpop.xlane.xlu0 %289
      %v291 = vmul.f32 %v290, %v100
      %v292 = vadd.f32 %v291, 1e-05
      %v293 = vrsqrt.pop %v292
      %v294 = vmul.f32 %v293, %v292
      %v295 = vmul.f32 %v294, %v293
      %v296 = vmul.f32 0.5, %v295
      %v297 = vsub.f32 1.5, %v296
      %v298 = vmul.f32 %v293, %v297
      %vm299 = vweird.f32 %v292
      %vm300 = vweird.f32 %v293
      %vm301 = vmor %vm299, %vm300
      %v302 = vsel %vm301, %v293, %v298
      %v303 = vmul.f32 %v279, %v302
      %v304 = vrot.slane %v77, 7
      %s305 = vtos %v304
      %v306 = vstv %s305
      %v308 = vmul.f32 %v303, %v306
      %s309 = vtos %v78
      %v310 = vstv %s309
      %v312 = vadd.f32 %v308, %v310
      %v313 = vmax.f32 %v312, 0.0
      %v314 = vld [vmem:[#allocation3] sm:$0xff]
      %v315 = vld [vmem:[#allocation3 + $0x8] sm:$0xff]
      %v316 = vld [vmem:[#allocation3 + $0x10] sm:$0xff]
      %v317 = vld [vmem:[#allocation3 + $0x18] sm:$0xff]
      %v319 = vsel %vm83, %v313, 0
      %321 = vmatpush.msra.mxu0 0.0
      %322 = vmatpush.msra.mxu0 0.0
      %323 = vmatpush.msra.mxu0 0.0
      %324 = vmatpush.msra.mxu0 0.0
      %325 = vmatpush.msra.mxu0 0.0
      %326 = vmatpush.msra.mxu0 0.0
      %327 = vmatpush.msra.mxu0 0.0
      %328 = vmatpush.msra.mxu0 0.0
      %329 = vmatpush.msra.mxu0 0.0
      %330 = vmatpush.msra.mxu0 0.0
      %331 = vmatpush.msra.mxu0 0.0
      %332 = vmatpush.msra.mxu0 0.0
      %333 = vmatpush.msra.mxu0 %v317
      %334 = vmatpush.msra.mxu0 %v316
      %335 = vmatpush.msra.mxu0 %v315
      %336 = vmatpush.msra.mxu0 %v314
      %337 = vmatmul.f32.gmra.mxu0 %v319
      %v338 = vpop.f32.mrf.mxu0
      %v339 = vadd.f32 0.0, %v338
      %340 = vdwg.mxu0
      %v341 = vadd.f32 %v227, %v339
      %342 = vrot.lane.b32.xlu0 %v77, 127
      %v343 = vpop.permute.xlu0 %342
      %s344 = vtos %v343
      %v345 = vstv %s344
      %v347 = vmul.f32 %v204, %v345
      %348 = vrot.lane.b32.xlu0 %v233, 127
      %v349 = vpop.permute.xlu0 %348
      %s350 = vtos %v349
      %v351 = vstv %s350
      %v353 = vmul.f32 %v138, %v351
      %v354 = vadd.f32 %v347, %v353
      %355 = vrot.lane.b32.xlu0 %v239, 127
      %v356 = vpop.permute.xlu0 %355
      %s357 = vtos %v356
      %v358 = vstv %s357
      %v360 = vmul.f32 %v210, %v358
      %v361 = vadd.f32 %v354, %v360
      %362 = vrot.lane.b32.xlu0 %v245, 127
      %v363 = vpop.permute.xlu0 %362
      %s364 = vtos %v363
      %v365 = vstv %s364
      %v367 = vmul.f32 %v221, %v365
      %v368 = vadd.f32 %v361, %v367
      %369 = vrot.lane.b32.xlu0 %v251, 127
      %v370 = vpop.permute.xlu0 %369
      %s371 = vtos %v370
      %v372 = vstv %s371
      %v374 = vmul.f32 %v186, %v372
      %v375 = vadd.f32 %v368, %v374
      %376 = vrot.lane.b32.xlu0 %v257, 127
      %v377 = vpop.permute.xlu0 %376
      %s378 = vtos %v377
      %v379 = vstv %s378
      %v381 = vmul.f32 %v225, %v379
      %v382 = vadd.f32 %v375, %v381
      %383 = vrot.lane.b32.xlu0 %v263, 127
      %v384 = vpop.permute.xlu0 %383
      %s385 = vtos %v384
      %v386 = vstv %s385
      %v388 = vadd.f32 %v382, %v386
      %v389 = vsel %vm83, %v388, 0.0
      %v390 = vrot.slane %v389, 4
      %v391 = vadd.f32 %v389, %v390
      %v392 = vrot.slane %v391, 2
      %v393 = vadd.f32 %v391, %v392
      %v394 = vrot.slane %v393, 1
      %v395 = vadd.f32 %v393, %v394
      %v396 = vsel %vm83, %v395, 0.0
      %397 = vadd.xlane.f32.xlu0 %v396
      %v398 = vpop.xlane.xlu0 %397
      %v399 = vmul.f32 %v398, %v100
      %v400 = vsub.f32 %v388, %v399
      %v401 = vmul.f32 %v400, %v400
      %v402 = vsel %vm83, %v401, 0.0
      %v403 = vrot.slane %v402, 4
      %v404 = vadd.f32 %v402, %v403
      %v405 = vrot.slane %v404, 2
      %v406 = vadd.f32 %v404, %v405
      %v407 = vrot.slane %v406, 1
      %v408 = vadd.f32 %v406, %v407
      %v409 = vsel %vm83, %v408, 0.0
      %410 = vadd.xlane.f32.xlu0 %v409
      %v411 = vpop.xlane.xlu0 %410
      %v412 = vmul.f32 %v411, %v100
      %v413 = vadd.f32 %v412, 1e-05
      %v414 = vrsqrt.pop %v413
      %v415 = vmul.f32 %v414, %v413
      %v416 = vmul.f32 %v415, %v414
      %v417 = vmul.f32 0.5, %v416
      %v418 = vsub.f32 1.5, %v417
      %v419 = vmul.f32 %v414, %v418
      %vm420 = vweird.f32 %v413
      %vm421 = vweird.f32 %v414
      %vm422 = vmor %vm420, %vm421
      %v423 = vsel %vm422, %v414, %v419
      %v424 = vmul.f32 %v400, %v423
      %425 = vrot.lane.b32.xlu0 %v304, 127
      %v426 = vpop.permute.xlu0 %425
      %s427 = vtos %v426
      %v428 = vstv %s427
      %v430 = vmul.f32 %v424, %v428
      %431 = vrot.lane.b32.xlu0 %v78, 127
      %v432 = vpop.permute.xlu0 %431
      %s433 = vtos %v432
      %v434 = vstv %s433
      %v436 = vadd.f32 %v430, %v434
      %v437 = vmax.f32 %v436, 0.0
      %s438 = scalar_lea.vmem [#allocation3], 32
      %v439 = vld [vmem:[%s438] sm:$0xff]
      %v440 = vld [vmem:[%s438 + $0x8] sm:$0xff]
      %v441 = vld [vmem:[%s438 + $0x10] sm:$0xff]
      %v442 = vld [vmem:[%s438 + $0x18] sm:$0xff]
      %v444 = vsel %vm83, %v437, 0
      %446 = vmatpush.msra.mxu0 0.0
      %447 = vmatpush.msra.mxu0 0.0
      %448 = vmatpush.msra.mxu0 0.0
      %449 = vmatpush.msra.mxu0 0.0
      %450 = vmatpush.msra.mxu0 0.0
      %451 = vmatpush.msra.mxu0 0.0
      %452 = vmatpush.msra.mxu0 0.0
      %453 = vmatpush.msra.mxu0 0.0
      %454 = vmatpush.msra.mxu0 0.0
      %455 = vmatpush.msra.mxu0 0.0
      %456 = vmatpush.msra.mxu0 0.0
      %457 = vmatpush.msra.mxu0 0.0
      %458 = vmatpush.msra.mxu0 %v442
      %459 = vmatpush.msra.mxu0 %v441
      %460 = vmatpush.msra.mxu0 %v440
      %461 = vmatpush.msra.mxu0 %v439
      %462 = vmatmul.f32.gmra.mxu0 %v444
      %v463 = vpop.f32.mrf.mxu0
      %v464 = vadd.f32 0.0, %v463
      %465 = vdwg.mxu0
      %v466 = vadd.f32 %v341, %v464
      %467 = vrot.lane.b32.xlu0 %v77, 126
      %v468 = vpop.permute.xlu0 %467
      %s469 = vtos %v468
      %v470 = vstv %s469
      %v472 = vmul.f32 %v204, %v470
      %473 = vrot.lane.b32.xlu0 %v233, 126
      %v474 = vpop.permute.xlu0 %473
      %s475 = vtos %v474
      %v476 = vstv %s475
      %v478 = vmul.f32 %v138, %v476
      %v479 = vadd.f32 %v472, %v478
      %480 = vrot.lane.b32.xlu0 %v239, 126
      %v481 = vpop.permute.xlu0 %480
      %s482 = vtos %v481
      %v483 = vstv %s482
      %v485 = vmul.f32 %v210, %v483
      %v486 = vadd.f32 %v479, %v485
      %487 = vrot.lane.b32.xlu0 %v245, 126
      %v488 = vpop.permute.xlu0 %487
      %s489 = vtos %v488
      %v490 = vstv %s489
      %v492 = vmul.f32 %v221, %v490
      %v493 = vadd.f32 %v486, %v492
      %494 = vrot.lane.b32.xlu0 %v251, 126
      %v495 = vpop.permute.xlu0 %494
      %s496 = vtos %v495
      %v497 = vstv %s496
      %v499 = vmul.f32 %v186, %v497
      %v500 = vadd.f32 %v493, %v499
      %501 = vrot.lane.b32.xlu0 %v257, 126
      %v502 = vpop.permute.xlu0 %501
      %s503 = vtos %v502
      %v504 = vstv %s503
      %v506 = vmul.f32 %v225, %v504
      %v507 = vadd.f32 %v500, %v506
      %508 = vrot.lane.b32.xlu0 %v263, 126
      %v509 = vpop.permute.xlu0 %508
      %s510 = vtos %v509
      %v511 = vstv %s510
      %v513 = vadd.f32 %v507, %v511
      %v514 = vsel %vm83, %v513, 0.0
      %v515 = vrot.slane %v514, 4
      %v516 = vadd.f32 %v514, %v515
      %v517 = vrot.slane %v516, 2
      %v518 = vadd.f32 %v516, %v517
      %v519 = vrot.slane %v518, 1
      %v520 = vadd.f32 %v518, %v519
      %v521 = vsel %vm83, %v520, 0.0
      %522 = vadd.xlane.f32.xlu0 %v521
      %v523 = vpop.xlane.xlu0 %522
      %v524 = vmul.f32 %v523, %v100
      %v525 = vsub.f32 %v513, %v524
      %v526 = vmul.f32 %v525, %v525
      %v527 = vsel %vm83, %v526, 0.0
      %v528 = vrot.slane %v527, 4
      %v529 = vadd.f32 %v527, %v528
      %v530 = vrot.slane %v529, 2
      %v531 = vadd.f32 %v529, %v530
      %v532 = vrot.slane %v531, 1
      %v533 = vadd.f32 %v531, %v532
      %v534 = vsel %vm83, %v533, 0.0
      %535 = vadd.xlane.f32.xlu0 %v534
      %v536 = vpop.xlane.xlu0 %535
      %v537 = vmul.f32 %v536, %v100
      %v538 = vadd.f32 %v537, 1e-05
      %v539 = vrsqrt.pop %v538
      %v540 = vmul.f32 %v539, %v538
      %v541 = vmul.f32 %v540, %v539
      %v542 = vmul.f32 0.5, %v541
      %v543 = vsub.f32 1.5, %v542
      %v544 = vmul.f32 %v539, %v543
      %vm545 = vweird.f32 %v538
      %vm546 = vweird.f32 %v539
      %vm547 = vmor %vm545, %vm546
      %v548 = vsel %vm547, %v539, %v544
      %v549 = vmul.f32 %v525, %v548
      %550 = vrot.lane.b32.xlu0 %v304, 126
      %v551 = vpop.permute.xlu0 %550
      %s552 = vtos %v551
      %v553 = vstv %s552
      %v555 = vmul.f32 %v549, %v553
      %556 = vrot.lane.b32.xlu0 %v78, 126
      %v557 = vpop.permute.xlu0 %556
      %s558 = vtos %v557
      %v559 = vstv %s558
      %v561 = vadd.f32 %v555, %v559
      %v562 = vmax.f32 %v561, 0.0
      %s563 = scalar_lea.vmem [#allocation3], 64
      %v564 = vld [vmem:[%s563] sm:$0xff]
      %v565 = vld [vmem:[%s563 + $0x8] sm:$0xff]
      %v566 = vld [vmem:[%s563 + $0x10] sm:$0xff]
      %v567 = vld [vmem:[%s563 + $0x18] sm:$0xff]
      %v569 = vsel %vm83, %v562, 0
      %571 = vmatpush.msra.mxu0 0.0
      %572 = vmatpush.msra.mxu0 0.0
      %573 = vmatpush.msra.mxu0 0.0
      %574 = vmatpush.msra.mxu0 0.0
      %575 = vmatpush.msra.mxu0 0.0
      %576 = vmatpush.msra.mxu0 0.0
      %577 = vmatpush.msra.mxu0 0.0
      %578 = vmatpush.msra.mxu0 0.0
      %579 = vmatpush.msra.mxu0 0.0
      %580 = vmatpush.msra.mxu0 0.0
      %581 = vmatpush.msra.mxu0 0.0
      %582 = vmatpush.msra.mxu0 0.0
      %583 = vmatpush.msra.mxu0 %v567
      %584 = vmatpush.msra.mxu0 %v566
      %585 = vmatpush.msra.mxu0 %v565
      %586 = vmatpush.msra.mxu0 %v564
      %587 = vmatmul.f32.gmra.mxu0 %v569
      %v588 = vpop.f32.mrf.mxu0
      %v589 = vadd.f32 0.0, %v588
      %590 = vdwg.mxu0
      %v591 = vadd.f32 %v466, %v589
      %592 = vrot.lane.b32.xlu0 %v77, 125
      %v593 = vpop.permute.xlu0 %592
      %s594 = vtos %v593
      %v595 = vstv %s594
      %v597 = vmul.f32 %v204, %v595
      %598 = vrot.lane.b32.xlu0 %v233, 125
      %v599 = vpop.permute.xlu0 %598
      %s600 = vtos %v599
      %v601 = vstv %s600
      %v603 = vmul.f32 %v138, %v601
      %v604 = vadd.f32 %v597, %v603
      %605 = vrot.lane.b32.xlu0 %v239, 125
      %v606 = vpop.permute.xlu0 %605
      %s607 = vtos %v606
      %v608 = vstv %s607
      %v610 = vmul.f32 %v210, %v608
      %v611 = vadd.f32 %v604, %v610
      %612 = vrot.lane.b32.xlu0 %v245, 125
      %v613 = vpop.permute.xlu0 %612
      %s614 = vtos %v613
      %v615 = vstv %s614
      %v617 = vmul.f32 %v221, %v615
      %v618 = vadd.f32 %v611, %v617
      %619 = vrot.lane.b32.xlu0 %v251, 125
      %v620 = vpop.permute.xlu0 %619
      %s621 = vtos %v620
      %v622 = vstv %s621
      %v624 = vmul.f32 %v186, %v622
      %v625 = vadd.f32 %v618, %v624
      %626 = vrot.lane.b32.xlu0 %v257, 125
      %v627 = vpop.permute.xlu0 %626
      %s628 = vtos %v627
      %v629 = vstv %s628
      %v631 = vmul.f32 %v225, %v629
      %v632 = vadd.f32 %v625, %v631
      %633 = vrot.lane.b32.xlu0 %v263, 125
      %v634 = vpop.permute.xlu0 %633
      %s635 = vtos %v634
      %v636 = vstv %s635
      %v638 = vadd.f32 %v632, %v636
      %v639 = vsel %vm83, %v638, 0.0
      %v640 = vrot.slane %v639, 4
      %v641 = vadd.f32 %v639, %v640
      %v642 = vrot.slane %v641, 2
      %v643 = vadd.f32 %v641, %v642
      %v644 = vrot.slane %v643, 1
      %v645 = vadd.f32 %v643, %v644
      %v646 = vsel %vm83, %v645, 0.0
      %647 = vadd.xlane.f32.xlu0 %v646
      %v648 = vpop.xlane.xlu0 %647
      %v649 = vmul.f32 %v648, %v100
      %v650 = vsub.f32 %v638, %v649
      %v651 = vmul.f32 %v650, %v650
      %v652 = vsel %vm83, %v651, 0.0
      %v653 = vrot.slane %v652, 4
      %v654 = vadd.f32 %v652, %v653
      %v655 = vrot.slane %v654, 2
      %v656 = vadd.f32 %v654, %v655
      %v657 = vrot.slane %v656, 1
      %v658 = vadd.f32 %v656, %v657
      %v659 = vsel %vm83, %v658, 0.0
      %660 = vadd.xlane.f32.xlu0 %v659
      %v661 = vpop.xlane.xlu0 %660
      %v662 = vmul.f32 %v661, %v100
      %v663 = vadd.f32 %v662, 1e-05
      %v664 = vrsqrt.pop %v663
      %v665 = vmul.f32 %v664, %v663
      %v666 = vmul.f32 %v665, %v664
      %v667 = vmul.f32 0.5, %v666
      %v668 = vsub.f32 1.5, %v667
      %v669 = vmul.f32 %v664, %v668
      %vm670 = vweird.f32 %v663
      %vm671 = vweird.f32 %v664
      %vm672 = vmor %vm670, %vm671
      %v673 = vsel %vm672, %v664, %v669
      %v674 = vmul.f32 %v650, %v673
      %675 = vrot.lane.b32.xlu0 %v304, 125
      %v676 = vpop.permute.xlu0 %675
      %s677 = vtos %v676
      %v678 = vstv %s677
      %v680 = vmul.f32 %v674, %v678
      %681 = vrot.lane.b32.xlu0 %v78, 125
      %v682 = vpop.permute.xlu0 %681
      %s683 = vtos %v682
      %v684 = vstv %s683
      %v686 = vadd.f32 %v680, %v684
      %v687 = vmax.f32 %v686, 0.0
      %s688 = scalar_lea.vmem [#allocation3], 96
      %v689 = vld [vmem:[%s688] sm:$0xff]
      %v690 = vld [vmem:[%s688 + $0x8] sm:$0xff]
      %v691 = vld [vmem:[%s688 + $0x10] sm:$0xff]
      %v692 = vld [vmem:[%s688 + $0x18] sm:$0xff]
      %v694 = vsel %vm83, %v687, 0
      %696 = vmatpush.msra.mxu0 0.0
      %697 = vmatpush.msra.mxu0 0.0
      %698 = vmatpush.msra.mxu0 0.0
      %699 = vmatpush.msra.mxu0 0.0
      %700 = vmatpush.msra.mxu0 0.0
      %701 = vmatpush.msra.mxu0 0.0
      %702 = vmatpush.msra.mxu0 0.0
      %703 = vmatpush.msra.mxu0 0.0
      %704 = vmatpush.msra.mxu0 0.0
      %705 = vmatpush.msra.mxu0 0.0
      %706 = vmatpush.msra.mxu0 0.0
      %707 = vmatpush.msra.mxu0 0.0
      %708 = vmatpush.msra.mxu0 %v692
      %709 = vmatpush.msra.mxu0 %v691
      %710 = vmatpush.msra.mxu0 %v690
      %711 = vmatpush.msra.mxu0 %v689
      %712 = vmatmul.f32.gmra.mxu0 %v694
      %v713 = vpop.f32.mrf.mxu0
      %v714 = vadd.f32 0.0, %v713
      %715 = vdwg.mxu0
      %v716 = vadd.f32 %v591, %v714
      %717 = vrot.lane.b32.xlu0 %v77, 124
      %v718 = vpop.permute.xlu0 %717
      %s719 = vtos %v718
      %v720 = vstv %s719
      %v722 = vmul.f32 %v204, %v720
      %723 = vrot.lane.b32.xlu0 %v233, 124
      %v724 = vpop.permute.xlu0 %723
      %s725 = vtos %v724
      %v726 = vstv %s725
      %v728 = vmul.f32 %v138, %v726
      %v729 = vadd.f32 %v722, %v728
      %730 = vrot.lane.b32.xlu0 %v239, 124
      %v731 = vpop.permute.xlu0 %730
      %s732 = vtos %v731
      %v733 = vstv %s732
      %v735 = vmul.f32 %v210, %v733
      %v736 = vadd.f32 %v729, %v735
      %737 = vrot.lane.b32.xlu0 %v245, 124
      %v738 = vpop.permute.xlu0 %737
      %s739 = vtos %v738
      %v740 = vstv %s739
      %v742 = vmul.f32 %v221, %v740
      %v743 = vadd.f32 %v736, %v742
      %744 = vrot.lane.b32.xlu0 %v251, 124
      %v745 = vpop.permute.xlu0 %744
      %s746 = vtos %v745
      %v747 = vstv %s746
      %v749 = vmul.f32 %v186, %v747
      %v750 = vadd.f32 %v743, %v749
      %751 = vrot.lane.b32.xlu0 %v257, 124
      %v752 = vpop.permute.xlu0 %751
      %s753 = vtos %v752
      %v754 = vstv %s753
      %v756 = vmul.f32 %v225, %v754
      %v757 = vadd.f32 %v750, %v756
      %758 = vrot.lane.b32.xlu0 %v263, 124
      %v759 = vpop.permute.xlu0 %758
      %s760 = vtos %v759
      %v761 = vstv %s760
      %v763 = vadd.f32 %v757, %v761
      %v764 = vsel %vm83, %v763, 0.0
      %v765 = vrot.slane %v764, 4
      %v766 = vadd.f32 %v764, %v765
      %v767 = vrot.slane %v766, 2
      %v768 = vadd.f32 %v766, %v767
      %v769 = vrot.slane %v768, 1
      %v770 = vadd.f32 %v768, %v769
      %v771 = vsel %vm83, %v770, 0.0
      %772 = vadd.xlane.f32.xlu0 %v771
      %v773 = vpop.xlane.xlu0 %772
      %v774 = vmul.f32 %v773, %v100
      %v775 = vsub.f32 %v763, %v774
      %v776 = vmul.f32 %v775, %v775
      %v777 = vsel %vm83, %v776, 0.0
      %v778 = vrot.slane %v777, 4
      %v779 = vadd.f32 %v777, %v778
      %v780 = vrot.slane %v779, 2
      %v781 = vadd.f32 %v779, %v780
      %v782 = vrot.slane %v781, 1
      %v783 = vadd.f32 %v781, %v782
      %v784 = vsel %vm83, %v783, 0.0
      %785 = vadd.xlane.f32.xlu0 %v784
      %v786 = vpop.xlane.xlu0 %785
      %v787 = vmul.f32 %v786, %v100
      %v788 = vadd.f32 %v787, 1e-05
      %v789 = vrsqrt.pop %v788
      %v790 = vmul.f32 %v789, %v788
      %v791 = vmul.f32 %v790, %v789
      %v792 = vmul.f32 0.5, %v791
      %v793 = vsub.f32 1.5, %v792
      %v794 = vmul.f32 %v789, %v793
      %vm795 = vweird.f32 %v788
      %vm796 = vweird.f32 %v789
      %vm797 = vmor %vm795, %vm796
      %v798 = vsel %vm797, %v789, %v794
      %v799 = vmul.f32 %v775, %v798
      %800 = vrot.lane.b32.xlu0 %v304, 124
      %v801 = vpop.permute.xlu0 %800
      %s802 = vtos %v801
      %v803 = vstv %s802
      %v805 = vmul.f32 %v799, %v803
      %806 = vrot.lane.b32.xlu0 %v78, 124
      %v807 = vpop.permute.xlu0 %806
      %s808 = vtos %v807
      %v809 = vstv %s808
      %v811 = vadd.f32 %v805, %v809
      %v812 = vmax.f32 %v811, 0.0
      %s813 = scalar_lea.vmem [#allocation3], 128
      %v814 = vld [vmem:[%s813] sm:$0xff]
      %v815 = vld [vmem:[%s813 + $0x8] sm:$0xff]
      %v816 = vld [vmem:[%s813 + $0x10] sm:$0xff]
      %v817 = vld [vmem:[%s813 + $0x18] sm:$0xff]
      %v819 = vsel %vm83, %v812, 0
      %821 = vmatpush.msra.mxu0 0.0
      %822 = vmatpush.msra.mxu0 0.0
      %823 = vmatpush.msra.mxu0 0.0
      %824 = vmatpush.msra.mxu0 0.0
      %825 = vmatpush.msra.mxu0 0.0
      %826 = vmatpush.msra.mxu0 0.0
      %827 = vmatpush.msra.mxu0 0.0
      %828 = vmatpush.msra.mxu0 0.0
      %829 = vmatpush.msra.mxu0 0.0
      %830 = vmatpush.msra.mxu0 0.0
      %831 = vmatpush.msra.mxu0 0.0
      %832 = vmatpush.msra.mxu0 0.0
      %833 = vmatpush.msra.mxu0 %v817
      %834 = vmatpush.msra.mxu0 %v816
      %835 = vmatpush.msra.mxu0 %v815
      %836 = vmatpush.msra.mxu0 %v814
      %837 = vmatmul.f32.gmra.mxu0 %v819
      %v838 = vpop.f32.mrf.mxu0
      %v839 = vadd.f32 0.0, %v838
      %840 = vdwg.mxu0
      %v841 = vadd.f32 %v716, %v839
      %842 = vrot.lane.b32.xlu0 %v77, 123
      %v843 = vpop.permute.xlu0 %842
      %s844 = vtos %v843
      %v845 = vstv %s844
      %v847 = vmul.f32 %v204, %v845
      %848 = vrot.lane.b32.xlu0 %v233, 123
      %v849 = vpop.permute.xlu0 %848
      %s850 = vtos %v849
      %v851 = vstv %s850
      %v853 = vmul.f32 %v138, %v851
      %v854 = vadd.f32 %v847, %v853
      %855 = vrot.lane.b32.xlu0 %v239, 123
      %v856 = vpop.permute.xlu0 %855
      %s857 = vtos %v856
      %v858 = vstv %s857
      %v860 = vmul.f32 %v210, %v858
      %v861 = vadd.f32 %v854, %v860
      %862 = vrot.lane.b32.xlu0 %v245, 123
      %v863 = vpop.permute.xlu0 %862
      %s864 = vtos %v863
      %v865 = vstv %s864
      %v867 = vmul.f32 %v221, %v865
      %v868 = vadd.f32 %v861, %v867
      %869 = vrot.lane.b32.xlu0 %v251, 123
      %v870 = vpop.permute.xlu0 %869
      %s871 = vtos %v870
      %v872 = vstv %s871
      %v874 = vmul.f32 %v186, %v872
      %v875 = vadd.f32 %v868, %v874
      %876 = vrot.lane.b32.xlu0 %v257, 123
      %v877 = vpop.permute.xlu0 %876
      %s878 = vtos %v877
      %v879 = vstv %s878
      %v881 = vmul.f32 %v225, %v879
      %v882 = vadd.f32 %v875, %v881
      %883 = vrot.lane.b32.xlu0 %v263, 123
      %v884 = vpop.permute.xlu0 %883
      %s885 = vtos %v884
      %v886 = vstv %s885
      %v888 = vadd.f32 %v882, %v886
      %v889 = vsel %vm83, %v888, 0.0
      %v890 = vrot.slane %v889, 4
      %v891 = vadd.f32 %v889, %v890
      %v892 = vrot.slane %v891, 2
      %v893 = vadd.f32 %v891, %v892
      %v894 = vrot.slane %v893, 1
      %v895 = vadd.f32 %v893, %v894
      %v896 = vsel %vm83, %v895, 0.0
      %897 = vadd.xlane.f32.xlu0 %v896
      %v898 = vpop.xlane.xlu0 %897
      %v899 = vmul.f32 %v898, %v100
      %v900 = vsub.f32 %v888, %v899
      %v901 = vmul.f32 %v900, %v900
      %v902 = vsel %vm83, %v901, 0.0
      %v903 = vrot.slane %v902, 4
      %v904 = vadd.f32 %v902, %v903
      %v905 = vrot.slane %v904, 2
      %v906 = vadd.f32 %v904, %v905
      %v907 = vrot.slane %v906, 1
      %v908 = vadd.f32 %v906, %v907
      %v909 = vsel %vm83, %v908, 0.0
      %910 = vadd.xlane.f32.xlu0 %v909
      %v911 = vpop.xlane.xlu0 %910
      %v912 = vmul.f32 %v911, %v100
      %v913 = vadd.f32 %v912, 1e-05
      %v914 = vrsqrt.pop %v913
      %v915 = vmul.f32 %v914, %v913
      %v916 = vmul.f32 %v915, %v914
      %v917 = vmul.f32 0.5, %v916
      %v918 = vsub.f32 1.5, %v917
      %v919 = vmul.f32 %v914, %v918
      %vm920 = vweird.f32 %v913
      %vm921 = vweird.f32 %v914
      %vm922 = vmor %vm920, %vm921
      %v923 = vsel %vm922, %v914, %v919
      %v924 = vmul.f32 %v900, %v923
      %925 = vrot.lane.b32.xlu0 %v304, 123
      %v926 = vpop.permute.xlu0 %925
      %s927 = vtos %v926
      %v928 = vstv %s927
      %v930 = vmul.f32 %v924, %v928
      %931 = vrot.lane.b32.xlu0 %v78, 123
      %v932 = vpop.permute.xlu0 %931
      %s933 = vtos %v932
      %v934 = vstv %s933
      %v936 = vadd.f32 %v930, %v934
      %v937 = vmax.f32 %v936, 0.0
      %s938 = scalar_lea.vmem [#allocation3], 160
      %v939 = vld [vmem:[%s938] sm:$0xff]
      %v940 = vld [vmem:[%s938 + $0x8] sm:$0xff]
      %v941 = vld [vmem:[%s938 + $0x10] sm:$0xff]
      %v942 = vld [vmem:[%s938 + $0x18] sm:$0xff]
      %v944 = vsel %vm83, %v937, 0
      %946 = vmatpush.msra.mxu0 0.0
      %947 = vmatpush.msra.mxu0 0.0
      %948 = vmatpush.msra.mxu0 0.0
      %949 = vmatpush.msra.mxu0 0.0
      %950 = vmatpush.msra.mxu0 0.0
      %951 = vmatpush.msra.mxu0 0.0
      %952 = vmatpush.msra.mxu0 0.0
      %953 = vmatpush.msra.mxu0 0.0
      %954 = vmatpush.msra.mxu0 0.0
      %955 = vmatpush.msra.mxu0 0.0
      %956 = vmatpush.msra.mxu0 0.0
      %957 = vmatpush.msra.mxu0 0.0
      %958 = vmatpush.msra.mxu0 %v942
      %959 = vmatpush.msra.mxu0 %v941
      %960 = vmatpush.msra.mxu0 %v940
      %961 = vmatpush.msra.mxu0 %v939
      %962 = vmatmul.f32.gmra.mxu0 %v944
      %v963 = vpop.f32.mrf.mxu0
      %v964 = vadd.f32 0.0, %v963
      %965 = vdwg.mxu0
      %v966 = vadd.f32 %v841, %v964
      %967 = vrot.lane.b32.xlu0 %v77, 122
      %v968 = vpop.permute.xlu0 %967
      %s969 = vtos %v968
      %v970 = vstv %s969
      %v972 = vmul.f32 %v204, %v970
      %973 = vrot.lane.b32.xlu0 %v233, 122
      %v974 = vpop.permute.xlu0 %973
      %s975 = vtos %v974
      %v976 = vstv %s975
      %v978 = vmul.f32 %v138, %v976
      %v979 = vadd.f32 %v972, %v978
      %980 = vrot.lane.b32.xlu0 %v239, 122
      %v981 = vpop.permute.xlu0 %980
      %s982 = vtos %v981
      %v983 = vstv %s982
      %v985 = vmul.f32 %v210, %v983
      %v986 = vadd.f32 %v979, %v985
      %987 = vrot.lane.b32.xlu0 %v245, 122
      %v988 = vpop.permute.xlu0 %987
      %s989 = vtos %v988
      %v990 = vstv %s989
      %v992 = vmul.f32 %v221, %v990
      %v993 = vadd.f32 %v986, %v992
      %994 = vrot.lane.b32.xlu0 %v251, 122
      %v995 = vpop.permute.xlu0 %994
      %s996 = vtos %v995
      %v997 = vstv %s996
      %v999 = vmul.f32 %v186, %v997
      %v1000 = vadd.f32 %v993, %v999
      %1001 = vrot.lane.b32.xlu0 %v257, 122
      %v1002 = vpop.permute.xlu0 %1001
      %s1003 = vtos %v1002
      %v1004 = vstv %s1003
      %v1006 = vmul.f32 %v225, %v1004
      %v1007 = vadd.f32 %v1000, %v1006
      %1008 = vrot.lane.b32.xlu0 %v263, 122
      %v1009 = vpop.permute.xlu0 %1008
      %s1010 = vtos %v1009
      %v1011 = vstv %s1010
      %v1013 = vadd.f32 %v1007, %v1011
      %v1014 = vsel %vm83, %v1013, 0.0
      %v1015 = vrot.slane %v1014, 4
      %v1016 = vadd.f32 %v1014, %v1015
      %v1017 = vrot.slane %v1016, 2
      %v1018 = vadd.f32 %v1016, %v1017
      %v1019 = vrot.slane %v1018, 1
      %v1020 = vadd.f32 %v1018, %v1019
      %v1021 = vsel %vm83, %v1020, 0.0
      %1022 = vadd.xlane.f32.xlu0 %v1021
      %v1023 = vpop.xlane.xlu0 %1022
      %v1024 = vmul.f32 %v1023, %v100
      %v1025 = vsub.f32 %v1013, %v1024
      %v1026 = vmul.f32 %v1025, %v1025
      %v1027 = vsel %vm83, %v1026, 0.0
      %v1028 = vrot.slane %v1027, 4
      %v1029 = vadd.f32 %v1027, %v1028
      %v1030 = vrot.slane %v1029, 2
      %v1031 = vadd.f32 %v1029, %v1030
      %v1032 = vrot.slane %v1031, 1
      %v1033 = vadd.f32 %v1031, %v1032
      %v1034 = vsel %vm83, %v1033, 0.0
      %1035 = vadd.xlane.f32.xlu0 %v1034
      %v1036 = vpop.xlane.xlu0 %1035
      %v1037 = vmul.f32 %v1036, %v100
      %v1038 = vadd.f32 %v1037, 1e-05
      %v1039 = vrsqrt.pop %v1038
      %v1040 = vmul.f32 %v1039, %v1038
      %v1041 = vmul.f32 %v1040, %v1039
      %v1042 = vmul.f32 0.5, %v1041
      %v1043 = vsub.f32 1.5, %v1042
      %v1044 = vmul.f32 %v1039, %v1043
      %vm1045 = vweird.f32 %v1038
      %vm1046 = vweird.f32 %v1039
      %vm1047 = vmor %vm1045, %vm1046
      %v1048 = vsel %vm1047, %v1039, %v1044
      %v1049 = vmul.f32 %v1025, %v1048
      %1050 = vrot.lane.b32.xlu0 %v304, 122
      %v1051 = vpop.permute.xlu0 %1050
      %s1052 = vtos %v1051
      %v1053 = vstv %s1052
      %v1055 = vmul.f32 %v1049, %v1053
      %1056 = vrot.lane.b32.xlu0 %v78, 122
      %v1057 = vpop.permute.xlu0 %1056
      %s1058 = vtos %v1057
      %v1059 = vstv %s1058
      %v1061 = vadd.f32 %v1055, %v1059
      %v1062 = vmax.f32 %v1061, 0.0
      %s1063 = scalar_lea.vmem [#allocation3], 192
      %v1064 = vld [vmem:[%s1063] sm:$0xff]
      %v1065 = vld [vmem:[%s1063 + $0x8] sm:$0xff]
      %v1066 = vld [vmem:[%s1063 + $0x10] sm:$0xff]
      %v1067 = vld [vmem:[%s1063 + $0x18] sm:$0xff]
      %v1069 = vsel %vm83, %v1062, 0
      %1071 = vmatpush.msra.mxu0 0.0
      %1072 = vmatpush.msra.mxu0 0.0
      %1073 = vmatpush.msra.mxu0 0.0
      %1074 = vmatpush.msra.mxu0 0.0
      %1075 = vmatpush.msra.mxu0 0.0
      %1076 = vmatpush.msra.mxu0 0.0
      %1077 = vmatpush.msra.mxu0 0.0
      %1078 = vmatpush.msra.mxu0 0.0
      %1079 = vmatpush.msra.mxu0 0.0
      %1080 = vmatpush.msra.mxu0 0.0
      %1081 = vmatpush.msra.mxu0 0.0
      %1082 = vmatpush.msra.mxu0 0.0
      %1083 = vmatpush.msra.mxu0 %v1067
      %1084 = vmatpush.msra.mxu0 %v1066
      %1085 = vmatpush.msra.mxu0 %v1065
      %1086 = vmatpush.msra.mxu0 %v1064
      %1087 = vmatmul.f32.gmra.mxu0 %v1069
      %v1088 = vpop.f32.mrf.mxu0
      %v1089 = vadd.f32 0.0, %v1088
      %1090 = vdwg.mxu0
      %v1091 = vadd.f32 %v966, %v1089
      %1092 = vrot.lane.b32.xlu0 %v77, 121
      %v1093 = vpop.permute.xlu0 %1092
      %s1094 = vtos %v1093
      %v1095 = vstv %s1094
      %v1097 = vmul.f32 %v204, %v1095
      %1098 = vrot.lane.b32.xlu0 %v233, 121
      %v1099 = vpop.permute.xlu0 %1098
      %s1100 = vtos %v1099
      %v1101 = vstv %s1100
      %v1103 = vmul.f32 %v138, %v1101
      %v1104 = vadd.f32 %v1097, %v1103
      %1105 = vrot.lane.b32.xlu0 %v239, 121
      %v1106 = vpop.permute.xlu0 %1105
      %s1107 = vtos %v1106
      %v1108 = vstv %s1107
      %v1110 = vmul.f32 %v210, %v1108
      %v1111 = vadd.f32 %v1104, %v1110
      %1112 = vrot.lane.b32.xlu0 %v245, 121
      %v1113 = vpop.permute.xlu0 %1112
      %s1114 = vtos %v1113
      %v1115 = vstv %s1114
      %v1117 = vmul.f32 %v221, %v1115
      %v1118 = vadd.f32 %v1111, %v1117
      %1119 = vrot.lane.b32.xlu0 %v251, 121
      %v1120 = vpop.permute.xlu0 %1119
      %s1121 = vtos %v1120
      %v1122 = vstv %s1121
      %v1124 = vmul.f32 %v186, %v1122
      %v1125 = vadd.f32 %v1118, %v1124
      %1126 = vrot.lane.b32.xlu0 %v257, 121
      %v1127 = vpop.permute.xlu0 %1126
      %s1128 = vtos %v1127
      %v1129 = vstv %s1128
      %v1131 = vmul.f32 %v225, %v1129
      %v1132 = vadd.f32 %v1125, %v1131
      %1133 = vrot.lane.b32.xlu0 %v263, 121
      %v1134 = vpop.permute.xlu0 %1133
      %s1135 = vtos %v1134
      %v1136 = vstv %s1135
      %v1138 = vadd.f32 %v1132, %v1136
      %v1139 = vsel %vm83, %v1138, 0.0
      %v1140 = vrot.slane %v1139, 4
      %v1141 = vadd.f32 %v1139, %v1140
      %v1142 = vrot.slane %v1141, 2
      %v1143 = vadd.f32 %v1141, %v1142
      %v1144 = vrot.slane %v1143, 1
      %v1145 = vadd.f32 %v1143, %v1144
      %v1146 = vsel %vm83, %v1145, 0.0
      %1147 = vadd.xlane.f32.xlu0 %v1146
      %v1148 = vpop.xlane.xlu0 %1147
      %v1149 = vmul.f32 %v1148, %v100
      %v1150 = vsub.f32 %v1138, %v1149
      %v1151 = vmul.f32 %v1150, %v1150
      %v1152 = vsel %vm83, %v1151, 0.0
      %v1153 = vrot.slane %v1152, 4
      %v1154 = vadd.f32 %v1152, %v1153
      %v1155 = vrot.slane %v1154, 2
      %v1156 = vadd.f32 %v1154, %v1155
      %v1157 = vrot.slane %v1156, 1
      %v1158 = vadd.f32 %v1156, %v1157
      %v1159 = vsel %vm83, %v1158, 0.0
      %1160 = vadd.xlane.f32.xlu0 %v1159
      %v1161 = vpop.xlane.xlu0 %1160
      %v1162 = vmul.f32 %v1161, %v100
      %v1163 = vadd.f32 %v1162, 1e-05
      %v1164 = vrsqrt.pop %v1163
      %v1165 = vmul.f32 %v1164, %v1163
      %v1166 = vmul.f32 %v1165, %v1164
      %v1167 = vmul.f32 0.5, %v1166
      %v1168 = vsub.f32 1.5, %v1167
      %v1169 = vmul.f32 %v1164, %v1168
      %vm1170 = vweird.f32 %v1163
      %vm1171 = vweird.f32 %v1164
      %vm1172 = vmor %vm1170, %vm1171
      %v1173 = vsel %vm1172, %v1164, %v1169
      %v1174 = vmul.f32 %v1150, %v1173
      %1175 = vrot.lane.b32.xlu0 %v304, 121
      %v1176 = vpop.permute.xlu0 %1175
      %s1177 = vtos %v1176
      %v1178 = vstv %s1177
      %v1180 = vmul.f32 %v1174, %v1178
      %1181 = vrot.lane.b32.xlu0 %v78, 121
      %v1182 = vpop.permute.xlu0 %1181
      %s1183 = vtos %v1182
      %v1184 = vstv %s1183
      %v1186 = vadd.f32 %v1180, %v1184
      %v1187 = vmax.f32 %v1186, 0.0
      %s1188 = scalar_lea.vmem [#allocation3], 224
      %v1189 = vld [vmem:[%s1188] sm:$0xff]
      %v1190 = vld [vmem:[%s1188 + $0x8] sm:$0xff]
      %v1191 = vld [vmem:[%s1188 + $0x10] sm:$0xff]
      %v1192 = vld [vmem:[%s1188 + $0x18] sm:$0xff]
      %v1194 = vsel %vm83, %v1187, 0
      %1196 = vmatpush.msra.mxu0 0.0
      %1197 = vmatpush.msra.mxu0 0.0
      %1198 = vmatpush.msra.mxu0 0.0
      %1199 = vmatpush.msra.mxu0 0.0
      %1200 = vmatpush.msra.mxu0 0.0
      %1201 = vmatpush.msra.mxu0 0.0
      %1202 = vmatpush.msra.mxu0 0.0
      %1203 = vmatpush.msra.mxu0 0.0
      %1204 = vmatpush.msra.mxu0 0.0
      %1205 = vmatpush.msra.mxu0 0.0
      %1206 = vmatpush.msra.mxu0 0.0
      %1207 = vmatpush.msra.mxu0 0.0
      %1208 = vmatpush.msra.mxu0 %v1192
      %1209 = vmatpush.msra.mxu0 %v1191
      %1210 = vmatpush.msra.mxu0 %v1190
      %1211 = vmatpush.msra.mxu0 %v1189
      %1212 = vmatmul.f32.gmra.mxu0 %v1194
      %v1213 = vpop.f32.mrf.mxu0
      %v1214 = vadd.f32 0.0, %v1213
      %1215 = vdwg.mxu0
      %v1216 = vadd.f32 %v1091, %v1214
      %v1217 = vsel %vm83, %v1216, 0.0
      %v1218 = vrot.slane %v1217, 4
      %v1219 = vadd.f32 %v1217, %v1218
      %v1220 = vrot.slane %v1219, 2
      %v1221 = vadd.f32 %v1219, %v1220
      %v1222 = vrot.slane %v1221, 1
      %v1223 = vadd.f32 %v1221, %v1222
      %v1224 = vrcp.pop 8.0
      %v1225 = vmul.f32 8.0, %v1224
      %v1226 = vsub.f32 1.0, %v1225
      %v1227 = vmul.f32 %v1224, %v1226
      %v1228 = vadd.f32 %v1224, %v1227
      %vm1229 = vweird.f32 %v1224
      %v1230 = vsel %vm1229, %v1224, %v1228
      %v1231 = vmul.f32 %v1223, %v1230
      %v1232 = vsub.f32 %v1216, %v1231
      %v1233 = vmul.f32 %v1232, %v1232
      %v1234 = vsel %vm83, %v1233, 0.0
      %v1235 = vrot.slane %v1234, 4
      %v1236 = vadd.f32 %v1234, %v1235
      %v1237 = vrot.slane %v1236, 2
      %v1238 = vadd.f32 %v1236, %v1237
      %v1239 = vrot.slane %v1238, 1
      %v1240 = vadd.f32 %v1238, %v1239
      %v1241 = vmul.f32 %v1240, %v1230
      %v1242 = vadd.f32 %v1241, 1e-05
      %v1243 = vrsqrt.pop %v1242
      %v1244 = vmul.f32 %v1243, %v1242
      %v1245 = vmul.f32 %v1244, %v1243
      %v1246 = vmul.f32 0.5, %v1245
      %v1247 = vsub.f32 1.5, %v1246
      %v1248 = vmul.f32 %v1243, %v1247
      %vm1249 = vweird.f32 %v1242
      %vm1250 = vweird.f32 %v1243
      %vm1251 = vmor %vm1249, %vm1250
      %v1252 = vsel %vm1251, %v1243, %v1248
      %v1253 = vmul.f32 %v1232, %v1252
      %v1254 = vperm.slane %v78, 3
      %v1255 = vmul.f32 %v1253, %v1254
      %v1256 = vperm.slane %v78, 4
      %v1257 = vadd.f32 %v1255, %v1256
      %v1258 = vmax.f32 %v1257, 0.0
      %1259 = vst.msk [vmem:[#allocation2] sm:$0xff] %vm83, %v1258
    $region33: #{tpu_custom_call.1} parent=1 // pred_fallthru
      _
    %v1260 = vld [vmem:[%s67] sm:$0xff]
    %v1261 = vld [vmem:[%s67 + $0x8] sm:$0xff]
    %v1262 = vld [vmem:[%s67 + $0x10] sm:$0xff]
    %v1263 = vld [vmem:[%s67 + $0x18] sm:$0xff]
    %v1264 = vld [vmem:[%s67 + $0x20] sm:$0xff]
    %v1265 = vld [vmem:[%s67 + $0x28] sm:$0xff]
    %v1266 = vld [vmem:[%s67 + $0x30] sm:$0xff]
    %v1267 = vld [vmem:[%s67 + $0x38] sm:$0xff]
    %v1268 = vld [vmem:[%s67 + $0x40] sm:$0xff]
    %v1269 = vld [vmem:[%s67 + $0x48] sm:$0xff]
    %v1270 = vld [vmem:[%s67 + $0x50] sm:$0xff]
    %v1271 = vld [vmem:[%s67 + $0x58] sm:$0xff]
    %v1272 = vld [vmem:[%s67 + $0x60] sm:$0xff]
    %v1273 = vld [vmem:[%s67 + $0x68] sm:$0xff]
    %v1274 = vld [vmem:[%s67 + $0x70] sm:$0xff]
    %v1275 = vld [vmem:[%s67 + $0x78] sm:$0xff]
    %v1276 = vtanh.pop %v1260
    %v1277 = vtanh.pop %v1261
    %v1278 = vtanh.pop %v1262
    %v1279 = vtanh.pop %v1263
    %v1280 = vtanh.pop %v1264
    %v1281 = vtanh.pop %v1265
    %v1282 = vtanh.pop %v1266
    %v1283 = vtanh.pop %v1267
    %v1284 = vtanh.pop %v1268
    %v1285 = vtanh.pop %v1269
    %v1286 = vtanh.pop %v1270
    %v1287 = vtanh.pop %v1271
    %v1288 = vtanh.pop %v1272
    %v1289 = vtanh.pop %v1273
    %v1290 = vtanh.pop %v1274
    %v1291 = vtanh.pop %v1275
    %v1292 = vld [vmem:[#allocation2] sm:$0xff]
    %vm1293 = vcmask 261120
    %v1295 = vsel %vm1293, %v1292, 0
    %v1298 = vsel %vm1293, %v1276, 0
    %v1301 = vsel %vm1293, %v1277, 0
    %v1304 = vsel %vm1293, %v1278, 0
    %v1307 = vsel %vm1293, %v1279, 0
    %v1310 = vsel %vm1293, %v1280, 0
    %v1313 = vsel %vm1293, %v1281, 0
    %v1316 = vsel %vm1293, %v1282, 0
    %v1319 = vsel %vm1293, %v1283, 0
    %v1322 = vsel %vm1293, %v1284, 0
    %v1325 = vsel %vm1293, %v1285, 0
    %v1328 = vsel %vm1293, %v1286, 0
    %v1331 = vsel %vm1293, %v1287, 0
    %v1334 = vsel %vm1293, %v1288, 0
    %v1337 = vsel %vm1293, %v1289, 0
    %v1340 = vsel %vm1293, %v1290, 0
    %v1343 = vsel %vm1293, %v1291, 0
    %1345 = vmatpush.xpose.msra.mxu0 %v1343
    %1346 = vmatpush.xpose.msra.mxu0 %v1340
    %1347 = vmatpush.xpose.msra.mxu0 %v1337
    %1348 = vmatpush.xpose.msra.mxu0 %v1334
    %1349 = vmatpush.xpose.msra.mxu0 %v1331
    %1350 = vmatpush.xpose.msra.mxu0 %v1328
    %1351 = vmatpush.xpose.msra.mxu0 %v1325
    %1352 = vmatpush.xpose.msra.mxu0 %v1322
    %1353 = vmatpush.xpose.msra.mxu0 %v1319
    %1354 = vmatpush.xpose.msra.mxu0 %v1316
    %1355 = vmatpush.xpose.msra.mxu0 %v1313
    %1356 = vmatpush.xpose.msra.mxu0 %v1310
    %1357 = vmatpush.xpose.msra.mxu0 %v1307
    %1358 = vmatpush.xpose.msra.mxu0 %v1304
    %1359 = vmatpush.xpose.msra.mxu0 %v1301
    %1360 = vmatpush.xpose.msra.mxu0 %v1298
    %1361 = vmatmul.f32.gmra.mxu0 %v1295
    %v1362 = vpop.f32.mrf.mxu0
    %v1363 = vadd.f32 0.0, %v1362
    %1364 = vdwg.mxu0
    %1365 = vst [vmem:[#allocation6] sm:$0xff] %v1363
    // Predicated region
    $region34: #{tpu_custom_call.1} parent=1 // pred_check
      _
    $region35: #{tpu_custom_call.1} parent=1 // pred_check_branch
      %1367 = sbr.rel (0) target = $region37
    $region36: #{tpu_custom_call.1} parent=1 // pred_region
      %s1368 = sadd.s32 0, 0
      %1370 = vsyncadd [#allocation5], 0
      %s1371 = smul.addr %s1368, 8
      %s1372 = scalar_lea.hbm %s6, %s1371
      %s1374 = sshll.u32 [#allocation6], 4
      %s1375 = int_to_ptr.vmem [resolvable:$true] %s1374
      %s1376 = sshll.u32 %s1372, 4
      %s1377 = int_to_ptr.hbm [resolvable:$true] %s1376
      %1379 = dma.vmem_to_hbm [thread:$0]  %s1375, 128, %s1377, [#allocation5]
    $region37: #{tpu_custom_call.1} parent=1 // pred_fallthru
      _
    // Predicated region
    $region38: #{tpu_custom_call.1} parent=1 // pred_check
      _
    $region39: #{tpu_custom_call.1} parent=1 // pred_check_branch
      %1381 = sbr.rel (0) target = $region41
    $region40: #{tpu_custom_call.1} parent=1 // pred_region
      %1383 = dma.done [#allocation5], 128
    $region41: #{tpu_custom_call.1} parent=1 // pred_fallthru
      _
    %1384 = vsyncpa [#allocation4], 1
    %1385 = vsyncpa [#allocation5], 1

</llo_original>
